<compile_context>
chip_gen: v6e
topology: v6e:2x2x1
jax: 0.10.0
libtpu: 0.0.40
codegen_flags: <defaults>
</compile_context>

<pallas_src>
import math

import jax
import jax.numpy as jnp
import numpy as np
from jax import lax
from jax.experimental import pallas as pl
from jax.experimental.pallas import tpu as pltpu

KERNEL_SIZE = 7
PAD = (KERNEL_SIZE - 1) // 2


def _largest_divisor_leq(n, cap):
    """Largest divisor of n that is <= cap (>= 1)."""
    cap = max(1, min(n, cap))
    for d in range(cap, 0, -1):
        if n % d == 0:
            return d
    return 1


def _make_sam_kernel(Nb, Ck, H, W):
    K = KERNEL_SIZE
    KK = K * K
    Hp, Wp = H + 2 * PAD, W + 2 * PAD

    # In-kernel channel-chunk size (bounds vreg pressure for large Ck).
    ck_in = _largest_divisor_leq(Ck, 8)
    n_inner = Ck // ck_in

    def sam_kernel(x_ref, w_ref, o_ref, sum_ref, max_ref, pad_ref):
        # x_ref : (Nb, Ck, H, W)   input block (this batch/channel tile)
        # w_ref : (2*K*K,)         flat conv weights in SMEM
        #                          (avg weights pre-scaled by 1/C)
        # o_ref : (Nb, 1, H, W)    output block (written at last channel step)
        # sum_ref, max_ref : (Nb, H, W) f32 running channel reduction
        # pad_ref: (2, Nb, Hp, Wp) f32 zero-padded pooled planes
        c = pl.program_id(1)
        n_c = pl.num_programs(1)

        @pl.when(c == 0)
        def _init():
            sum_ref[...] = jnp.zeros_like(sum_ref)
            max_ref[...] = jnp.full_like(max_ref, -jnp.inf)

        # ---- chunked channel reduction (sum + max) over this Ck block ----
        def chunk(i, carry):
            s, m = carry
            xc = x_ref[:, pl.ds(i * ck_in, ck_in), :, :].astype(jnp.float32)
            s = s + jnp.sum(xc, axis=1)                # (Nb, H, W)
            m = jnp.maximum(m, jnp.max(xc, axis=1))    # (Nb, H, W)
            return s, m

        carry = (sum_ref[...], max_ref[...])
        if n_inner <= 8:
            for i in range(n_inner):                   # static unroll
                carry = chunk(i, carry)
        else:
            carry = lax.fori_loop(0, n_inner, chunk, carry)
        sum_ref[...] = carry[0]
        max_ref[...] = carry[1]

        # ---- last channel step: 7x7 conv (pad=3) + sigmoid + store ----
        @pl.when(c == n_c - 1)
        def _finalize():
            # Zero-padded pooled planes: [0] = channel-sum (avg via folded
            # 1/C in the weights), [1] = channel-max.  Re-zeroed per image
            # (cheap) -- multicore-safe regardless of grid sharding.
            pad_ref[...] = jnp.zeros_like(pad_ref)
            pad_ref[0, :, pl.ds(PAD, H), pl.ds(PAD, W)] = sum_ref[...]
            pad_ref[1, :, pl.ds(PAD, H), pl.ds(PAD, W)] = max_ref[...]

            pa = pad_ref[0]   # (Nb, Hp, Wp)
            pm = pad_ref[1]   # (Nb, Hp, Wp)

            acc = jnp.zeros((Nb, H, W), jnp.float32)
            for dw in range(K):
                # Hoist the lane (W-direction) shift out of the dh loop:
                # one lane-offset slice per (plane, dw); the inner dh loop
                # only takes cheap sublane slices.
                col_a = pa[:, :, dw:dw + W]   # (Nb, Hp, W)
                col_m = pm[:, :, dw:dw + W]   # (Nb, Hp, W)
                for dh in range(K):
                    w_a = w_ref[dh * K + dw]        # avg weight (already /C)
                    w_m = w_ref[KK + dh * K + dw]   # max weight
                    acc = (acc
                           + w_a * col_a[:, dh:dh + H, :]
                           + w_m * col_m[:, dh:dh + H, :])

            o_ref[:, 0, :, :] = jax.nn.sigmoid(acc).astype(o_ref.dtype)

    return sam_kernel


def spatial_attention(x, conv_weight, *, block_budget_bytes=8 * 1024 * 1024):
    """x: (N, C, H, W); conv_weight: (1, 2, 7, 7). Returns (N, 1, H, W)."""
    N, C, H, W = x.shape
    K = KERNEL_SIZE
    Hp, Wp = H + 2 * PAD, W + 2 * PAD

    # Fold 1/C of the channel-mean into the avg-channel weights; the kernel
    # then only needs a channel SUM.
    w_avg = (conv_weight[0, 0].astype(jnp.float32) / float(C)).reshape(-1)
    w_max = conv_weight[0, 1].astype(jnp.float32).reshape(-1)
    w_flat = jnp.concatenate([w_avg, w_max])            # (2*K*K,)

    # Block sizing: largest channel tile (Ck) and batch tile (Nb) whose input
    # block fits the per-block VMEM budget (double-buffered by Pallas).
    per_chan_bytes = H * W * x.dtype.itemsize
    Ck = _largest_divisor_leq(C, max(1, block_budget_bytes // max(per_chan_bytes, 1)))
    Nb = _largest_divisor_leq(
        N, max(1, block_budget_bytes // max(Ck * per_chan_bytes, 1)))

    kernel = _make_sam_kernel(Nb, Ck, H, W)
    grid = (N // Nb, C // Ck)

    return pl.pallas_call(
        kernel,
        out_shape=jax.ShapeDtypeStruct((N, 1, H, W), x.dtype),
        grid_spec=pltpu.PrefetchScalarGridSpec(
            num_scalar_prefetch=0,
            grid=grid,
            in_specs=[
                pl.BlockSpec((Nb, Ck, H, W), lambda n, c: (n, c, 0, 0)),
                pl.BlockSpec(memory_space=pltpu.SMEM),
            ],
            out_specs=pl.BlockSpec((Nb, 1, H, W), lambda n, c: (n, 0, 0, 0)),
            scratch_shapes=[
                pltpu.VMEM((Nb, H, W), jnp.float32),        # running sum
                pltpu.VMEM((Nb, H, W), jnp.float32),        # running max
                pltpu.VMEM((2, Nb, Hp, Wp), jnp.float32),   # padded pooled planes
            ],
        ),
        compiler_params=pltpu.CompilerParams(
            dimension_semantics=("parallel", "arbitrary"),
            vmem_limit_bytes=64 * 1024 * 1024,
        ),
    )(x, w_flat)


def _reference(x, conv_weight):
    """Plain-JAX reference of the PyTorch forward (for verification)."""
    avg_out = jnp.mean(x, axis=1, keepdims=True)
    max_out = jnp.max(x, axis=1, keepdims=True)
    pooled = jnp.concatenate([avg_out, max_out], axis=1)   # (N, 2, H, W)
    y = lax.conv_general_dilated(
        pooled, conv_weight,
        window_strides=(1, 1),
        padding=[(PAD, PAD), (PAD, PAD)],
        dimension_numbers=("NCHW", "OIHW", "NCHW"),
    )
    return jax.nn.sigmoid(y)


if __name__ == "__main__":
    key = jax.random.PRNGKey(0)
    kx, kw, kx2, kx3 = jax.random.split(key, 4)

    # Deterministic conv weight init (Conv2d(2, 1, 7, bias=False) style:
    # uniform in [-1/sqrt(fan_in), 1/sqrt(fan_in)], fan_in = 2*7*7).
    fan_in = 2 * KERNEL_SIZE * KERNEL_SIZE
    bound = 1.0 / math.sqrt(fan_in)
    conv_weight = jax.random.uniform(
        kw, (1, 2, KERNEL_SIZE, KERNEL_SIZE),
        minval=-bound, maxval=bound, dtype=jnp.float32,
    )

    # Primary small-shape check (matches the module's forward).
    x = jax.random.normal(kx, (2, 4, 16, 16), dtype=jnp.float32)
    out = jax.block_until_ready(spatial_attention(x, conv_weight))
    ref = jax.block_until_ready(_reference(x, conv_weight))
    np.testing.assert_allclose(np.asarray(out), np.asarray(ref),
                               rtol=1e-5, atol=1e-5)

    # Exercise the multi-step channel-reduction grid (Ck < C, Nb = 1) path.
    x2 = jax.random.normal(kx2, (2, 16, 16, 16), dtype=jnp.float32)
    out2 = jax.block_until_ready(
        spatial_attention(x2, conv_weight, block_budget_bytes=2048))
    ref2 = jax.block_until_ready(_reference(x2, conv_weight))
    np.testing.assert_allclose(np.asarray(out2), np.asarray(ref2),
                               rtol=1e-5, atol=1e-5)

    # Exercise the in-kernel chunked (fori_loop) reduction path for large C.
    x3 = jax.random.normal(kx3, (1, 128, 8, 8), dtype=jnp.float32)
    out3 = jax.block_until_ready(spatial_attention(x3, conv_weight))
    ref3 = jax.block_until_ready(_reference(x3, conv_weight))
    np.testing.assert_allclose(np.asarray(out3), np.asarray(ref3),
                               rtol=1e-5, atol=1e-5)

    print("KERNEL_OK")
</pallas_src>

<mosaic_0001>
module attributes {stable_mosaic.version = 11 : i64} {
  func.func @sam_kernel(%arg0: i32, %arg1: i32, %arg2: memref<2x4x16x16xf32, #tpu.memory_space<vmem>>, %arg3: memref<98xf32, #tpu.memory_space<smem>>, %arg4: memref<2x1x16x16xf32, #tpu.memory_space<vmem>>, %arg5: memref<2x16x16xf32, #tpu.memory_space<vmem>>, %arg6: memref<2x16x16xf32, #tpu.memory_space<vmem>>, %arg7: memref<2x2x22x22xf32, #tpu.memory_space<vmem>>) attributes {dimension_semantics = [#tpu.dimension_semantics<parallel>, #tpu.dimension_semantics<arbitrary>], iteration_bounds = array<i64: 1, 1>, scalar_prefetch = 0 : i64, scratch_operands = 3 : i64, tpu.core_type = #tpu.core_type<tc>, window_params = [{transform_indices = @transform_0, window_bounds = array<i64: 2, 4, 16, 16>}, {transform_indices = @transform_1, window_bounds = array<i64: 98>}, {transform_indices = @transform_2, window_bounds = array<i64: 2, 1, 16, 16>}]} {
    %c0_i32 = arith.constant 0 : i32
    %0 = arith.cmpi eq, %arg1, %c0_i32 : i32
    %1 = arith.extui %0 : i1 to i32
    %c0_i32_0 = arith.constant 0 : i32
    %2 = arith.cmpi ne, %1, %c0_i32_0 : i32
    scf.if %2 {
      %cst_19 = arith.constant 0.000000e+00 : f32
      %15 = vector.broadcast %cst_19 : f32 to vector<2x16x16xf32>
      %c0_20 = arith.constant 0 : index
      %c0_21 = arith.constant 0 : index
      %c0_22 = arith.constant 0 : index
      %16 = vector.load %arg5[%c0_20, %c0_21, %c0_22] : memref<2x16x16xf32, #tpu.memory_space<vmem>>, vector<2x16x16xf32>
      tpu.vector_store %arg5[%c0_20, %c0_21, %c0_22], %15 {strides = array<i32>} : memref<2x16x16xf32, #tpu.memory_space<vmem>>, vector<2x16x16xf32>,
      %cst_23 = arith.constant 0xFF800000 : f32
      %17 = vector.broadcast %cst_23 : f32 to vector<2x16x16xf32>
      %c0_24 = arith.constant 0 : index
      %c0_25 = arith.constant 0 : index
      %c0_26 = arith.constant 0 : index
      %18 = vector.load %arg6[%c0_24, %c0_25, %c0_26] : memref<2x16x16xf32, #tpu.memory_space<vmem>>, vector<2x16x16xf32>
      tpu.vector_store %arg6[%c0_24, %c0_25, %c0_26], %17 {strides = array<i32>} : memref<2x16x16xf32, #tpu.memory_space<vmem>>, vector<2x16x16xf32>,
    } else {
    }
    %c0 = arith.constant 0 : index
    %c0_1 = arith.constant 0 : index
    %c0_2 = arith.constant 0 : index
    %3 = vector.load %arg5[%c0, %c0_1, %c0_2] : memref<2x16x16xf32, #tpu.memory_space<vmem>>, vector<2x16x16xf32>
    %c0_3 = arith.constant 0 : index
    %c0_4 = arith.constant 0 : index
    %c0_5 = arith.constant 0 : index
    %4 = vector.load %arg6[%c0_3, %c0_4, %c0_5] : memref<2x16x16xf32, #tpu.memory_space<vmem>>, vector<2x16x16xf32>
    %c0_6 = arith.constant 0 : index
    %c0_7 = arith.constant 0 : index
    %c0_8 = arith.constant 0 : index
    %c0_9 = arith.constant 0 : index
    %5 = vector.load %arg2[%c0_6, %c0_7, %c0_8, %c0_9] : memref<2x4x16x16xf32, #tpu.memory_space<vmem>>, vector<2x4x16x16xf32>
    %cst = arith.constant dense<0.000000e+00> : vector<2x16x16xf32>
    %6 = vector.multi_reduction <add>, %5, %cst [1] : vector<2x4x16x16xf32> to vector<2x16x16xf32>
    %7 = arith.addf %3, %6 : vector<2x16x16xf32>
    %cst_10 = arith.constant dense<0xFF800000> : vector<2x16x16xf32>
    %8 = vector.multi_reduction <maximumf>, %5, %cst_10 [1] : vector<2x4x16x16xf32> to vector<2x16x16xf32>
    %9 = arith.maximumf %4, %8 : vector<2x16x16xf32>
    %c0_11 = arith.constant 0 : index
    %c0_12 = arith.constant 0 : index
    %c0_13 = arith.constant 0 : index
    %10 = vector.load %arg5[%c0_11, %c0_12, %c0_13] : memref<2x16x16xf32, #tpu.memory_space<vmem>>, vector<2x16x16xf32>
    tpu.vector_store %arg5[%c0_11, %c0_12, %c0_13], %7 {strides = array<i32>} : memref<2x16x16xf32, #tpu.memory_space<vmem>>, vector<2x16x16xf32>,
    %c0_14 = arith.constant 0 : index
    %c0_15 = arith.constant 0 : index
    %c0_16 = arith.constant 0 : index
    %11 = vector.load %arg6[%c0_14, %c0_15, %c0_16] : memref<2x16x16xf32, #tpu.memory_space<vmem>>, vector<2x16x16xf32>
    tpu.vector_store %arg6[%c0_14, %c0_15, %c0_16], %9 {strides = array<i32>} : memref<2x16x16xf32, #tpu.memory_space<vmem>>, vector<2x16x16xf32>,
    %c0_i32_17 = arith.constant 0 : i32
    %12 = arith.cmpi eq, %arg1, %c0_i32_17 : i32
    %13 = arith.extui %12 : i1 to i32
    %c0_i32_18 = arith.constant 0 : i32
    %14 = arith.cmpi ne, %13, %c0_i32_18 : i32
    scf.if %14 {
      %cst_19 = arith.constant 0.000000e+00 : f32
      %15 = vector.broadcast %cst_19 : f32 to vector<2x2x22x22xf32>
      %c0_20 = arith.constant 0 : index
      %c0_21 = arith.constant 0 : index
      %c0_22 = arith.constant 0 : index
      %c0_23 = arith.constant 0 : index
      %16 = vector.load %arg7[%c0_20, %c0_21, %c0_22, %c0_23] : memref<2x2x22x22xf32, #tpu.memory_space<vmem>>, vector<2x2x22x22xf32>
      tpu.vector_store %arg7[%c0_20, %c0_21, %c0_22, %c0_23], %15 {strides = array<i32>} : memref<2x2x22x22xf32, #tpu.memory_space<vmem>>, vector<2x2x22x22xf32>,
      %c0_24 = arith.constant 0 : index
      %c0_25 = arith.constant 0 : index
      %c0_26 = arith.constant 0 : index
      %17 = vector.load %arg5[%c0_24, %c0_25, %c0_26] : memref<2x16x16xf32, #tpu.memory_space<vmem>>, vector<2x16x16xf32>
      %c0_27 = arith.constant 0 : index
      %c0_28 = arith.constant 0 : index
      %c3 = arith.constant 3 : index
      %c3_29 = arith.constant 3 : index
      %18 = vector.load %arg7[%c0_27, %c0_28, %c3, %c3_29] : memref<2x2x22x22xf32, #tpu.memory_space<vmem>>, vector<1x2x16x16xf32>
      %19 = vector.shape_cast %18 : vector<1x2x16x16xf32> to vector<2x16x16xf32>
      %20 = vector.shape_cast %17 : vector<2x16x16xf32> to vector<1x2x16x16xf32>
      tpu.vector_store %arg7[%c0_27, %c0_28, %c3, %c3_29], %20 {strides = array<i32>} : memref<2x2x22x22xf32, #tpu.memory_space<vmem>>, vector<1x2x16x16xf32>,
      %c0_30 = arith.constant 0 : index
      %c0_31 = arith.constant 0 : index
      %c0_32 = arith.constant 0 : index
      %21 = vector.load %arg6[%c0_30, %c0_31, %c0_32] : memref<2x16x16xf32, #tpu.memory_space<vmem>>, vector<2x16x16xf32>
      %c1 = arith.constant 1 : index
      %c0_33 = arith.constant 0 : index
      %c3_34 = arith.constant 3 : index
      %c3_35 = arith.constant 3 : index
      %22 = vector.load %arg7[%c1, %c0_33, %c3_34, %c3_35] : memref<2x2x22x22xf32, #tpu.memory_space<vmem>>, vector<1x2x16x16xf32>
      %23 = vector.shape_cast %22 : vector<1x2x16x16xf32> to vector<2x16x16xf32>
      %24 = vector.shape_cast %21 : vector<2x16x16xf32> to vector<1x2x16x16xf32>
      tpu.vector_store %arg7[%c1, %c0_33, %c3_34, %c3_35], %24 {strides = array<i32>} : memref<2x2x22x22xf32, #tpu.memory_space<vmem>>, vector<1x2x16x16xf32>,
      %c0_36 = arith.constant 0 : index
      %c0_37 = arith.constant 0 : index
      %c0_38 = arith.constant 0 : index
      %c0_39 = arith.constant 0 : index
      %25 = vector.load %arg7[%c0_36, %c0_37, %c0_38, %c0_39] : memref<2x2x22x22xf32, #tpu.memory_space<vmem>>, vector<1x2x22x22xf32>
      %26 = vector.shape_cast %25 : vector<1x2x22x22xf32> to vector<2x22x22xf32>
      %c1_40 = arith.constant 1 : index
      %c0_41 = arith.constant 0 : index
      %c0_42 = arith.constant 0 : index
      %c0_43 = arith.constant 0 : index
      %27 = vector.load %arg7[%c1_40, %c0_41, %c0_42, %c0_43] : memref<2x2x22x22xf32, #tpu.memory_space<vmem>>, vector<1x2x22x22xf32>
      %28 = vector.shape_cast %27 : vector<1x2x22x22xf32> to vector<2x22x22xf32>
      %cst_44 = arith.constant 0.000000e+00 : f32
      %29 = vector.broadcast %cst_44 : f32 to vector<2x16x16xf32>
      %30 = vector.extract_strided_slice %26 {offsets = [0, 0, 0], sizes = [2, 22, 16], strides = [1, 1, 1]} : vector<2x22x22xf32> to vector<2x22x16xf32>
      %31 = vector.extract_strided_slice %28 {offsets = [0, 0, 0], sizes = [2, 22, 16], strides = [1, 1, 1]} : vector<2x22x22xf32> to vector<2x22x16xf32>
      %c0_45 = arith.constant 0 : index
      %32 = memref.load %arg3[%c0_45] : memref<98xf32, #tpu.memory_space<smem>>
      %c49 = arith.constant 49 : index
      %33 = memref.load %arg3[%c49] : memref<98xf32, #tpu.memory_space<smem>>
      %34 = vector.extract_strided_slice %30 {offsets = [0, 0, 0], sizes = [2, 16, 16], strides = [1, 1, 1]} : vector<2x22x16xf32> to vector<2x16x16xf32>
      %35 = vector.broadcast %32 : f32 to vector<2x16x16xf32>
      %36 = arith.mulf %35, %34 : vector<2x16x16xf32>
      %37 = arith.addf %29, %36 : vector<2x16x16xf32>
      %38 = vector.extract_strided_slice %31 {offsets = [0, 0, 0], sizes = [2, 16, 16], strides = [1, 1, 1]} : vector<2x22x16xf32> to vector<2x16x16xf32>
      %39 = vector.broadcast %33 : f32 to vector<2x16x16xf32>
      %40 = arith.mulf %39, %38 : vector<2x16x16xf32>
      %41 = arith.addf %37, %40 : vector<2x16x16xf32>
      %c7 = arith.constant 7 : index
      %42 = memref.load %arg3[%c7] : memref<98xf32, #tpu.memory_space<smem>>
      %c56 = arith.constant 56 : index
      %43 = memref.load %arg3[%c56] : memref<98xf32, #tpu.memory_space<smem>>
      %44 = vector.extract_strided_slice %30 {offsets = [0, 1, 0], sizes = [2, 16, 16], strides = [1, 1, 1]} : vector<2x22x16xf32> to vector<2x16x16xf32>
      %45 = vector.broadcast %42 : f32 to vector<2x16x16xf32>
      %46 = arith.mulf %45, %44 : vector<2x16x16xf32>
      %47 = arith.addf %41, %46 : vector<2x16x16xf32>
      %48 = vector.extract_strided_slice %31 {offsets = [0, 1, 0], sizes = [2, 16, 16], strides = [1, 1, 1]} : vector<2x22x16xf32> to vector<2x16x16xf32>
      %49 = vector.broadcast %43 : f32 to vector<2x16x16xf32>
      %50 = arith.mulf %49, %48 : vector<2x16x16xf32>
      %51 = arith.addf %47, %50 : vector<2x16x16xf32>
      %c14 = arith.constant 14 : index
      %52 = memref.load %arg3[%c14] : memref<98xf32, #tpu.memory_space<smem>>
      %c63 = arith.constant 63 : index
      %53 = memref.load %arg3[%c63] : memref<98xf32, #tpu.memory_space<smem>>
      %54 = vector.extract_strided_slice %30 {offsets = [0, 2, 0], sizes = [2, 16, 16], strides = [1, 1, 1]} : vector<2x22x16xf32> to vector<2x16x16xf32>
      %55 = vector.broadcast %52 : f32 to vector<2x16x16xf32>
      %56 = arith.mulf %55, %54 : vector<2x16x16xf32>
      %57 = arith.addf %51, %56 : vector<2x16x16xf32>
      %58 = vector.extract_strided_slice %31 {offsets = [0, 2, 0], sizes = [2, 16, 16], strides = [1, 1, 1]} : vector<2x22x16xf32> to vector<2x16x16xf32>
      %59 = vector.broadcast %53 : f32 to vector<2x16x16xf32>
      %60 = arith.mulf %59, %58 : vector<2x16x16xf32>
      %61 = arith.addf %57, %60 : vector<2x16x16xf32>
      %c21 = arith.constant 21 : index
      %62 = memref.load %arg3[%c21] : memref<98xf32, #tpu.memory_space<smem>>
      %c70 = arith.constant 70 : index
      %63 = memref.load %arg3[%c70] : memref<98xf32, #tpu.memory_space<smem>>
      %64 = vector.extract_strided_slice %30 {offsets = [0, 3, 0], sizes = [2, 16, 16], strides = [1, 1, 1]} : vector<2x22x16xf32> to vector<2x16x16xf32>
      %65 = vector.broadcast %62 : f32 to vector<2x16x16xf32>
      %66 = arith.mulf %65, %64 : vector<2x16x16xf32>
      %67 = arith.addf %61, %66 : vector<2x16x16xf32>
      %68 = vector.extract_strided_slice %31 {offsets = [0, 3, 0], sizes = [2, 16, 16], strides = [1, 1, 1]} : vector<2x22x16xf32> to vector<2x16x16xf32>
      %69 = vector.broadcast %63 : f32 to vector<2x16x16xf32>
      %70 = arith.mulf %69, %68 : vector<2x16x16xf32>
      %71 = arith.addf %67, %70 : vector<2x16x16xf32>
      %c28 = arith.constant 28 : index
      %72 = memref.load %arg3[%c28] : memref<98xf32, #tpu.memory_space<smem>>
      %c77 = arith.constant 77 : index
      %73 = memref.load %arg3[%c77] : memref<98xf32, #tpu.memory_space<smem>>
      %74 = vector.extract_strided_slice %30 {offsets = [0, 4, 0], sizes = [2, 16, 16], strides = [1, 1, 1]} : vector<2x22x16xf32> to vector<2x16x16xf32>
      %75 = vector.broadcast %72 : f32 to vector<2x16x16xf32>
      %76 = arith.mulf %75, %74 : vector<2x16x16xf32>
      %77 = arith.addf %71, %76 : vector<2x16x16xf32>
      %78 = vector.extract_strided_slice %31 {offsets = [0, 4, 0], sizes = [2, 16, 16], strides = [1, 1, 1]} : vector<2x22x16xf32> to vector<2x16x16xf32>
      %79 = vector.broadcast %73 : f32 to vector<2x16x16xf32>
      %80 = arith.mulf %79, %78 : vector<2x16x16xf32>
      %81 = arith.addf %77, %80 : vector<2x16x16xf32>
      %c35 = arith.constant 35 : index
      %82 = memref.load %arg3[%c35] : memref<98xf32, #tpu.memory_space<smem>>
      %c84 = arith.constant 84 : index
      %83 = memref.load %arg3[%c84] : memref<98xf32, #tpu.memory_space<smem>>
      %84 = vector.extract_strided_slice %30 {offsets = [0, 5, 0], sizes = [2, 16, 16], strides = [1, 1, 1]} : vector<2x22x16xf32> to vector<2x16x16xf32>
      %85 = vector.broadcast %82 : f32 to vector<2x16x16xf32>
      %86 = arith.mulf %85, %84 : vector<2x16x16xf32>
      %87 = arith.addf %81, %86 : vector<2x16x16xf32>
      %88 = vector.extract_strided_slice %31 {offsets = [0, 5, 0], sizes = [2, 16, 16], strides = [1, 1, 1]} : vector<2x22x16xf32> to vector<2x16x16xf32>
      %89 = vector.broadcast %83 : f32 to vector<2x16x16xf32>
      %90 = arith.mulf %89, %88 : vector<2x16x16xf32>
      %91 = arith.addf %87, %90 : vector<2x16x16xf32>
      %c42 = arith.constant 42 : index
      %92 = memref.load %arg3[%c42] : memref<98xf32, #tpu.memory_space<smem>>
      %c91 = arith.constant 91 : index
      %93 = memref.load %arg3[%c91] : memref<98xf32, #tpu.memory_space<smem>>
      %94 = vector.extract_strided_slice %30 {offsets = [0, 6, 0], sizes = [2, 16, 16], strides = [1, 1, 1]} : vector<2x22x16xf32> to vector<2x16x16xf32>
      %95 = vector.broadcast %92 : f32 to vector<2x16x16xf32>
      %96 = arith.mulf %95, %94 : vector<2x16x16xf32>
      %97 = arith.addf %91, %96 : vector<2x16x16xf32>
      %98 = vector.extract_strided_slice %31 {offsets = [0, 6, 0], sizes = [2, 16, 16], strides = [1, 1, 1]} : vector<2x22x16xf32> to vector<2x16x16xf32>
      %99 = vector.broadcast %93 : f32 to vector<2x16x16xf32>
      %100 = arith.mulf %99, %98 : vector<2x16x16xf32>
      %101 = arith.addf %97, %100 : vector<2x16x16xf32>
      %102 = vector.extract_strided_slice %26 {offsets = [0, 0, 1], sizes = [2, 22, 16], strides = [1, 1, 1]} : vector<2x22x22xf32> to vector<2x22x16xf32>
      %103 = vector.extract_strided_slice %28 {offsets = [0, 0, 1], sizes = [2, 22, 16], strides = [1, 1, 1]} : vector<2x22x22xf32> to vector<2x22x16xf32>
      %c1_46 = arith.constant 1 : index
      %104 = memref.load %arg3[%c1_46] : memref<98xf32, #tpu.memory_space<smem>>
      %c50 = arith.constant 50 : index
      %105 = memref.load %arg3[%c50] : memref<98xf32, #tpu.memory_space<smem>>
      %106 = vector.extract_strided_slice %102 {offsets = [0, 0, 0], sizes = [2, 16, 16], strides = [1, 1, 1]} : vector<2x22x16xf32> to vector<2x16x16xf32>
      %107 = vector.broadcast %104 : f32 to vector<2x16x16xf32>
      %108 = arith.mulf %107, %106 : vector<2x16x16xf32>
      %109 = arith.addf %101, %108 : vector<2x16x16xf32>
      %110 = vector.extract_strided_slice %103 {offsets = [0, 0, 0], sizes = [2, 16, 16], strides = [1, 1, 1]} : vector<2x22x16xf32> to vector<2x16x16xf32>
      %111 = vector.broadcast %105 : f32 to vector<2x16x16xf32>
      %112 = arith.mulf %111, %110 : vector<2x16x16xf32>
      %113 = arith.addf %109, %112 : vector<2x16x16xf32>
      %c8 = arith.constant 8 : index
      %114 = memref.load %arg3[%c8] : memref<98xf32, #tpu.memory_space<smem>>
      %c57 = arith.constant 57 : index
      %115 = memref.load %arg3[%c57] : memref<98xf32, #tpu.memory_space<smem>>
      %116 = vector.extract_strided_slice %102 {offsets = [0, 1, 0], sizes = [2, 16, 16], strides = [1, 1, 1]} : vector<2x22x16xf32> to vector<2x16x16xf32>
      %117 = vector.broadcast %114 : f32 to vector<2x16x16xf32>
      %118 = arith.mulf %117, %116 : vector<2x16x16xf32>
      %119 = arith.addf %113, %118 : vector<2x16x16xf32>
      %120 = vector.extract_strided_slice %103 {offsets = [0, 1, 0], sizes = [2, 16, 16], strides = [1, 1, 1]} : vector<2x22x16xf32> to vector<2x16x16xf32>
      %121 = vector.broadcast %115 : f32 to vector<2x16x16xf32>
      %122 = arith.mulf %121, %120 : vector<2x16x16xf32>
      %123 = arith.addf %119, %122 : vector<2x16x16xf32>
      %c15 = arith.constant 15 : index
      %124 = memref.load %arg3[%c15] : memref<98xf32, #tpu.memory_space<smem>>
      %c64 = arith.constant 64 : index
      %125 = memref.load %arg3[%c64] : memref<98xf32, #tpu.memory_space<smem>>
      %126 = vector.extract_strided_slice %102 {offsets = [0, 2, 0], sizes = [2, 16, 16], strides = [1, 1, 1]} : vector<2x22x16xf32> to vector<2x16x16xf32>
      %127 = vector.broadcast %124 : f32 to vector<2x16x16xf32>
      %128 = arith.mulf %127, %126 : vector<2x16x16xf32>
      %129 = arith.addf %123, %128 : vector<2x16x16xf32>
      %130 = vector.extract_strided_slice %103 {offsets = [0, 2, 0], sizes = [2, 16, 16], strides = [1, 1, 1]} : vector<2x22x16xf32> to vector<2x16x16xf32>
      %131 = vector.broadcast %125 : f32 to vector<2x16x16xf32>
      %132 = arith.mulf %131, %130 : vector<2x16x16xf32>
      %133 = arith.addf %129, %132 : vector<2x16x16xf32>
      %c22 = arith.constant 22 : index
      %134 = memref.load %arg3[%c22] : memref<98xf32, #tpu.memory_space<smem>>
      %c71 = arith.constant 71 : index
      %135 = memref.load %arg3[%c71] : memref<98xf32, #tpu.memory_space<smem>>
      %136 = vector.extract_strided_slice %102 {offsets = [0, 3, 0], sizes = [2, 16, 16], strides = [1, 1, 1]} : vector<2x22x16xf32> to vector<2x16x16xf32>
      %137 = vector.broadcast %134 : f32 to vector<2x16x16xf32>
      %138 = arith.mulf %137, %136 : vector<2x16x16xf32>
      %139 = arith.addf %133, %138 : vector<2x16x16xf32>
      %140 = vector.extract_strided_slice %103 {offsets = [0, 3, 0], sizes = [2, 16, 16], strides = [1, 1, 1]} : vector<2x22x16xf32> to vector<2x16x16xf32>
      %141 = vector.broadcast %135 : f32 to vector<2x16x16xf32>
      %142 = arith.mulf %141, %140 : vector<2x16x16xf32>
      %143 = arith.addf %139, %142 : vector<2x16x16xf32>
      %c29 = arith.constant 29 : index
      %144 = memref.load %arg3[%c29] : memref<98xf32, #tpu.memory_space<smem>>
      %c78 = arith.constant 78 : index
      %145 = memref.load %arg3[%c78] : memref<98xf32, #tpu.memory_space<smem>>
      %146 = vector.extract_strided_slice %102 {offsets = [0, 4, 0], sizes = [2, 16, 16], strides = [1, 1, 1]} : vector<2x22x16xf32> to vector<2x16x16xf32>
      %147 = vector.broadcast %144 : f32 to vector<2x16x16xf32>
      %148 = arith.mulf %147, %146 : vector<2x16x16xf32>
      %149 = arith.addf %143, %148 : vector<2x16x16xf32>
      %150 = vector.extract_strided_slice %103 {offsets = [0, 4, 0], sizes = [2, 16, 16], strides = [1, 1, 1]} : vector<2x22x16xf32> to vector<2x16x16xf32>
      %151 = vector.broadcast %145 : f32 to vector<2x16x16xf32>
      %152 = arith.mulf %151, %150 : vector<2x16x16xf32>
      %153 = arith.addf %149, %152 : vector<2x16x16xf32>
      %c36 = arith.constant 36 : index
      %154 = memref.load %arg3[%c36] : memref<98xf32, #tpu.memory_space<smem>>
      %c85 = arith.constant 85 : index
      %155 = memref.load %arg3[%c85] : memref<98xf32, #tpu.memory_space<smem>>
      %156 = vector.extract_strided_slice %102 {offsets = [0, 5, 0], sizes = [2, 16, 16], strides = [1, 1, 1]} : vector<2x22x16xf32> to vector<2x16x16xf32>
      %157 = vector.broadcast %154 : f32 to vector<2x16x16xf32>
      %158 = arith.mulf %157, %156 : vector<2x16x16xf32>
      %159 = arith.addf %153, %158 : vector<2x16x16xf32>
      %160 = vector.extract_strided_slice %103 {offsets = [0, 5, 0], sizes = [2, 16, 16], strides = [1, 1, 1]} : vector<2x22x16xf32> to vector<2x16x16xf32>
      %161 = vector.broadcast %155 : f32 to vector<2x16x16xf32>
      %162 = arith.mulf %161, %160 : vector<2x16x16xf32>
      %163 = arith.addf %159, %162 : vector<2x16x16xf32>
      %c43 = arith.constant 43 : index
      %164 = memref.load %arg3[%c43] : memref<98xf32, #tpu.memory_space<smem>>
      %c92 = arith.constant 92 : index
      %165 = memref.load %arg3[%c92] : memref<98xf32, #tpu.memory_space<smem>>
      %166 = vector.extract_strided_slice %102 {offsets = [0, 6, 0], sizes = [2, 16, 16], strides = [1, 1, 1]} : vector<2x22x16xf32> to vector<2x16x16xf32>
      %167 = vector.broadcast %164 : f32 to vector<2x16x16xf32>
      %168 = arith.mulf %167, %166 : vector<2x16x16xf32>
      %169 = arith.addf %163, %168 : vector<2x16x16xf32>
      %170 = vector.extract_strided_slice %103 {offsets = [0, 6, 0], sizes = [2, 16, 16], strides = [1, 1, 1]} : vector<2x22x16xf32> to vector<2x16x16xf32>
      %171 = vector.broadcast %165 : f32 to vector<2x16x16xf32>
      %172 = arith.mulf %171, %170 : vector<2x16x16xf32>
      %173 = arith.addf %169, %172 : vector<2x16x16xf32>
      %174 = vector.extract_strided_slice %26 {offsets = [0, 0, 2], sizes = [2, 22, 16], strides = [1, 1, 1]} : vector<2x22x22xf32> to vector<2x22x16xf32>
      %175 = vector.extract_strided_slice %28 {offsets = [0, 0, 2], sizes = [2, 22, 16], strides = [1, 1, 1]} : vector<2x22x22xf32> to vector<2x22x16xf32>
      %c2 = arith.constant 2 : index
      %176 = memref.load %arg3[%c2] : memref<98xf32, #tpu.memory_space<smem>>
      %c51 = arith.constant 51 : index
      %177 = memref.load %arg3[%c51] : memref<98xf32, #tpu.memory_space<smem>>
      %178 = vector.extract_strided_slice %174 {offsets = [0, 0, 0], sizes = [2, 16, 16], strides = [1, 1, 1]} : vector<2x22x16xf32> to vector<2x16x16xf32>
      %179 = vector.broadcast %176 : f32 to vector<2x16x16xf32>
      %180 = arith.mulf %179, %178 : vector<2x16x16xf32>
      %181 = arith.addf %173, %180 : vector<2x16x16xf32>
      %182 = vector.extract_strided_slice %175 {offsets = [0, 0, 0], sizes = [2, 16, 16], strides = [1, 1, 1]} : vector<2x22x16xf32> to vector<2x16x16xf32>
      %183 = vector.broadcast %177 : f32 to vector<2x16x16xf32>
      %184 = arith.mulf %183, %182 : vector<2x16x16xf32>
      %185 = arith.addf %181, %184 : vector<2x16x16xf32>
      %c9 = arith.constant 9 : index
      %186 = memref.load %arg3[%c9] : memref<98xf32, #tpu.memory_space<smem>>
      %c58 = arith.constant 58 : index
      %187 = memref.load %arg3[%c58] : memref<98xf32, #tpu.memory_space<smem>>
      %188 = vector.extract_strided_slice %174 {offsets = [0, 1, 0], sizes = [2, 16, 16], strides = [1, 1, 1]} : vector<2x22x16xf32> to vector<2x16x16xf32>
      %189 = vector.broadcast %186 : f32 to vector<2x16x16xf32>
      %190 = arith.mulf %189, %188 : vector<2x16x16xf32>
      %191 = arith.addf %185, %190 : vector<2x16x16xf32>
      %192 = vector.extract_strided_slice %175 {offsets = [0, 1, 0], sizes = [2, 16, 16], strides = [1, 1, 1]} : vector<2x22x16xf32> to vector<2x16x16xf32>
      %193 = vector.broadcast %187 : f32 to vector<2x16x16xf32>
      %194 = arith.mulf %193, %192 : vector<2x16x16xf32>
      %195 = arith.addf %191, %194 : vector<2x16x16xf32>
      %c16 = arith.constant 16 : index
      %196 = memref.load %arg3[%c16] : memref<98xf32, #tpu.memory_space<smem>>
      %c65 = arith.constant 65 : index
      %197 = memref.load %arg3[%c65] : memref<98xf32, #tpu.memory_space<smem>>
      %198 = vector.extract_strided_slice %174 {offsets = [0, 2, 0], sizes = [2, 16, 16], strides = [1, 1, 1]} : vector<2x22x16xf32> to vector<2x16x16xf32>
      %199 = vector.broadcast %196 : f32 to vector<2x16x16xf32>
      %200 = arith.mulf %199, %198 : vector<2x16x16xf32>
      %201 = arith.addf %195, %200 : vector<2x16x16xf32>
      %202 = vector.extract_strided_slice %175 {offsets = [0, 2, 0], sizes = [2, 16, 16], strides = [1, 1, 1]} : vector<2x22x16xf32> to vector<2x16x16xf32>
      %203 = vector.broadcast %197 : f32 to vector<2x16x16xf32>
      %204 = arith.mulf %203, %202 : vector<2x16x16xf32>
      %205 = arith.addf %201, %204 : vector<2x16x16xf32>
      %c23 = arith.constant 23 : index
      %206 = memref.load %arg3[%c23] : memref<98xf32, #tpu.memory_space<smem>>
      %c72 = arith.constant 72 : index
      %207 = memref.load %arg3[%c72] : memref<98xf32, #tpu.memory_space<smem>>
      %208 = vector.extract_strided_slice %174 {offsets = [0, 3, 0], sizes = [2, 16, 16], strides = [1, 1, 1]} : vector<2x22x16xf32> to vector<2x16x16xf32>
      %209 = vector.broadcast %206 : f32 to vector<2x16x16xf32>
      %210 = arith.mulf %209, %208 : vector<2x16x16xf32>
      %211 = arith.addf %205, %210 : vector<2x16x16xf32>
      %212 = vector.extract_strided_slice %175 {offsets = [0, 3, 0], sizes = [2, 16, 16], strides = [1, 1, 1]} : vector<2x22x16xf32> to vector<2x16x16xf32>
      %213 = vector.broadcast %207 : f32 to vector<2x16x16xf32>
      %214 = arith.mulf %213, %212 : vector<2x16x16xf32>
      %215 = arith.addf %211, %214 : vector<2x16x16xf32>
      %c30 = arith.constant 30 : index
      %216 = memref.load %arg3[%c30] : memref<98xf32, #tpu.memory_space<smem>>
      %c79 = arith.constant 79 : index
      %217 = memref.load %arg3[%c79] : memref<98xf32, #tpu.memory_space<smem>>
      %218 = vector.extract_strided_slice %174 {offsets = [0, 4, 0], sizes = [2, 16, 16], strides = [1, 1, 1]} : vector<2x22x16xf32> to vector<2x16x16xf32>
      %219 = vector.broadcast %216 : f32 to vector<2x16x16xf32>
      %220 = arith.mulf %219, %218 : vector<2x16x16xf32>
      %221 = arith.addf %215, %220 : vector<2x16x16xf32>
      %222 = vector.extract_strided_slice %175 {offsets = [0, 4, 0], sizes = [2, 16, 16], strides = [1, 1, 1]} : vector<2x22x16xf32> to vector<2x16x16xf32>
      %223 = vector.broadcast %217 : f32 to vector<2x16x16xf32>
      %224 = arith.mulf %223, %222 : vector<2x16x16xf32>
      %225 = arith.addf %221, %224 : vector<2x16x16xf32>
      %c37 = arith.constant 37 : index
      %226 = memref.load %arg3[%c37] : memref<98xf32, #tpu.memory_space<smem>>
      %c86 = arith.constant 86 : index
      %227 = memref.load %arg3[%c86] : memref<98xf32, #tpu.memory_space<smem>>
      %228 = vector.extract_strided_slice %174 {offsets = [0, 5, 0], sizes = [2, 16, 16], strides = [1, 1, 1]} : vector<2x22x16xf32> to vector<2x16x16xf32>
      %229 = vector.broadcast %226 : f32 to vector<2x16x16xf32>
      %230 = arith.mulf %229, %228 : vector<2x16x16xf32>
      %231 = arith.addf %225, %230 : vector<2x16x16xf32>
      %232 = vector.extract_strided_slice %175 {offsets = [0, 5, 0], sizes = [2, 16, 16], strides = [1, 1, 1]} : vector<2x22x16xf32> to vector<2x16x16xf32>
      %233 = vector.broadcast %227 : f32 to vector<2x16x16xf32>
      %234 = arith.mulf %233, %232 : vector<2x16x16xf32>
      %235 = arith.addf %231, %234 : vector<2x16x16xf32>
      %c44 = arith.constant 44 : index
      %236 = memref.load %arg3[%c44] : memref<98xf32, #tpu.memory_space<smem>>
      %c93 = arith.constant 93 : index
      %237 = memref.load %arg3[%c93] : memref<98xf32, #tpu.memory_space<smem>>
      %238 = vector.extract_strided_slice %174 {offsets = [0, 6, 0], sizes = [2, 16, 16], strides = [1, 1, 1]} : vector<2x22x16xf32> to vector<2x16x16xf32>
      %239 = vector.broadcast %236 : f32 to vector<2x16x16xf32>
      %240 = arith.mulf %239, %238 : vector<2x16x16xf32>
      %241 = arith.addf %235, %240 : vector<2x16x16xf32>
      %242 = vector.extract_strided_slice %175 {offsets = [0, 6, 0], sizes = [2, 16, 16], strides = [1, 1, 1]} : vector<2x22x16xf32> to vector<2x16x16xf32>
      %243 = vector.broadcast %237 : f32 to vector<2x16x16xf32>
      %244 = arith.mulf %243, %242 : vector<2x16x16xf32>
      %245 = arith.addf %241, %244 : vector<2x16x16xf32>
      %246 = vector.extract_strided_slice %26 {offsets = [0, 0, 3], sizes = [2, 22, 16], strides = [1, 1, 1]} : vector<2x22x22xf32> to vector<2x22x16xf32>
      %247 = vector.extract_strided_slice %28 {offsets = [0, 0, 3], sizes = [2, 22, 16], strides = [1, 1, 1]} : vector<2x22x22xf32> to vector<2x22x16xf32>
      %c3_47 = arith.constant 3 : index
      %248 = memref.load %arg3[%c3_47] : memref<98xf32, #tpu.memory_space<smem>>
      %c52 = arith.constant 52 : index
      %249 = memref.load %arg3[%c52] : memref<98xf32, #tpu.memory_space<smem>>
      %250 = vector.extract_strided_slice %246 {offsets = [0, 0, 0], sizes = [2, 16, 16], strides = [1, 1, 1]} : vector<2x22x16xf32> to vector<2x16x16xf32>
      %251 = vector.broadcast %248 : f32 to vector<2x16x16xf32>
      %252 = arith.mulf %251, %250 : vector<2x16x16xf32>
      %253 = arith.addf %245, %252 : vector<2x16x16xf32>
      %254 = vector.extract_strided_slice %247 {offsets = [0, 0, 0], sizes = [2, 16, 16], strides = [1, 1, 1]} : vector<2x22x16xf32> to vector<2x16x16xf32>
      %255 = vector.broadcast %249 : f32 to vector<2x16x16xf32>
      %256 = arith.mulf %255, %254 : vector<2x16x16xf32>
      %257 = arith.addf %253, %256 : vector<2x16x16xf32>
      %c10 = arith.constant 10 : index
      %258 = memref.load %arg3[%c10] : memref<98xf32, #tpu.memory_space<smem>>
      %c59 = arith.constant 59 : index
      %259 = memref.load %arg3[%c59] : memref<98xf32, #tpu.memory_space<smem>>
      %260 = vector.extract_strided_slice %246 {offsets = [0, 1, 0], sizes = [2, 16, 16], strides = [1, 1, 1]} : vector<2x22x16xf32> to vector<2x16x16xf32>
      %261 = vector.broadcast %258 : f32 to vector<2x16x16xf32>
      %262 = arith.mulf %261, %260 : vector<2x16x16xf32>
      %263 = arith.addf %257, %262 : vector<2x16x16xf32>
      %264 = vector.extract_strided_slice %247 {offsets = [0, 1, 0], sizes = [2, 16, 16], strides = [1, 1, 1]} : vector<2x22x16xf32> to vector<2x16x16xf32>
      %265 = vector.broadcast %259 : f32 to vector<2x16x16xf32>
      %266 = arith.mulf %265, %264 : vector<2x16x16xf32>
      %267 = arith.addf %263, %266 : vector<2x16x16xf32>
      %c17 = arith.constant 17 : index
      %268 = memref.load %arg3[%c17] : memref<98xf32, #tpu.memory_space<smem>>
      %c66 = arith.constant 66 : index
      %269 = memref.load %arg3[%c66] : memref<98xf32, #tpu.memory_space<smem>>
      %270 = vector.extract_strided_slice %246 {offsets = [0, 2, 0], sizes = [2, 16, 16], strides = [1, 1, 1]} : vector<2x22x16xf32> to vector<2x16x16xf32>
      %271 = vector.broadcast %268 : f32 to vector<2x16x16xf32>
      %272 = arith.mulf %271, %270 : vector<2x16x16xf32>
      %273 = arith.addf %267, %272 : vector<2x16x16xf32>
      %274 = vector.extract_strided_slice %247 {offsets = [0, 2, 0], sizes = [2, 16, 16], strides = [1, 1, 1]} : vector<2x22x16xf32> to vector<2x16x16xf32>
      %275 = vector.broadcast %269 : f32 to vector<2x16x16xf32>
      %276 = arith.mulf %275, %274 : vector<2x16x16xf32>
      %277 = arith.addf %273, %276 : vector<2x16x16xf32>
      %c24 = arith.constant 24 : index
      %278 = memref.load %arg3[%c24] : memref<98xf32, #tpu.memory_space<smem>>
      %c73 = arith.constant 73 : index
      %279 = memref.load %arg3[%c73] : memref<98xf32, #tpu.memory_space<smem>>
      %280 = vector.extract_strided_slice %246 {offsets = [0, 3, 0], sizes = [2, 16, 16], strides = [1, 1, 1]} : vector<2x22x16xf32> to vector<2x16x16xf32>
      %281 = vector.broadcast %278 : f32 to vector<2x16x16xf32>
      %282 = arith.mulf %281, %280 : vector<2x16x16xf32>
      %283 = arith.addf %277, %282 : vector<2x16x16xf32>
      %284 = vector.extract_strided_slice %247 {offsets = [0, 3, 0], sizes = [2, 16, 16], strides = [1, 1, 1]} : vector<2x22x16xf32> to vector<2x16x16xf32>
      %285 = vector.broadcast %279 : f32 to vector<2x16x16xf32>
      %286 = arith.mulf %285, %284 : vector<2x16x16xf32>
      %287 = arith.addf %283, %286 : vector<2x16x16xf32>
      %c31 = arith.constant 31 : index
      %288 = memref.load %arg3[%c31] : memref<98xf32, #tpu.memory_space<smem>>
      %c80 = arith.constant 80 : index
      %289 = memref.load %arg3[%c80] : memref<98xf32, #tpu.memory_space<smem>>
      %290 = vector.extract_strided_slice %246 {offsets = [0, 4, 0], sizes = [2, 16, 16], strides = [1, 1, 1]} : vector<2x22x16xf32> to vector<2x16x16xf32>
      %291 = vector.broadcast %288 : f32 to vector<2x16x16xf32>
      %292 = arith.mulf %291, %290 : vector<2x16x16xf32>
      %293 = arith.addf %287, %292 : vector<2x16x16xf32>
      %294 = vector.extract_strided_slice %247 {offsets = [0, 4, 0], sizes = [2, 16, 16], strides = [1, 1, 1]} : vector<2x22x16xf32> to vector<2x16x16xf32>
      %295 = vector.broadcast %289 : f32 to vector<2x16x16xf32>
      %296 = arith.mulf %295, %294 : vector<2x16x16xf32>
      %297 = arith.addf %293, %296 : vector<2x16x16xf32>
      %c38 = arith.constant 38 : index
      %298 = memref.load %arg3[%c38] : memref<98xf32, #tpu.memory_space<smem>>
      %c87 = arith.constant 87 : index
      %299 = memref.load %arg3[%c87] : memref<98xf32, #tpu.memory_space<smem>>
      %300 = vector.extract_strided_slice %246 {offsets = [0, 5, 0], sizes = [2, 16, 16], strides = [1, 1, 1]} : vector<2x22x16xf32> to vector<2x16x16xf32>
      %301 = vector.broadcast %298 : f32 to vector<2x16x16xf32>
      %302 = arith.mulf %301, %300 : vector<2x16x16xf32>
      %303 = arith.addf %297, %302 : vector<2x16x16xf32>
      %304 = vector.extract_strided_slice %247 {offsets = [0, 5, 0], sizes = [2, 16, 16], strides = [1, 1, 1]} : vector<2x22x16xf32> to vector<2x16x16xf32>
      %305 = vector.broadcast %299 : f32 to vector<2x16x16xf32>
      %306 = arith.mulf %305, %304 : vector<2x16x16xf32>
      %307 = arith.addf %303, %306 : vector<2x16x16xf32>
      %c45 = arith.constant 45 : index
      %308 = memref.load %arg3[%c45] : memref<98xf32, #tpu.memory_space<smem>>
      %c94 = arith.constant 94 : index
      %309 = memref.load %arg3[%c94] : memref<98xf32, #tpu.memory_space<smem>>
      %310 = vector.extract_strided_slice %246 {offsets = [0, 6, 0], sizes = [2, 16, 16], strides = [1, 1, 1]} : vector<2x22x16xf32> to vector<2x16x16xf32>
      %311 = vector.broadcast %308 : f32 to vector<2x16x16xf32>
      %312 = arith.mulf %311, %310 : vector<2x16x16xf32>
      %313 = arith.addf %307, %312 : vector<2x16x16xf32>
      %314 = vector.extract_strided_slice %247 {offsets = [0, 6, 0], sizes = [2, 16, 16], strides = [1, 1, 1]} : vector<2x22x16xf32> to vector<2x16x16xf32>
      %315 = vector.broadcast %309 : f32 to vector<2x16x16xf32>
      %316 = arith.mulf %315, %314 : vector<2x16x16xf32>
      %317 = arith.addf %313, %316 : vector<2x16x16xf32>
      %318 = vector.extract_strided_slice %26 {offsets = [0, 0, 4], sizes = [2, 22, 16], strides = [1, 1, 1]} : vector<2x22x22xf32> to vector<2x22x16xf32>
      %319 = vector.extract_strided_slice %28 {offsets = [0, 0, 4], sizes = [2, 22, 16], strides = [1, 1, 1]} : vector<2x22x22xf32> to vector<2x22x16xf32>
      %c4 = arith.constant 4 : index
      %320 = memref.load %arg3[%c4] : memref<98xf32, #tpu.memory_space<smem>>
      %c53 = arith.constant 53 : index
      %321 = memref.load %arg3[%c53] : memref<98xf32, #tpu.memory_space<smem>>
      %322 = vector.extract_strided_slice %318 {offsets = [0, 0, 0], sizes = [2, 16, 16], strides = [1, 1, 1]} : vector<2x22x16xf32> to vector<2x16x16xf32>
      %323 = vector.broadcast %320 : f32 to vector<2x16x16xf32>
      %324 = arith.mulf %323, %322 : vector<2x16x16xf32>
      %325 = arith.addf %317, %324 : vector<2x16x16xf32>
      %326 = vector.extract_strided_slice %319 {offsets = [0, 0, 0], sizes = [2, 16, 16], strides = [1, 1, 1]} : vector<2x22x16xf32> to vector<2x16x16xf32>
      %327 = vector.broadcast %321 : f32 to vector<2x16x16xf32>
      %328 = arith.mulf %327, %326 : vector<2x16x16xf32>
      %329 = arith.addf %325, %328 : vector<2x16x16xf32>
      %c11 = arith.constant 11 : index
      %330 = memref.load %arg3[%c11] : memref<98xf32, #tpu.memory_space<smem>>
      %c60 = arith.constant 60 : index
      %331 = memref.load %arg3[%c60] : memref<98xf32, #tpu.memory_space<smem>>
      %332 = vector.extract_strided_slice %318 {offsets = [0, 1, 0], sizes = [2, 16, 16], strides = [1, 1, 1]} : vector<2x22x16xf32> to vector<2x16x16xf32>
      %333 = vector.broadcast %330 : f32 to vector<2x16x16xf32>
      %334 = arith.mulf %333, %332 : vector<2x16x16xf32>
      %335 = arith.addf %329, %334 : vector<2x16x16xf32>
      %336 = vector.extract_strided_slice %319 {offsets = [0, 1, 0], sizes = [2, 16, 16], strides = [1, 1, 1]} : vector<2x22x16xf32> to vector<2x16x16xf32>
      %337 = vector.broadcast %331 : f32 to vector<2x16x16xf32>
      %338 = arith.mulf %337, %336 : vector<2x16x16xf32>
      %339 = arith.addf %335, %338 : vector<2x16x16xf32>
      %c18 = arith.constant 18 : index
      %340 = memref.load %arg3[%c18] : memref<98xf32, #tpu.memory_space<smem>>
      %c67 = arith.constant 67 : index
      %341 = memref.load %arg3[%c67] : memref<98xf32, #tpu.memory_space<smem>>
      %342 = vector.extract_strided_slice %318 {offsets = [0, 2, 0], sizes = [2, 16, 16], strides = [1, 1, 1]} : vector<2x22x16xf32> to vector<2x16x16xf32>
      %343 = vector.broadcast %340 : f32 to vector<2x16x16xf32>
      %344 = arith.mulf %343, %342 : vector<2x16x16xf32>
      %345 = arith.addf %339, %344 : vector<2x16x16xf32>
      %346 = vector.extract_strided_slice %319 {offsets = [0, 2, 0], sizes = [2, 16, 16], strides = [1, 1, 1]} : vector<2x22x16xf32> to vector<2x16x16xf32>
      %347 = vector.broadcast %341 : f32 to vector<2x16x16xf32>
      %348 = arith.mulf %347, %346 : vector<2x16x16xf32>
      %349 = arith.addf %345, %348 : vector<2x16x16xf32>
      %c25 = arith.constant 25 : index
      %350 = memref.load %arg3[%c25] : memref<98xf32, #tpu.memory_space<smem>>
      %c74 = arith.constant 74 : index
      %351 = memref.load %arg3[%c74] : memref<98xf32, #tpu.memory_space<smem>>
      %352 = vector.extract_strided_slice %318 {offsets = [0, 3, 0], sizes = [2, 16, 16], strides = [1, 1, 1]} : vector<2x22x16xf32> to vector<2x16x16xf32>
      %353 = vector.broadcast %350 : f32 to vector<2x16x16xf32>
      %354 = arith.mulf %353, %352 : vector<2x16x16xf32>
      %355 = arith.addf %349, %354 : vector<2x16x16xf32>
      %356 = vector.extract_strided_slice %319 {offsets = [0, 3, 0], sizes = [2, 16, 16], strides = [1, 1, 1]} : vector<2x22x16xf32> to vector<2x16x16xf32>
      %357 = vector.broadcast %351 : f32 to vector<2x16x16xf32>
      %358 = arith.mulf %357, %356 : vector<2x16x16xf32>
      %359 = arith.addf %355, %358 : vector<2x16x16xf32>
      %c32 = arith.constant 32 : index
      %360 = memref.load %arg3[%c32] : memref<98xf32, #tpu.memory_space<smem>>
      %c81 = arith.constant 81 : index
      %361 = memref.load %arg3[%c81] : memref<98xf32, #tpu.memory_space<smem>>
      %362 = vector.extract_strided_slice %318 {offsets = [0, 4, 0], sizes = [2, 16, 16], strides = [1, 1, 1]} : vector<2x22x16xf32> to vector<2x16x16xf32>
      %363 = vector.broadcast %360 : f32 to vector<2x16x16xf32>
      %364 = arith.mulf %363, %362 : vector<2x16x16xf32>
      %365 = arith.addf %359, %364 : vector<2x16x16xf32>
      %366 = vector.extract_strided_slice %319 {offsets = [0, 4, 0], sizes = [2, 16, 16], strides = [1, 1, 1]} : vector<2x22x16xf32> to vector<2x16x16xf32>
      %367 = vector.broadcast %361 : f32 to vector<2x16x16xf32>
      %368 = arith.mulf %367, %366 : vector<2x16x16xf32>
      %369 = arith.addf %365, %368 : vector<2x16x16xf32>
      %c39 = arith.constant 39 : index
      %370 = memref.load %arg3[%c39] : memref<98xf32, #tpu.memory_space<smem>>
      %c88 = arith.constant 88 : index
      %371 = memref.load %arg3[%c88] : memref<98xf32, #tpu.memory_space<smem>>
      %372 = vector.extract_strided_slice %318 {offsets = [0, 5, 0], sizes = [2, 16, 16], strides = [1, 1, 1]} : vector<2x22x16xf32> to vector<2x16x16xf32>
      %373 = vector.broadcast %370 : f32 to vector<2x16x16xf32>
      %374 = arith.mulf %373, %372 : vector<2x16x16xf32>
      %375 = arith.addf %369, %374 : vector<2x16x16xf32>
      %376 = vector.extract_strided_slice %319 {offsets = [0, 5, 0], sizes = [2, 16, 16], strides = [1, 1, 1]} : vector<2x22x16xf32> to vector<2x16x16xf32>
      %377 = vector.broadcast %371 : f32 to vector<2x16x16xf32>
      %378 = arith.mulf %377, %376 : vector<2x16x16xf32>
      %379 = arith.addf %375, %378 : vector<2x16x16xf32>
      %c46 = arith.constant 46 : index
      %380 = memref.load %arg3[%c46] : memref<98xf32, #tpu.memory_space<smem>>
      %c95 = arith.constant 95 : index
      %381 = memref.load %arg3[%c95] : memref<98xf32, #tpu.memory_space<smem>>
      %382 = vector.extract_strided_slice %318 {offsets = [0, 6, 0], sizes = [2, 16, 16], strides = [1, 1, 1]} : vector<2x22x16xf32> to vector<2x16x16xf32>
      %383 = vector.broadcast %380 : f32 to vector<2x16x16xf32>
      %384 = arith.mulf %383, %382 : vector<2x16x16xf32>
      %385 = arith.addf %379, %384 : vector<2x16x16xf32>
      %386 = vector.extract_strided_slice %319 {offsets = [0, 6, 0], sizes = [2, 16, 16], strides = [1, 1, 1]} : vector<2x22x16xf32> to vector<2x16x16xf32>
      %387 = vector.broadcast %381 : f32 to vector<2x16x16xf32>
      %388 = arith.mulf %387, %386 : vector<2x16x16xf32>
      %389 = arith.addf %385, %388 : vector<2x16x16xf32>
      %390 = vector.extract_strided_slice %26 {offsets = [0, 0, 5], sizes = [2, 22, 16], strides = [1, 1, 1]} : vector<2x22x22xf32> to vector<2x22x16xf32>
      %391 = vector.extract_strided_slice %28 {offsets = [0, 0, 5], sizes = [2, 22, 16], strides = [1, 1, 1]} : vector<2x22x22xf32> to vector<2x22x16xf32>
      %c5 = arith.constant 5 : index
      %392 = memref.load %arg3[%c5] : memref<98xf32, #tpu.memory_space<smem>>
      %c54 = arith.constant 54 : index
      %393 = memref.load %arg3[%c54] : memref<98xf32, #tpu.memory_space<smem>>
      %394 = vector.extract_strided_slice %390 {offsets = [0, 0, 0], sizes = [2, 16, 16], strides = [1, 1, 1]} : vector<2x22x16xf32> to vector<2x16x16xf32>
      %395 = vector.broadcast %392 : f32 to vector<2x16x16xf32>
      %396 = arith.mulf %395, %394 : vector<2x16x16xf32>
      %397 = arith.addf %389, %396 : vector<2x16x16xf32>
      %398 = vector.extract_strided_slice %391 {offsets = [0, 0, 0], sizes = [2, 16, 16], strides = [1, 1, 1]} : vector<2x22x16xf32> to vector<2x16x16xf32>
      %399 = vector.broadcast %393 : f32 to vector<2x16x16xf32>
      %400 = arith.mulf %399, %398 : vector<2x16x16xf32>
      %401 = arith.addf %397, %400 : vector<2x16x16xf32>
      %c12 = arith.constant 12 : index
      %402 = memref.load %arg3[%c12] : memref<98xf32, #tpu.memory_space<smem>>
      %c61 = arith.constant 61 : index
      %403 = memref.load %arg3[%c61] : memref<98xf32, #tpu.memory_space<smem>>
      %404 = vector.extract_strided_slice %390 {offsets = [0, 1, 0], sizes = [2, 16, 16], strides = [1, 1, 1]} : vector<2x22x16xf32> to vector<2x16x16xf32>
      %405 = vector.broadcast %402 : f32 to vector<2x16x16xf32>
      %406 = arith.mulf %405, %404 : vector<2x16x16xf32>
      %407 = arith.addf %401, %406 : vector<2x16x16xf32>
      %408 = vector.extract_strided_slice %391 {offsets = [0, 1, 0], sizes = [2, 16, 16], strides = [1, 1, 1]} : vector<2x22x16xf32> to vector<2x16x16xf32>
      %409 = vector.broadcast %403 : f32 to vector<2x16x16xf32>
      %410 = arith.mulf %409, %408 : vector<2x16x16xf32>
      %411 = arith.addf %407, %410 : vector<2x16x16xf32>
      %c19 = arith.constant 19 : index
      %412 = memref.load %arg3[%c19] : memref<98xf32, #tpu.memory_space<smem>>
      %c68 = arith.constant 68 : index
      %413 = memref.load %arg3[%c68] : memref<98xf32, #tpu.memory_space<smem>>
      %414 = vector.extract_strided_slice %390 {offsets = [0, 2, 0], sizes = [2, 16, 16], strides = [1, 1, 1]} : vector<2x22x16xf32> to vector<2x16x16xf32>
      %415 = vector.broadcast %412 : f32 to vector<2x16x16xf32>
      %416 = arith.mulf %415, %414 : vector<2x16x16xf32>
      %417 = arith.addf %411, %416 : vector<2x16x16xf32>
      %418 = vector.extract_strided_slice %391 {offsets = [0, 2, 0], sizes = [2, 16, 16], strides = [1, 1, 1]} : vector<2x22x16xf32> to vector<2x16x16xf32>
      %419 = vector.broadcast %413 : f32 to vector<2x16x16xf32>
      %420 = arith.mulf %419, %418 : vector<2x16x16xf32>
      %421 = arith.addf %417, %420 : vector<2x16x16xf32>
      %c26 = arith.constant 26 : index
      %422 = memref.load %arg3[%c26] : memref<98xf32, #tpu.memory_space<smem>>
      %c75 = arith.constant 75 : index
      %423 = memref.load %arg3[%c75] : memref<98xf32, #tpu.memory_space<smem>>
      %424 = vector.extract_strided_slice %390 {offsets = [0, 3, 0], sizes = [2, 16, 16], strides = [1, 1, 1]} : vector<2x22x16xf32> to vector<2x16x16xf32>
      %425 = vector.broadcast %422 : f32 to vector<2x16x16xf32>
      %426 = arith.mulf %425, %424 : vector<2x16x16xf32>
      %427 = arith.addf %421, %426 : vector<2x16x16xf32>
      %428 = vector.extract_strided_slice %391 {offsets = [0, 3, 0], sizes = [2, 16, 16], strides = [1, 1, 1]} : vector<2x22x16xf32> to vector<2x16x16xf32>
      %429 = vector.broadcast %423 : f32 to vector<2x16x16xf32>
      %430 = arith.mulf %429, %428 : vector<2x16x16xf32>
      %431 = arith.addf %427, %430 : vector<2x16x16xf32>
      %c33 = arith.constant 33 : index
      %432 = memref.load %arg3[%c33] : memref<98xf32, #tpu.memory_space<smem>>
      %c82 = arith.constant 82 : index
      %433 = memref.load %arg3[%c82] : memref<98xf32, #tpu.memory_space<smem>>
      %434 = vector.extract_strided_slice %390 {offsets = [0, 4, 0], sizes = [2, 16, 16], strides = [1, 1, 1]} : vector<2x22x16xf32> to vector<2x16x16xf32>
      %435 = vector.broadcast %432 : f32 to vector<2x16x16xf32>
      %436 = arith.mulf %435, %434 : vector<2x16x16xf32>
      %437 = arith.addf %431, %436 : vector<2x16x16xf32>
      %438 = vector.extract_strided_slice %391 {offsets = [0, 4, 0], sizes = [2, 16, 16], strides = [1, 1, 1]} : vector<2x22x16xf32> to vector<2x16x16xf32>
      %439 = vector.broadcast %433 : f32 to vector<2x16x16xf32>
      %440 = arith.mulf %439, %438 : vector<2x16x16xf32>
      %441 = arith.addf %437, %440 : vector<2x16x16xf32>
      %c40 = arith.constant 40 : index
      %442 = memref.load %arg3[%c40] : memref<98xf32, #tpu.memory_space<smem>>
      %c89 = arith.constant 89 : index
      %443 = memref.load %arg3[%c89] : memref<98xf32, #tpu.memory_space<smem>>
      %444 = vector.extract_strided_slice %390 {offsets = [0, 5, 0], sizes = [2, 16, 16], strides = [1, 1, 1]} : vector<2x22x16xf32> to vector<2x16x16xf32>
      %445 = vector.broadcast %442 : f32 to vector<2x16x16xf32>
      %446 = arith.mulf %445, %444 : vector<2x16x16xf32>
      %447 = arith.addf %441, %446 : vector<2x16x16xf32>
      %448 = vector.extract_strided_slice %391 {offsets = [0, 5, 0], sizes = [2, 16, 16], strides = [1, 1, 1]} : vector<2x22x16xf32> to vector<2x16x16xf32>
      %449 = vector.broadcast %443 : f32 to vector<2x16x16xf32>
      %450 = arith.mulf %449, %448 : vector<2x16x16xf32>
      %451 = arith.addf %447, %450 : vector<2x16x16xf32>
      %c47 = arith.constant 47 : index
      %452 = memref.load %arg3[%c47] : memref<98xf32, #tpu.memory_space<smem>>
      %c96 = arith.constant 96 : index
      %453 = memref.load %arg3[%c96] : memref<98xf32, #tpu.memory_space<smem>>
      %454 = vector.extract_strided_slice %390 {offsets = [0, 6, 0], sizes = [2, 16, 16], strides = [1, 1, 1]} : vector<2x22x16xf32> to vector<2x16x16xf32>
      %455 = vector.broadcast %452 : f32 to vector<2x16x16xf32>
      %456 = arith.mulf %455, %454 : vector<2x16x16xf32>
      %457 = arith.addf %451, %456 : vector<2x16x16xf32>
      %458 = vector.extract_strided_slice %391 {offsets = [0, 6, 0], sizes = [2, 16, 16], strides = [1, 1, 1]} : vector<2x22x16xf32> to vector<2x16x16xf32>
      %459 = vector.broadcast %453 : f32 to vector<2x16x16xf32>
      %460 = arith.mulf %459, %458 : vector<2x16x16xf32>
      %461 = arith.addf %457, %460 : vector<2x16x16xf32>
      %462 = vector.extract_strided_slice %26 {offsets = [0, 0, 6], sizes = [2, 22, 16], strides = [1, 1, 1]} : vector<2x22x22xf32> to vector<2x22x16xf32>
      %463 = vector.extract_strided_slice %28 {offsets = [0, 0, 6], sizes = [2, 22, 16], strides = [1, 1, 1]} : vector<2x22x22xf32> to vector<2x22x16xf32>
      %c6 = arith.constant 6 : index
      %464 = memref.load %arg3[%c6] : memref<98xf32, #tpu.memory_space<smem>>
      %c55 = arith.constant 55 : index
      %465 = memref.load %arg3[%c55] : memref<98xf32, #tpu.memory_space<smem>>
      %466 = vector.extract_strided_slice %462 {offsets = [0, 0, 0], sizes = [2, 16, 16], strides = [1, 1, 1]} : vector<2x22x16xf32> to vector<2x16x16xf32>
      %467 = vector.broadcast %464 : f32 to vector<2x16x16xf32>
      %468 = arith.mulf %467, %466 : vector<2x16x16xf32>
      %469 = arith.addf %461, %468 : vector<2x16x16xf32>
      %470 = vector.extract_strided_slice %463 {offsets = [0, 0, 0], sizes = [2, 16, 16], strides = [1, 1, 1]} : vector<2x22x16xf32> to vector<2x16x16xf32>
      %471 = vector.broadcast %465 : f32 to vector<2x16x16xf32>
      %472 = arith.mulf %471, %470 : vector<2x16x16xf32>
      %473 = arith.addf %469, %472 : vector<2x16x16xf32>
      %c13 = arith.constant 13 : index
      %474 = memref.load %arg3[%c13] : memref<98xf32, #tpu.memory_space<smem>>
      %c62 = arith.constant 62 : index
      %475 = memref.load %arg3[%c62] : memref<98xf32, #tpu.memory_space<smem>>
      %476 = vector.extract_strided_slice %462 {offsets = [0, 1, 0], sizes = [2, 16, 16], strides = [1, 1, 1]} : vector<2x22x16xf32> to vector<2x16x16xf32>
      %477 = vector.broadcast %474 : f32 to vector<2x16x16xf32>
      %478 = arith.mulf %477, %476 : vector<2x16x16xf32>
      %479 = arith.addf %473, %478 : vector<2x16x16xf32>
      %480 = vector.extract_strided_slice %463 {offsets = [0, 1, 0], sizes = [2, 16, 16], strides = [1, 1, 1]} : vector<2x22x16xf32> to vector<2x16x16xf32>
      %481 = vector.broadcast %475 : f32 to vector<2x16x16xf32>
      %482 = arith.mulf %481, %480 : vector<2x16x16xf32>
      %483 = arith.addf %479, %482 : vector<2x16x16xf32>
      %c20 = arith.constant 20 : index
      %484 = memref.load %arg3[%c20] : memref<98xf32, #tpu.memory_space<smem>>
      %c69 = arith.constant 69 : index
      %485 = memref.load %arg3[%c69] : memref<98xf32, #tpu.memory_space<smem>>
      %486 = vector.extract_strided_slice %462 {offsets = [0, 2, 0], sizes = [2, 16, 16], strides = [1, 1, 1]} : vector<2x22x16xf32> to vector<2x16x16xf32>
      %487 = vector.broadcast %484 : f32 to vector<2x16x16xf32>
      %488 = arith.mulf %487, %486 : vector<2x16x16xf32>
      %489 = arith.addf %483, %488 : vector<2x16x16xf32>
      %490 = vector.extract_strided_slice %463 {offsets = [0, 2, 0], sizes = [2, 16, 16], strides = [1, 1, 1]} : vector<2x22x16xf32> to vector<2x16x16xf32>
      %491 = vector.broadcast %485 : f32 to vector<2x16x16xf32>
      %492 = arith.mulf %491, %490 : vector<2x16x16xf32>
      %493 = arith.addf %489, %492 : vector<2x16x16xf32>
      %c27 = arith.constant 27 : index
      %494 = memref.load %arg3[%c27] : memref<98xf32, #tpu.memory_space<smem>>
      %c76 = arith.constant 76 : index
      %495 = memref.load %arg3[%c76] : memref<98xf32, #tpu.memory_space<smem>>
      %496 = vector.extract_strided_slice %462 {offsets = [0, 3, 0], sizes = [2, 16, 16], strides = [1, 1, 1]} : vector<2x22x16xf32> to vector<2x16x16xf32>
      %497 = vector.broadcast %494 : f32 to vector<2x16x16xf32>
      %498 = arith.mulf %497, %496 : vector<2x16x16xf32>
      %499 = arith.addf %493, %498 : vector<2x16x16xf32>
      %500 = vector.extract_strided_slice %463 {offsets = [0, 3, 0], sizes = [2, 16, 16], strides = [1, 1, 1]} : vector<2x22x16xf32> to vector<2x16x16xf32>
      %501 = vector.broadcast %495 : f32 to vector<2x16x16xf32>
      %502 = arith.mulf %501, %500 : vector<2x16x16xf32>
      %503 = arith.addf %499, %502 : vector<2x16x16xf32>
      %c34 = arith.constant 34 : index
      %504 = memref.load %arg3[%c34] : memref<98xf32, #tpu.memory_space<smem>>
      %c83 = arith.constant 83 : index
      %505 = memref.load %arg3[%c83] : memref<98xf32, #tpu.memory_space<smem>>
      %506 = vector.extract_strided_slice %462 {offsets = [0, 4, 0], sizes = [2, 16, 16], strides = [1, 1, 1]} : vector<2x22x16xf32> to vector<2x16x16xf32>
      %507 = vector.broadcast %504 : f32 to vector<2x16x16xf32>
      %508 = arith.mulf %507, %506 : vector<2x16x16xf32>
      %509 = arith.addf %503, %508 : vector<2x16x16xf32>
      %510 = vector.extract_strided_slice %463 {offsets = [0, 4, 0], sizes = [2, 16, 16], strides = [1, 1, 1]} : vector<2x22x16xf32> to vector<2x16x16xf32>
      %511 = vector.broadcast %505 : f32 to vector<2x16x16xf32>
      %512 = arith.mulf %511, %510 : vector<2x16x16xf32>
      %513 = arith.addf %509, %512 : vector<2x16x16xf32>
      %c41 = arith.constant 41 : index
      %514 = memref.load %arg3[%c41] : memref<98xf32, #tpu.memory_space<smem>>
      %c90 = arith.constant 90 : index
      %515 = memref.load %arg3[%c90] : memref<98xf32, #tpu.memory_space<smem>>
      %516 = vector.extract_strided_slice %462 {offsets = [0, 5, 0], sizes = [2, 16, 16], strides = [1, 1, 1]} : vector<2x22x16xf32> to vector<2x16x16xf32>
      %517 = vector.broadcast %514 : f32 to vector<2x16x16xf32>
      %518 = arith.mulf %517, %516 : vector<2x16x16xf32>
      %519 = arith.addf %513, %518 : vector<2x16x16xf32>
      %520 = vector.extract_strided_slice %463 {offsets = [0, 5, 0], sizes = [2, 16, 16], strides = [1, 1, 1]} : vector<2x22x16xf32> to vector<2x16x16xf32>
      %521 = vector.broadcast %515 : f32 to vector<2x16x16xf32>
      %522 = arith.mulf %521, %520 : vector<2x16x16xf32>
      %523 = arith.addf %519, %522 : vector<2x16x16xf32>
      %c48 = arith.constant 48 : index
      %524 = memref.load %arg3[%c48] : memref<98xf32, #tpu.memory_space<smem>>
      %c97 = arith.constant 97 : index
      %525 = memref.load %arg3[%c97] : memref<98xf32, #tpu.memory_space<smem>>
      %526 = vector.extract_strided_slice %462 {offsets = [0, 6, 0], sizes = [2, 16, 16], strides = [1, 1, 1]} : vector<2x22x16xf32> to vector<2x16x16xf32>
      %527 = vector.broadcast %524 : f32 to vector<2x16x16xf32>
      %528 = arith.mulf %527, %526 : vector<2x16x16xf32>
      %529 = arith.addf %523, %528 : vector<2x16x16xf32>
      %530 = vector.extract_strided_slice %463 {offsets = [0, 6, 0], sizes = [2, 16, 16], strides = [1, 1, 1]} : vector<2x22x16xf32> to vector<2x16x16xf32>
      %531 = vector.broadcast %525 : f32 to vector<2x16x16xf32>
      %532 = arith.mulf %531, %530 : vector<2x16x16xf32>
      %533 = arith.addf %529, %532 : vector<2x16x16xf32>
      %534 = arith.negf %533 : vector<2x16x16xf32>
      %535 = math.exp %534 : vector<2x16x16xf32>
      %cst_48 = arith.constant 1.000000e+00 : f32
      %536 = vector.broadcast %cst_48 : f32 to vector<2x16x16xf32>
      %537 = arith.addf %536, %535 : vector<2x16x16xf32>
      %538 = arith.divf %536, %537 : vector<2x16x16xf32>
      %c0_49 = arith.constant 0 : index
      %c0_50 = arith.constant 0 : index
      %c0_51 = arith.constant 0 : index
      %c0_52 = arith.constant 0 : index
      %539 = vector.load %arg4[%c0_49, %c0_50, %c0_51, %c0_52] : memref<2x1x16x16xf32, #tpu.memory_space<vmem>>, vector<2x1x16x16xf32>
      %540 = vector.shape_cast %539 : vector<2x1x16x16xf32> to vector<2x16x16xf32>
      %541 = vector.shape_cast %538 : vector<2x16x16xf32> to vector<2x1x16x16xf32>
      tpu.vector_store %arg4[%c0_49, %c0_50, %c0_51, %c0_52], %541 {strides = array<i32>} : memref<2x1x16x16xf32, #tpu.memory_space<vmem>>, vector<2x1x16x16xf32>,
    } else {
    }
    return
  }
  func.func @transform_0(%arg0: i32, %arg1: i32) -> (i32, i32, i32, i32) {
    %c0_i32 = arith.constant 0 : i32
    %c0_i32_0 = arith.constant 0 : i32
    %c0_i32_1 = arith.constant 0 : i32
    return %arg0, %arg1, %c0_i32, %c0_i32_0 : i32, i32, i32, i32
  }
  func.func @transform_1(%arg0: i32, %arg1: i32) -> i32 {
    %c0_i32 = arith.constant 0 : i32
    %c0_i32_0 = arith.constant 0 : i32
    return %c0_i32 : i32
  }
  func.func @transform_2(%arg0: i32, %arg1: i32) -> (i32, i32, i32, i32) {
    %c0_i32 = arith.constant 0 : i32
    %c0_i32_0 = arith.constant 0 : i32
    %c0_i32_1 = arith.constant 0 : i32
    %c0_i32_2 = arith.constant 0 : i32
    return %arg0, %c0_i32, %c0_i32_0, %c0_i32_1 : i32, i32, i32, i32
  }
}

</mosaic_0001>

<llo_original>
// kernel: tpu_custom_call.1
$region0: #{tpu_custom_call.1}
  #allocation0 [shape = 'u32[]', space=smem, size = 0x4, offset = 0x4, fixed_abs, tag = 'smem constant byte address 0x4 - core index']
  #allocation1 [shape = 'u32[144,128]{1,0:T(1,128)}', space=vmem, size = 0x12000, scoped, tag = 'internal scratch']
  #allocation2 [shape = 'f32[2,16,16]{2,1,0:T(8,128)}', space=vmem, size = 0x4000, scoped, tag = 'scratch operand']
  #allocation3 [shape = 'f32[2,16,16]{2,1,0:T(8,128)}', space=vmem, size = 0x4000, scoped, tag = 'scratch operand']
  #allocation4 [shape = 'f32[2,2,22,22]{3,2,1,0:T(8,128)}', space=vmem, size = 0xc000, scoped, tag = 'scratch operand']
  %s0 = inlined_call_operand.hbm [shape: f32[2,4,16,16], index: 0, kind: input, shape index: {}]
  %s1 = inlined_call_operand.vmem [shape: f32[98], index: 1, kind: input, shape index: {}]
  %s2 = inlined_call_operand.hbm [shape: f32[2,1,16,16], index: 2, kind: output, shape index: {}]
  %s3 = sld [smem:[#allocation0]]
  $region34: #{tpu_custom_call.1} parent=0
    _
  %s5 = ssub.s32 1, %s3
  %s6 = scalar_select 0, %s5, %s3
  $region1: #{tpu_custom_call.1} parent=0
    #allocation5 [shape = 'u8[65536]{0}', space=vmem, size = 0x10000, scoped, tag = 'input window, operand 0, single buffered']
    #allocation6 [shape = 's32[1]{0}', space=sflag, size = 0x4, scoped, tag = 'scoped memory for tpu_custom_call.1']
    #allocation7 [shape = 's32[1]{0}', space=sflag, size = 0x4, scoped, tag = 'scoped memory for tpu_custom_call.1']
    #allocation8 [shape = 's32[1]{0}', space=sflag, size = 0x4, scoped, tag = 'scoped memory for tpu_custom_call.1']
    #allocation9 [shape = 'u8[512]{0}', space=smem, size = 0x200, scoped, tag = 'input window, operand 1, single buffered']
    #allocation10 [shape = 'u8[16384]{0}', space=vmem, size = 0x4000, scoped, tag = 'output window, operand 0, single buffered']
    %7 = vsyncpa [#allocation6], 0
    %8 = vsyncpa [#allocation8], 0
    %9 = vsyncpa [#allocation7], 0
    // Predicated region
    $region2: #{tpu_custom_call.1} parent=1 // pred_check
      _
    $region3: #{tpu_custom_call.1} parent=1 // pred_check_branch
      %11 = sbr.rel (0) target = $region5
    $region4: #{tpu_custom_call.1} parent=1 // pred_region
      %s13 = ssub.s32 2048, 2048
      %14 = vsyncadd [#allocation6], %s13
      %s15 = sshll.u32 [#allocation5], 4
      %s16 = int_to_ptr.vmem [resolvable:$true] %s15
      %21 = dma.hbm_to_vmem [thread:$0]  %s0, 2048, %s16, [#allocation6], 128, 128, 8
    $region5: #{tpu_custom_call.1} parent=1 // pred_fallthru
      _
    // Predicated region
    $region6: #{tpu_custom_call.1} parent=1 // pred_check
      _
    $region7: #{tpu_custom_call.1} parent=1 // pred_check_branch
      %23 = sbr.rel (0) target = $region9
    $region8: #{tpu_custom_call.1} parent=1 // pred_region
      %s25 = ssub.s32 16, 16
      %26 = vsyncadd [#allocation8], %s25
      %s28 = sshll.u32 %s1, 4
      %s29 = int_to_ptr.vmem [resolvable:$true] %s28
      %31 = dma.vmem_to_smem %s29, 16, [#allocation9], [#allocation8]
    $region9: #{tpu_custom_call.1} parent=1 // pred_fallthru
      _
    // Predicated region
    $region10: #{tpu_custom_call.1} parent=1 // pred_check
      _
    $region11: #{tpu_custom_call.1} parent=1 // pred_check_branch
      %33 = sbr.rel (0) target = $region13
    $region12: #{tpu_custom_call.1} parent=1 // pred_region
      %34 = dma.done [#allocation6], 2048
    $region13: #{tpu_custom_call.1} parent=1 // pred_fallthru
      _
    // Predicated region
    $region14: #{tpu_custom_call.1} parent=1 // pred_check
      _
    $region15: #{tpu_custom_call.1} parent=1 // pred_check_branch
      %36 = sbr.rel (0) target = $region17
    $region16: #{tpu_custom_call.1} parent=1 // pred_region
      %37 = dma.done [#allocation8], 16
    $region17: #{tpu_custom_call.1} parent=1 // pred_fallthru
      _
    %38 = sfence
    %p39 = scmp.eq.s32.totalorder 0, 0
    // Predicated region
    $region18: #{tpu_custom_call.1} parent=1 // pred_check
      %p40 = pneg %p39
    $region19: #{tpu_custom_call.1} parent=1 // pred_check_branch
      %42 = sbr.rel (%p40) target = $region21
    $region20: #{tpu_custom_call.1} parent=1 // pred_region
      %vm43 = vcmask 130048
      %44 = vst.msk [vmem:[#allocation2] sm:$0xff] %vm43, 0.0
      %45 = vst.msk [vmem:[#allocation2 + $0x8] sm:$0xff] %vm43, 0.0
      %46 = vst.msk [vmem:[#allocation2 + $0x10] sm:$0xff] %vm43, 0.0
      %47 = vst.msk [vmem:[#allocation2 + $0x18] sm:$0xff] %vm43, 0.0
      %48 = vst.msk [vmem:[#allocation3] sm:$0xff] %vm43, -inf
      %49 = vst.msk [vmem:[#allocation3 + $0x8] sm:$0xff] %vm43, -inf
      %50 = vst.msk [vmem:[#allocation3 + $0x10] sm:$0xff] %vm43, -inf
      %51 = vst.msk [vmem:[#allocation3 + $0x18] sm:$0xff] %vm43, -inf
    $region21: #{tpu_custom_call.1} parent=1 // pred_fallthru
      _
    %v52 = vld [vmem:[#allocation2] sm:$0xff]
    %v53 = vld [vmem:[#allocation2 + $0x8] sm:$0xff]
    %v54 = vld [vmem:[#allocation2 + $0x10] sm:$0xff]
    %v55 = vld [vmem:[#allocation2 + $0x18] sm:$0xff]
    %v56 = vld [vmem:[#allocation3] sm:$0xff]
    %v57 = vld [vmem:[#allocation3 + $0x8] sm:$0xff]
    %v58 = vld [vmem:[#allocation3 + $0x10] sm:$0xff]
    %v59 = vld [vmem:[#allocation3 + $0x18] sm:$0xff]
    %v60 = vld [vmem:[#allocation5] sm:$0xff]
    %v61 = vld [vmem:[#allocation5 + $0x8] sm:$0xff]
    %v62 = vld [vmem:[#allocation5 + $0x10] sm:$0xff]
    %v63 = vld [vmem:[#allocation5 + $0x18] sm:$0xff]
    %v64 = vld [vmem:[#allocation5 + $0x20] sm:$0xff]
    %v65 = vld [vmem:[#allocation5 + $0x28] sm:$0xff]
    %v66 = vld [vmem:[#allocation5 + $0x30] sm:$0xff]
    %v67 = vld [vmem:[#allocation5 + $0x38] sm:$0xff]
    %v68 = vld [vmem:[#allocation5 + $0x40] sm:$0xff]
    %v69 = vld [vmem:[#allocation5 + $0x48] sm:$0xff]
    %v70 = vld [vmem:[#allocation5 + $0x50] sm:$0xff]
    %v71 = vld [vmem:[#allocation5 + $0x58] sm:$0xff]
    %v72 = vld [vmem:[#allocation5 + $0x60] sm:$0xff]
    %v73 = vld [vmem:[#allocation5 + $0x68] sm:$0xff]
    %v74 = vld [vmem:[#allocation5 + $0x70] sm:$0xff]
    %v75 = vld [vmem:[#allocation5 + $0x78] sm:$0xff]
    %vm76 = vcmask 130048
    %v77 = vsel %vm76, %v60, 0.0
    %v78 = vsel %vm76, %v62, 0.0
    %v79 = vadd.f32 %v77, %v78
    %v80 = vsel %vm76, %v64, 0.0
    %v81 = vadd.f32 %v79, %v80
    %v82 = vsel %vm76, %v66, 0.0
    %v83 = vadd.f32 %v81, %v82
    %v84 = vsel %vm76, %v61, 0.0
    %v85 = vsel %vm76, %v63, 0.0
    %v86 = vadd.f32 %v84, %v85
    %v87 = vsel %vm76, %v65, 0.0
    %v88 = vadd.f32 %v86, %v87
    %v89 = vsel %vm76, %v67, 0.0
    %v90 = vadd.f32 %v88, %v89
    %v91 = vsel %vm76, %v68, 0.0
    %v92 = vsel %vm76, %v70, 0.0
    %v93 = vadd.f32 %v91, %v92
    %v94 = vsel %vm76, %v72, 0.0
    %v95 = vadd.f32 %v93, %v94
    %v96 = vsel %vm76, %v74, 0.0
    %v97 = vadd.f32 %v95, %v96
    %v98 = vsel %vm76, %v69, 0.0
    %v99 = vsel %vm76, %v71, 0.0
    %v100 = vadd.f32 %v98, %v99
    %v101 = vsel %vm76, %v73, 0.0
    %v102 = vadd.f32 %v100, %v101
    %v103 = vsel %vm76, %v75, 0.0
    %v104 = vadd.f32 %v102, %v103
    %v105 = vadd.f32 %v52, %v83
    %v106 = vadd.f32 %v53, %v90
    %v107 = vadd.f32 %v54, %v97
    %v108 = vadd.f32 %v55, %v104
    %v109 = vsel %vm76, %v60, -inf
    %v110 = vsel %vm76, %v62, -inf
    %v111 = vmax.f32 %v109, %v110
    %v112 = vsel %vm76, %v64, -inf
    %v113 = vmax.f32 %v111, %v112
    %v114 = vsel %vm76, %v66, -inf
    %v115 = vmax.f32 %v113, %v114
    %v116 = vsel %vm76, %v61, -inf
    %v117 = vsel %vm76, %v63, -inf
    %v118 = vmax.f32 %v116, %v117
    %v119 = vsel %vm76, %v65, -inf
    %v120 = vmax.f32 %v118, %v119
    %v121 = vsel %vm76, %v67, -inf
    %v122 = vmax.f32 %v120, %v121
    %v123 = vsel %vm76, %v68, -inf
    %v124 = vsel %vm76, %v70, -inf
    %v125 = vmax.f32 %v123, %v124
    %v126 = vsel %vm76, %v72, -inf
    %v127 = vmax.f32 %v125, %v126
    %v128 = vsel %vm76, %v74, -inf
    %v129 = vmax.f32 %v127, %v128
    %v130 = vsel %vm76, %v69, -inf
    %v131 = vsel %vm76, %v71, -inf
    %v132 = vmax.f32 %v130, %v131
    %v133 = vsel %vm76, %v73, -inf
    %v134 = vmax.f32 %v132, %v133
    %v135 = vsel %vm76, %v75, -inf
    %v136 = vmax.f32 %v134, %v135
    %v137 = vmax.f32 %v56, %v115
    %v138 = vmax.f32 %v57, %v122
    %v139 = vmax.f32 %v58, %v129
    %v140 = vmax.f32 %v59, %v136
    %141 = vst.msk [vmem:[#allocation2] sm:$0xff] %vm76, %v105
    %142 = vst.msk [vmem:[#allocation2 + $0x8] sm:$0xff] %vm76, %v106
    %143 = vst.msk [vmem:[#allocation2 + $0x10] sm:$0xff] %vm76, %v107
    %144 = vst.msk [vmem:[#allocation2 + $0x18] sm:$0xff] %vm76, %v108
    %145 = vst.msk [vmem:[#allocation3] sm:$0xff] %vm76, %v137
    %146 = vst.msk [vmem:[#allocation3 + $0x8] sm:$0xff] %vm76, %v138
    %147 = vst.msk [vmem:[#allocation3 + $0x10] sm:$0xff] %vm76, %v139
    %148 = vst.msk [vmem:[#allocation3 + $0x18] sm:$0xff] %vm76, %v140
    // Predicated region
    $region22: #{tpu_custom_call.1} parent=1 // pred_check
      %p149 = pneg %p39
    $region23: #{tpu_custom_call.1} parent=1 // pred_check_branch
      %151 = sbr.rel (%p149) target = $region25
    $region24: #{tpu_custom_call.1} parent=1 // pred_region
      %vm152 = vcmask 179200
      %153 = vst.msk [vmem:[#allocation4] sm:$0xff] %vm152, 0.0
      %154 = vst.msk [vmem:[#allocation4 + $0x8] sm:$0xff] %vm152, 0.0
      %vm155 = vcmask 177152
      %156 = vst.msk [vmem:[#allocation4 + $0x10] sm:$0x3f] %vm155, 0.0
      %157 = vst.msk [vmem:[#allocation4 + $0x18] sm:$0xff] %vm152, 0.0
      %158 = vst.msk [vmem:[#allocation4 + $0x20] sm:$0xff] %vm152, 0.0
      %159 = vst.msk [vmem:[#allocation4 + $0x28] sm:$0x3f] %vm155, 0.0
      %160 = vst.msk [vmem:[#allocation4 + $0x30] sm:$0xff] %vm152, 0.0
      %161 = vst.msk [vmem:[#allocation4 + $0x38] sm:$0xff] %vm152, 0.0
      %162 = vst.msk [vmem:[#allocation4 + $0x40] sm:$0x3f] %vm155, 0.0
      %163 = vst.msk [vmem:[#allocation4 + $0x48] sm:$0xff] %vm152, 0.0
      %164 = vst.msk [vmem:[#allocation4 + $0x50] sm:$0xff] %vm152, 0.0
      %165 = vst.msk [vmem:[#allocation4 + $0x58] sm:$0x3f] %vm155, 0.0
      %v166 = vld [vmem:[#allocation2] sm:$0xff]
      %v167 = vld [vmem:[#allocation2 + $0x8] sm:$0xff]
      %v168 = vld [vmem:[#allocation2 + $0x10] sm:$0xff]
      %v169 = vld [vmem:[#allocation2 + $0x18] sm:$0xff]
      %174 = vrot.lane.b32.xlu0 %v166, 3
      %v175 = vpop.permute.xlu0 %174
      %176 = vrot.lane.b32.xlu0 %v167, 3
      %v177 = vpop.permute.xlu0 %176
      %178 = vrot.lane.b32.xlu0 %v168, 3
      %v179 = vpop.permute.xlu0 %178
      %180 = vrot.lane.b32.xlu0 %v169, 3
      %v181 = vpop.permute.xlu0 %180
      %vm186 = vcmask 154648
      %187 = vst.msk [vmem:[#allocation4 + $0x3] sm:$0xff] %vm186, %v175
      %188 = vst.msk [vmem:[#allocation4 + $0xb] sm:$0xff] %vm186, %v177
      %189 = vst.msk [vmem:[#allocation4 + $0x1b] sm:$0xff] %vm186, %v179
      %190 = vst.msk [vmem:[#allocation4 + $0x23] sm:$0xff] %vm186, %v181
      %v191 = vld [vmem:[#allocation3] sm:$0xff]
      %v192 = vld [vmem:[#allocation3 + $0x8] sm:$0xff]
      %v193 = vld [vmem:[#allocation3 + $0x10] sm:$0xff]
      %v194 = vld [vmem:[#allocation3 + $0x18] sm:$0xff]
      %199 = vrot.lane.b32.xlu0 %v191, 3
      %v200 = vpop.permute.xlu0 %199
      %201 = vrot.lane.b32.xlu0 %v192, 3
      %v202 = vpop.permute.xlu0 %201
      %203 = vrot.lane.b32.xlu0 %v193, 3
      %v204 = vpop.permute.xlu0 %203
      %205 = vrot.lane.b32.xlu0 %v194, 3
      %v206 = vpop.permute.xlu0 %205
      %s211 = scalar_lea.vmem [#allocation4], 48
      %212 = vst.msk [vmem:[%s211 + $0x3] sm:$0xff] %vm186, %v200
      %213 = vst.msk [vmem:[%s211 + $0xb] sm:$0xff] %vm186, %v202
      %214 = vst.msk [vmem:[%s211 + $0x1b] sm:$0xff] %vm186, %v204
      %215 = vst.msk [vmem:[%s211 + $0x23] sm:$0xff] %vm186, %v206
      %v216 = vld [vmem:[#allocation4] sm:$0xff]
      %v217 = vld [vmem:[#allocation4 + $0x8] sm:$0xff]
      %v218 = vld [vmem:[#allocation4 + $0x10] sm:$0x3f]
      %v219 = vld [vmem:[#allocation4 + $0x18] sm:$0xff]
      %v220 = vld [vmem:[#allocation4 + $0x20] sm:$0xff]
      %v221 = vld [vmem:[#allocation4 + $0x28] sm:$0x3f]
      %v222 = vld [vmem:[%s211] sm:$0xff]
      %v223 = vld [vmem:[%s211 + $0x8] sm:$0xff]
      %v224 = vld [vmem:[%s211 + $0x10] sm:$0x3f]
      %v225 = vld [vmem:[%s211 + $0x18] sm:$0xff]
      %v226 = vld [vmem:[%s211 + $0x20] sm:$0xff]
      %v227 = vld [vmem:[%s211 + $0x28] sm:$0x3f]
      %s228 = sld [smem:[#allocation9]]
      %s229 = sld [smem:[#allocation9 + $0x31]]
      %v230 = vstv %s228
      %v231 = vmul.f32 %v230, %v216
      %v232 = vmul.f32 %v230, %v217
      %v233 = vmul.f32 %v230, %v219
      %v234 = vmul.f32 %v230, %v220
      %v235 = vadd.f32 %v231, 0.0
      %v236 = vadd.f32 %v232, 0.0
      %v237 = vadd.f32 %v233, 0.0
      %v238 = vadd.f32 %v234, 0.0
      %v239 = vstv %s229
      %v240 = vmul.f32 %v239, %v222
      %v241 = vmul.f32 %v239, %v223
      %v242 = vmul.f32 %v239, %v225
      %v243 = vmul.f32 %v239, %v226
      %v244 = vadd.f32 %v235, %v240
      %v245 = vadd.f32 %v236, %v241
      %v246 = vadd.f32 %v237, %v242
      %v247 = vadd.f32 %v238, %v243
      %s248 = sld [smem:[#allocation9 + $0x7]]
      %s249 = sld [smem:[#allocation9 + $0x38]]
      %v250 = vstv %s248
      %v251 = vmul.f32 %v250, %v216
      %v252 = vmul.f32 %v250, %v217
      %v253 = vmul.f32 %v250, %v218
      %v254 = vmul.f32 %v250, %v219
      %v255 = vmul.f32 %v250, %v220
      %v256 = vmul.f32 %v250, %v221
      %vm263 = vcmask 1046528
      %v264 = vrot.slane %v251, 1
      %v265 = vrot.slane %v252, 1
      %v266 = vsel %vm263, %v264, %v265
      %v267 = vrot.slane %v253, 1
      %v268 = vsel %vm263, %v265, %v267
      %v269 = vrot.slane %v254, 1
      %v270 = vrot.slane %v255, 1
      %v271 = vsel %vm263, %v269, %v270
      %v272 = vrot.slane %v256, 1
      %v273 = vsel %vm263, %v270, %v272
      %v278 = vadd.f32 %v244, %v266
      %v279 = vadd.f32 %v245, %v268
      %v280 = vadd.f32 %v246, %v271
      %v281 = vadd.f32 %v247, %v273
      %v282 = vstv %s249
      %v283 = vmul.f32 %v282, %v222
      %v284 = vmul.f32 %v282, %v223
      %v285 = vmul.f32 %v282, %v224
      %v286 = vmul.f32 %v282, %v225
      %v287 = vmul.f32 %v282, %v226
      %v288 = vmul.f32 %v282, %v227
      %v295 = vrot.slane %v283, 1
      %v296 = vrot.slane %v284, 1
      %v297 = vsel %vm263, %v295, %v296
      %v298 = vrot.slane %v285, 1
      %v299 = vsel %vm263, %v296, %v298
      %v300 = vrot.slane %v286, 1
      %v301 = vrot.slane %v287, 1
      %v302 = vsel %vm263, %v300, %v301
      %v303 = vrot.slane %v288, 1
      %v304 = vsel %vm263, %v301, %v303
      %v309 = vadd.f32 %v278, %v297
      %v310 = vadd.f32 %v279, %v299
      %v311 = vadd.f32 %v280, %v302
      %v312 = vadd.f32 %v281, %v304
      %s313 = sld [smem:[#allocation9 + $0xe]]
      %s314 = sld [smem:[#allocation9 + $0x3f]]
      %v315 = vstv %s313
      %v316 = vmul.f32 %v315, %v216
      %v317 = vmul.f32 %v315, %v217
      %v318 = vmul.f32 %v315, %v218
      %v319 = vmul.f32 %v315, %v219
      %v320 = vmul.f32 %v315, %v220
      %v321 = vmul.f32 %v315, %v221
      %vm328 = vcmask 1045504
      %v329 = vrot.slane %v316, 2
      %v330 = vrot.slane %v317, 2
      %v331 = vsel %vm328, %v329, %v330
      %v332 = vrot.slane %v318, 2
      %v333 = vsel %vm328, %v330, %v332
      %v334 = vrot.slane %v319, 2
      %v335 = vrot.slane %v320, 2
      %v336 = vsel %vm328, %v334, %v335
      %v337 = vrot.slane %v321, 2
      %v338 = vsel %vm328, %v335, %v337
      %v343 = vadd.f32 %v309, %v331
      %v344 = vadd.f32 %v310, %v333
      %v345 = vadd.f32 %v311, %v336
      %v346 = vadd.f32 %v312, %v338
      %v347 = vstv %s314
      %v348 = vmul.f32 %v347, %v222
      %v349 = vmul.f32 %v347, %v223
      %v350 = vmul.f32 %v347, %v224
      %v351 = vmul.f32 %v347, %v225
      %v352 = vmul.f32 %v347, %v226
      %v353 = vmul.f32 %v347, %v227
      %v360 = vrot.slane %v348, 2
      %v361 = vrot.slane %v349, 2
      %v362 = vsel %vm328, %v360, %v361
      %v363 = vrot.slane %v350, 2
      %v364 = vsel %vm328, %v361, %v363
      %v365 = vrot.slane %v351, 2
      %v366 = vrot.slane %v352, 2
      %v367 = vsel %vm328, %v365, %v366
      %v368 = vrot.slane %v353, 2
      %v369 = vsel %vm328, %v366, %v368
      %v374 = vadd.f32 %v343, %v362
      %v375 = vadd.f32 %v344, %v364
      %v376 = vadd.f32 %v345, %v367
      %v377 = vadd.f32 %v346, %v369
      %s378 = sld [smem:[#allocation9 + $0x15]]
      %s379 = sld [smem:[#allocation9 + $0x46]]
      %v380 = vstv %s378
      %v381 = vmul.f32 %v380, %v216
      %v382 = vmul.f32 %v380, %v217
      %v383 = vmul.f32 %v380, %v218
      %v384 = vmul.f32 %v380, %v219
      %v385 = vmul.f32 %v380, %v220
      %v386 = vmul.f32 %v380, %v221
      %vm393 = vcmask 1044480
      %v394 = vrot.slane %v381, 3
      %v395 = vrot.slane %v382, 3
      %v396 = vsel %vm393, %v394, %v395
      %v397 = vrot.slane %v383, 3
      %v398 = vsel %vm393, %v395, %v397
      %v399 = vrot.slane %v384, 3
      %v400 = vrot.slane %v385, 3
      %v401 = vsel %vm393, %v399, %v400
      %v402 = vrot.slane %v386, 3
      %v403 = vsel %vm393, %v400, %v402
      %v408 = vadd.f32 %v374, %v396
      %v409 = vadd.f32 %v375, %v398
      %v410 = vadd.f32 %v376, %v401
      %v411 = vadd.f32 %v377, %v403
      %v412 = vstv %s379
      %v413 = vmul.f32 %v412, %v222
      %v414 = vmul.f32 %v412, %v223
      %v415 = vmul.f32 %v412, %v224
      %v416 = vmul.f32 %v412, %v225
      %v417 = vmul.f32 %v412, %v226
      %v418 = vmul.f32 %v412, %v227
      %v425 = vrot.slane %v413, 3
      %v426 = vrot.slane %v414, 3
      %v427 = vsel %vm393, %v425, %v426
      %v428 = vrot.slane %v415, 3
      %v429 = vsel %vm393, %v426, %v428
      %v430 = vrot.slane %v416, 3
      %v431 = vrot.slane %v417, 3
      %v432 = vsel %vm393, %v430, %v431
      %v433 = vrot.slane %v418, 3
      %v434 = vsel %vm393, %v431, %v433
      %v439 = vadd.f32 %v408, %v427
      %v440 = vadd.f32 %v409, %v429
      %v441 = vadd.f32 %v410, %v432
      %v442 = vadd.f32 %v411, %v434
      %s443 = sld [smem:[#allocation9 + $0x1c]]
      %s444 = sld [smem:[#allocation9 + $0x4d]]
      %v445 = vstv %s443
      %v446 = vmul.f32 %v445, %v216
      %v447 = vmul.f32 %v445, %v217
      %v448 = vmul.f32 %v445, %v218
      %v449 = vmul.f32 %v445, %v219
      %v450 = vmul.f32 %v445, %v220
      %v451 = vmul.f32 %v445, %v221
      %vm458 = vcmask 1043456
      %v459 = vrot.slane %v446, 4
      %v460 = vrot.slane %v447, 4
      %v461 = vsel %vm458, %v459, %v460
      %v462 = vrot.slane %v448, 4
      %v463 = vsel %vm458, %v460, %v462
      %v464 = vrot.slane %v449, 4
      %v465 = vrot.slane %v450, 4
      %v466 = vsel %vm458, %v464, %v465
      %v467 = vrot.slane %v451, 4
      %v468 = vsel %vm458, %v465, %v467
      %v473 = vadd.f32 %v439, %v461
      %v474 = vadd.f32 %v440, %v463
      %v475 = vadd.f32 %v441, %v466
      %v476 = vadd.f32 %v442, %v468
      %v477 = vstv %s444
      %v478 = vmul.f32 %v477, %v222
      %v479 = vmul.f32 %v477, %v223
      %v480 = vmul.f32 %v477, %v224
      %v481 = vmul.f32 %v477, %v225
      %v482 = vmul.f32 %v477, %v226
      %v483 = vmul.f32 %v477, %v227
      %v490 = vrot.slane %v478, 4
      %v491 = vrot.slane %v479, 4
      %v492 = vsel %vm458, %v490, %v491
      %v493 = vrot.slane %v480, 4
      %v494 = vsel %vm458, %v491, %v493
      %v495 = vrot.slane %v481, 4
      %v496 = vrot.slane %v482, 4
      %v497 = vsel %vm458, %v495, %v496
      %v498 = vrot.slane %v483, 4
      %v499 = vsel %vm458, %v496, %v498
      %v504 = vadd.f32 %v473, %v492
      %v505 = vadd.f32 %v474, %v494
      %v506 = vadd.f32 %v475, %v497
      %v507 = vadd.f32 %v476, %v499
      %s508 = sld [smem:[#allocation9 + $0x23]]
      %s509 = sld [smem:[#allocation9 + $0x54]]
      %v510 = vstv %s508
      %v511 = vmul.f32 %v510, %v216
      %v512 = vmul.f32 %v510, %v217
      %v513 = vmul.f32 %v510, %v218
      %v514 = vmul.f32 %v510, %v219
      %v515 = vmul.f32 %v510, %v220
      %v516 = vmul.f32 %v510, %v221
      %vm523 = vcmask 1042432
      %v524 = vrot.slane %v511, 5
      %v525 = vrot.slane %v512, 5
      %v526 = vsel %vm523, %v524, %v525
      %v527 = vrot.slane %v513, 5
      %v528 = vsel %vm523, %v525, %v527
      %v529 = vrot.slane %v514, 5
      %v530 = vrot.slane %v515, 5
      %v531 = vsel %vm523, %v529, %v530
      %v532 = vrot.slane %v516, 5
      %v533 = vsel %vm523, %v530, %v532
      %v538 = vadd.f32 %v504, %v526
      %v539 = vadd.f32 %v505, %v528
      %v540 = vadd.f32 %v506, %v531
      %v541 = vadd.f32 %v507, %v533
      %v542 = vstv %s509
      %v543 = vmul.f32 %v542, %v222
      %v544 = vmul.f32 %v542, %v223
      %v545 = vmul.f32 %v542, %v224
      %v546 = vmul.f32 %v542, %v225
      %v547 = vmul.f32 %v542, %v226
      %v548 = vmul.f32 %v542, %v227
      %v555 = vrot.slane %v543, 5
      %v556 = vrot.slane %v544, 5
      %v557 = vsel %vm523, %v555, %v556
      %v558 = vrot.slane %v545, 5
      %v559 = vsel %vm523, %v556, %v558
      %v560 = vrot.slane %v546, 5
      %v561 = vrot.slane %v547, 5
      %v562 = vsel %vm523, %v560, %v561
      %v563 = vrot.slane %v548, 5
      %v564 = vsel %vm523, %v561, %v563
      %v569 = vadd.f32 %v538, %v557
      %v570 = vadd.f32 %v539, %v559
      %v571 = vadd.f32 %v540, %v562
      %v572 = vadd.f32 %v541, %v564
      %s573 = sld [smem:[#allocation9 + $0x2a]]
      %s574 = sld [smem:[#allocation9 + $0x5b]]
      %v575 = vstv %s573
      %v576 = vmul.f32 %v575, %v216
      %v577 = vmul.f32 %v575, %v217
      %v578 = vmul.f32 %v575, %v218
      %v579 = vmul.f32 %v575, %v219
      %v580 = vmul.f32 %v575, %v220
      %v581 = vmul.f32 %v575, %v221
      %vm588 = vcmask 1041408
      %v589 = vrot.slane %v576, 6
      %v590 = vrot.slane %v577, 6
      %v591 = vsel %vm588, %v589, %v590
      %v592 = vrot.slane %v578, 6
      %v593 = vsel %vm588, %v590, %v592
      %v594 = vrot.slane %v579, 6
      %v595 = vrot.slane %v580, 6
      %v596 = vsel %vm588, %v594, %v595
      %v597 = vrot.slane %v581, 6
      %v598 = vsel %vm588, %v595, %v597
      %v603 = vadd.f32 %v569, %v591
      %v604 = vadd.f32 %v570, %v593
      %v605 = vadd.f32 %v571, %v596
      %v606 = vadd.f32 %v572, %v598
      %v607 = vstv %s574
      %v608 = vmul.f32 %v607, %v222
      %v609 = vmul.f32 %v607, %v223
      %v610 = vmul.f32 %v607, %v224
      %v611 = vmul.f32 %v607, %v225
      %v612 = vmul.f32 %v607, %v226
      %v613 = vmul.f32 %v607, %v227
      %v620 = vrot.slane %v608, 6
      %v621 = vrot.slane %v609, 6
      %v622 = vsel %vm588, %v620, %v621
      %v623 = vrot.slane %v610, 6
      %v624 = vsel %vm588, %v621, %v623
      %v625 = vrot.slane %v611, 6
      %v626 = vrot.slane %v612, 6
      %v627 = vsel %vm588, %v625, %v626
      %v628 = vrot.slane %v613, 6
      %v629 = vsel %vm588, %v626, %v628
      %v634 = vadd.f32 %v603, %v622
      %v635 = vadd.f32 %v604, %v624
      %v636 = vadd.f32 %v605, %v627
      %v637 = vadd.f32 %v606, %v629
      %s638 = sld [smem:[#allocation9 + $0x1]]
      %s639 = sld [smem:[#allocation9 + $0x32]]
      %v640 = vstv %s638
      %v641 = vmul.f32 %v640, %v216
      %v642 = vmul.f32 %v640, %v217
      %v643 = vmul.f32 %v640, %v219
      %v644 = vmul.f32 %v640, %v220
      %649 = vrot.lane.b32.xlu0 %v641, 127
      %v650 = vpop.permute.xlu0 %649
      %651 = vrot.lane.b32.xlu0 %v642, 127
      %v652 = vpop.permute.xlu0 %651
      %653 = vrot.lane.b32.xlu0 %v643, 127
      %v654 = vpop.permute.xlu0 %653
      %655 = vrot.lane.b32.xlu0 %v644, 127
      %v656 = vpop.permute.xlu0 %655
      %v661 = vadd.f32 %v634, %v650
      %v662 = vadd.f32 %v635, %v652
      %v663 = vadd.f32 %v636, %v654
      %v664 = vadd.f32 %v637, %v656
      %v665 = vstv %s639
      %v666 = vmul.f32 %v665, %v222
      %v667 = vmul.f32 %v665, %v223
      %v668 = vmul.f32 %v665, %v225
      %v669 = vmul.f32 %v665, %v226
      %674 = vrot.lane.b32.xlu0 %v666, 127
      %v675 = vpop.permute.xlu0 %674
      %676 = vrot.lane.b32.xlu0 %v667, 127
      %v677 = vpop.permute.xlu0 %676
      %678 = vrot.lane.b32.xlu0 %v668, 127
      %v679 = vpop.permute.xlu0 %678
      %680 = vrot.lane.b32.xlu0 %v669, 127
      %v681 = vpop.permute.xlu0 %680
      %v686 = vadd.f32 %v661, %v675
      %v687 = vadd.f32 %v662, %v677
      %v688 = vadd.f32 %v663, %v679
      %v689 = vadd.f32 %v664, %v681
      %s690 = sld [smem:[#allocation9 + $0x8]]
      %s691 = sld [smem:[#allocation9 + $0x39]]
      %v692 = vstv %s690
      %v693 = vmul.f32 %v692, %v216
      %v694 = vmul.f32 %v692, %v217
      %v695 = vmul.f32 %v692, %v218
      %v696 = vmul.f32 %v692, %v219
      %v697 = vmul.f32 %v692, %v220
      %v698 = vmul.f32 %v692, %v221
      %v705 = vrot.slane %v693, 1
      %v706 = vrot.slane %v694, 1
      %v707 = vsel %vm263, %v705, %v706
      %v708 = vrot.slane %v695, 1
      %v709 = vsel %vm263, %v706, %v708
      %v710 = vrot.slane %v696, 1
      %v711 = vrot.slane %v697, 1
      %v712 = vsel %vm263, %v710, %v711
      %v713 = vrot.slane %v698, 1
      %v714 = vsel %vm263, %v711, %v713
      %715 = vrot.lane.b32.xlu0 %v707, 127
      %v716 = vpop.permute.xlu0 %715
      %717 = vrot.lane.b32.xlu0 %v709, 127
      %v718 = vpop.permute.xlu0 %717
      %719 = vrot.lane.b32.xlu0 %v712, 127
      %v720 = vpop.permute.xlu0 %719
      %721 = vrot.lane.b32.xlu0 %v714, 127
      %v722 = vpop.permute.xlu0 %721
      %v727 = vadd.f32 %v686, %v716
      %v728 = vadd.f32 %v687, %v718
      %v729 = vadd.f32 %v688, %v720
      %v730 = vadd.f32 %v689, %v722
      %v731 = vstv %s691
      %v732 = vmul.f32 %v731, %v222
      %v733 = vmul.f32 %v731, %v223
      %v734 = vmul.f32 %v731, %v224
      %v735 = vmul.f32 %v731, %v225
      %v736 = vmul.f32 %v731, %v226
      %v737 = vmul.f32 %v731, %v227
      %v744 = vrot.slane %v732, 1
      %v745 = vrot.slane %v733, 1
      %v746 = vsel %vm263, %v744, %v745
      %v747 = vrot.slane %v734, 1
      %v748 = vsel %vm263, %v745, %v747
      %v749 = vrot.slane %v735, 1
      %v750 = vrot.slane %v736, 1
      %v751 = vsel %vm263, %v749, %v750
      %v752 = vrot.slane %v737, 1
      %v753 = vsel %vm263, %v750, %v752
      %754 = vrot.lane.b32.xlu0 %v746, 127
      %v755 = vpop.permute.xlu0 %754
      %756 = vrot.lane.b32.xlu0 %v748, 127
      %v757 = vpop.permute.xlu0 %756
      %758 = vrot.lane.b32.xlu0 %v751, 127
      %v759 = vpop.permute.xlu0 %758
      %760 = vrot.lane.b32.xlu0 %v753, 127
      %v761 = vpop.permute.xlu0 %760
      %v766 = vadd.f32 %v727, %v755
      %v767 = vadd.f32 %v728, %v757
      %v768 = vadd.f32 %v729, %v759
      %v769 = vadd.f32 %v730, %v761
      %s770 = sld [smem:[#allocation9 + $0xf]]
      %s771 = sld [smem:[#allocation9 + $0x40]]
      %v772 = vstv %s770
      %v773 = vmul.f32 %v772, %v216
      %v774 = vmul.f32 %v772, %v217
      %v775 = vmul.f32 %v772, %v218
      %v776 = vmul.f32 %v772, %v219
      %v777 = vmul.f32 %v772, %v220
      %v778 = vmul.f32 %v772, %v221
      %v785 = vrot.slane %v773, 2
      %v786 = vrot.slane %v774, 2
      %v787 = vsel %vm328, %v785, %v786
      %v788 = vrot.slane %v775, 2
      %v789 = vsel %vm328, %v786, %v788
      %v790 = vrot.slane %v776, 2
      %v791 = vrot.slane %v777, 2
      %v792 = vsel %vm328, %v790, %v791
      %v793 = vrot.slane %v778, 2
      %v794 = vsel %vm328, %v791, %v793
      %795 = vrot.lane.b32.xlu0 %v787, 127
      %v796 = vpop.permute.xlu0 %795
      %797 = vrot.lane.b32.xlu0 %v789, 127
      %v798 = vpop.permute.xlu0 %797
      %799 = vrot.lane.b32.xlu0 %v792, 127
      %v800 = vpop.permute.xlu0 %799
      %801 = vrot.lane.b32.xlu0 %v794, 127
      %v802 = vpop.permute.xlu0 %801
      %v807 = vadd.f32 %v766, %v796
      %v808 = vadd.f32 %v767, %v798
      %v809 = vadd.f32 %v768, %v800
      %v810 = vadd.f32 %v769, %v802
      %v811 = vstv %s771
      %v812 = vmul.f32 %v811, %v222
      %v813 = vmul.f32 %v811, %v223
      %v814 = vmul.f32 %v811, %v224
      %v815 = vmul.f32 %v811, %v225
      %v816 = vmul.f32 %v811, %v226
      %v817 = vmul.f32 %v811, %v227
      %v824 = vrot.slane %v812, 2
      %v825 = vrot.slane %v813, 2
      %v826 = vsel %vm328, %v824, %v825
      %v827 = vrot.slane %v814, 2
      %v828 = vsel %vm328, %v825, %v827
      %v829 = vrot.slane %v815, 2
      %v830 = vrot.slane %v816, 2
      %v831 = vsel %vm328, %v829, %v830
      %v832 = vrot.slane %v817, 2
      %v833 = vsel %vm328, %v830, %v832
      %834 = vrot.lane.b32.xlu0 %v826, 127
      %v835 = vpop.permute.xlu0 %834
      %836 = vrot.lane.b32.xlu0 %v828, 127
      %v837 = vpop.permute.xlu0 %836
      %838 = vrot.lane.b32.xlu0 %v831, 127
      %v839 = vpop.permute.xlu0 %838
      %840 = vrot.lane.b32.xlu0 %v833, 127
      %v841 = vpop.permute.xlu0 %840
      %v846 = vadd.f32 %v807, %v835
      %v847 = vadd.f32 %v808, %v837
      %v848 = vadd.f32 %v809, %v839
      %v849 = vadd.f32 %v810, %v841
      %s850 = sld [smem:[#allocation9 + $0x16]]
      %s851 = sld [smem:[#allocation9 + $0x47]]
      %v852 = vstv %s850
      %v853 = vmul.f32 %v852, %v216
      %v854 = vmul.f32 %v852, %v217
      %v855 = vmul.f32 %v852, %v218
      %v856 = vmul.f32 %v852, %v219
      %v857 = vmul.f32 %v852, %v220
      %v858 = vmul.f32 %v852, %v221
      %v865 = vrot.slane %v853, 3
      %v866 = vrot.slane %v854, 3
      %v867 = vsel %vm393, %v865, %v866
      %v868 = vrot.slane %v855, 3
      %v869 = vsel %vm393, %v866, %v868
      %v870 = vrot.slane %v856, 3
      %v871 = vrot.slane %v857, 3
      %v872 = vsel %vm393, %v870, %v871
      %v873 = vrot.slane %v858, 3
      %v874 = vsel %vm393, %v871, %v873
      %875 = vrot.lane.b32.xlu0 %v867, 127
      %v876 = vpop.permute.xlu0 %875
      %877 = vrot.lane.b32.xlu0 %v869, 127
      %v878 = vpop.permute.xlu0 %877
      %879 = vrot.lane.b32.xlu0 %v872, 127
      %v880 = vpop.permute.xlu0 %879
      %881 = vrot.lane.b32.xlu0 %v874, 127
      %v882 = vpop.permute.xlu0 %881
      %v887 = vadd.f32 %v846, %v876
      %v888 = vadd.f32 %v847, %v878
      %v889 = vadd.f32 %v848, %v880
      %v890 = vadd.f32 %v849, %v882
      %v891 = vstv %s851
      %v892 = vmul.f32 %v891, %v222
      %v893 = vmul.f32 %v891, %v223
      %v894 = vmul.f32 %v891, %v224
      %v895 = vmul.f32 %v891, %v225
      %v896 = vmul.f32 %v891, %v226
      %v897 = vmul.f32 %v891, %v227
      %v904 = vrot.slane %v892, 3
      %v905 = vrot.slane %v893, 3
      %v906 = vsel %vm393, %v904, %v905
      %v907 = vrot.slane %v894, 3
      %v908 = vsel %vm393, %v905, %v907
      %v909 = vrot.slane %v895, 3
      %v910 = vrot.slane %v896, 3
      %v911 = vsel %vm393, %v909, %v910
      %v912 = vrot.slane %v897, 3
      %v913 = vsel %vm393, %v910, %v912
      %914 = vrot.lane.b32.xlu0 %v906, 127
      %v915 = vpop.permute.xlu0 %914
      %916 = vrot.lane.b32.xlu0 %v908, 127
      %v917 = vpop.permute.xlu0 %916
      %918 = vrot.lane.b32.xlu0 %v911, 127
      %v919 = vpop.permute.xlu0 %918
      %920 = vrot.lane.b32.xlu0 %v913, 127
      %v921 = vpop.permute.xlu0 %920
      %v926 = vadd.f32 %v887, %v915
      %v927 = vadd.f32 %v888, %v917
      %v928 = vadd.f32 %v889, %v919
      %v929 = vadd.f32 %v890, %v921
      %s930 = sld [smem:[#allocation9 + $0x1d]]
      %s931 = sld [smem:[#allocation9 + $0x4e]]
      %v932 = vstv %s930
      %v933 = vmul.f32 %v932, %v216
      %v934 = vmul.f32 %v932, %v217
      %v935 = vmul.f32 %v932, %v218
      %v936 = vmul.f32 %v932, %v219
      %v937 = vmul.f32 %v932, %v220
      %v938 = vmul.f32 %v932, %v221
      %v945 = vrot.slane %v933, 4
      %v946 = vrot.slane %v934, 4
      %v947 = vsel %vm458, %v945, %v946
      %v948 = vrot.slane %v935, 4
      %v949 = vsel %vm458, %v946, %v948
      %v950 = vrot.slane %v936, 4
      %v951 = vrot.slane %v937, 4
      %v952 = vsel %vm458, %v950, %v951
      %v953 = vrot.slane %v938, 4
      %v954 = vsel %vm458, %v951, %v953
      %955 = vrot.lane.b32.xlu0 %v947, 127
      %v956 = vpop.permute.xlu0 %955
      %957 = vrot.lane.b32.xlu0 %v949, 127
      %v958 = vpop.permute.xlu0 %957
      %959 = vrot.lane.b32.xlu0 %v952, 127
      %v960 = vpop.permute.xlu0 %959
      %961 = vrot.lane.b32.xlu0 %v954, 127
      %v962 = vpop.permute.xlu0 %961
      %v967 = vadd.f32 %v926, %v956
      %v968 = vadd.f32 %v927, %v958
      %v969 = vadd.f32 %v928, %v960
      %v970 = vadd.f32 %v929, %v962
      %v971 = vstv %s931
      %v972 = vmul.f32 %v971, %v222
      %v973 = vmul.f32 %v971, %v223
      %v974 = vmul.f32 %v971, %v224
      %v975 = vmul.f32 %v971, %v225
      %v976 = vmul.f32 %v971, %v226
      %v977 = vmul.f32 %v971, %v227
      %v984 = vrot.slane %v972, 4
      %v985 = vrot.slane %v973, 4
      %v986 = vsel %vm458, %v984, %v985
      %v987 = vrot.slane %v974, 4
      %v988 = vsel %vm458, %v985, %v987
      %v989 = vrot.slane %v975, 4
      %v990 = vrot.slane %v976, 4
      %v991 = vsel %vm458, %v989, %v990
      %v992 = vrot.slane %v977, 4
      %v993 = vsel %vm458, %v990, %v992
      %994 = vrot.lane.b32.xlu0 %v986, 127
      %v995 = vpop.permute.xlu0 %994
      %996 = vrot.lane.b32.xlu0 %v988, 127
      %v997 = vpop.permute.xlu0 %996
      %998 = vrot.lane.b32.xlu0 %v991, 127
      %v999 = vpop.permute.xlu0 %998
      %1000 = vrot.lane.b32.xlu0 %v993, 127
      %v1001 = vpop.permute.xlu0 %1000
      %v1006 = vadd.f32 %v967, %v995
      %v1007 = vadd.f32 %v968, %v997
      %v1008 = vadd.f32 %v969, %v999
      %v1009 = vadd.f32 %v970, %v1001
      %s1010 = sld [smem:[#allocation9 + $0x24]]
      %s1011 = sld [smem:[#allocation9 + $0x55]]
      %v1012 = vstv %s1010
      %v1013 = vmul.f32 %v1012, %v216
      %v1014 = vmul.f32 %v1012, %v217
      %v1015 = vmul.f32 %v1012, %v218
      %v1016 = vmul.f32 %v1012, %v219
      %v1017 = vmul.f32 %v1012, %v220
      %v1018 = vmul.f32 %v1012, %v221
      %v1025 = vrot.slane %v1013, 5
      %v1026 = vrot.slane %v1014, 5
      %v1027 = vsel %vm523, %v1025, %v1026
      %v1028 = vrot.slane %v1015, 5
      %v1029 = vsel %vm523, %v1026, %v1028
      %v1030 = vrot.slane %v1016, 5
      %v1031 = vrot.slane %v1017, 5
      %v1032 = vsel %vm523, %v1030, %v1031
      %v1033 = vrot.slane %v1018, 5
      %v1034 = vsel %vm523, %v1031, %v1033
      %1035 = vrot.lane.b32.xlu0 %v1027, 127
      %v1036 = vpop.permute.xlu0 %1035
      %1037 = vrot.lane.b32.xlu0 %v1029, 127
      %v1038 = vpop.permute.xlu0 %1037
      %1039 = vrot.lane.b32.xlu0 %v1032, 127
      %v1040 = vpop.permute.xlu0 %1039
      %1041 = vrot.lane.b32.xlu0 %v1034, 127
      %v1042 = vpop.permute.xlu0 %1041
      %v1047 = vadd.f32 %v1006, %v1036
      %v1048 = vadd.f32 %v1007, %v1038
      %v1049 = vadd.f32 %v1008, %v1040
      %v1050 = vadd.f32 %v1009, %v1042
      %v1051 = vstv %s1011
      %v1052 = vmul.f32 %v1051, %v222
      %v1053 = vmul.f32 %v1051, %v223
      %v1054 = vmul.f32 %v1051, %v224
      %v1055 = vmul.f32 %v1051, %v225
      %v1056 = vmul.f32 %v1051, %v226
      %v1057 = vmul.f32 %v1051, %v227
      %v1064 = vrot.slane %v1052, 5
      %v1065 = vrot.slane %v1053, 5
      %v1066 = vsel %vm523, %v1064, %v1065
      %v1067 = vrot.slane %v1054, 5
      %v1068 = vsel %vm523, %v1065, %v1067
      %v1069 = vrot.slane %v1055, 5
      %v1070 = vrot.slane %v1056, 5
      %v1071 = vsel %vm523, %v1069, %v1070
      %v1072 = vrot.slane %v1057, 5
      %v1073 = vsel %vm523, %v1070, %v1072
      %1074 = vrot.lane.b32.xlu0 %v1066, 127
      %v1075 = vpop.permute.xlu0 %1074
      %1076 = vrot.lane.b32.xlu0 %v1068, 127
      %v1077 = vpop.permute.xlu0 %1076
      %1078 = vrot.lane.b32.xlu0 %v1071, 127
      %v1079 = vpop.permute.xlu0 %1078
      %1080 = vrot.lane.b32.xlu0 %v1073, 127
      %v1081 = vpop.permute.xlu0 %1080
      %v1086 = vadd.f32 %v1047, %v1075
      %v1087 = vadd.f32 %v1048, %v1077
      %v1088 = vadd.f32 %v1049, %v1079
      %v1089 = vadd.f32 %v1050, %v1081
      %s1090 = sld [smem:[#allocation9 + $0x2b]]
      %s1091 = sld [smem:[#allocation9 + $0x5c]]
      %v1092 = vstv %s1090
      %v1093 = vmul.f32 %v1092, %v216
      %v1094 = vmul.f32 %v1092, %v217
      %v1095 = vmul.f32 %v1092, %v218
      %v1096 = vmul.f32 %v1092, %v219
      %v1097 = vmul.f32 %v1092, %v220
      %v1098 = vmul.f32 %v1092, %v221
      %v1105 = vrot.slane %v1093, 6
      %v1106 = vrot.slane %v1094, 6
      %v1107 = vsel %vm588, %v1105, %v1106
      %v1108 = vrot.slane %v1095, 6
      %v1109 = vsel %vm588, %v1106, %v1108
      %v1110 = vrot.slane %v1096, 6
      %v1111 = vrot.slane %v1097, 6
      %v1112 = vsel %vm588, %v1110, %v1111
      %v1113 = vrot.slane %v1098, 6
      %v1114 = vsel %vm588, %v1111, %v1113
      %1115 = vrot.lane.b32.xlu0 %v1107, 127
      %v1116 = vpop.permute.xlu0 %1115
      %1117 = vrot.lane.b32.xlu0 %v1109, 127
      %v1118 = vpop.permute.xlu0 %1117
      %1119 = vrot.lane.b32.xlu0 %v1112, 127
      %v1120 = vpop.permute.xlu0 %1119
      %1121 = vrot.lane.b32.xlu0 %v1114, 127
      %v1122 = vpop.permute.xlu0 %1121
      %v1127 = vadd.f32 %v1086, %v1116
      %v1128 = vadd.f32 %v1087, %v1118
      %v1129 = vadd.f32 %v1088, %v1120
      %v1130 = vadd.f32 %v1089, %v1122
      %v1131 = vstv %s1091
      %v1132 = vmul.f32 %v1131, %v222
      %v1133 = vmul.f32 %v1131, %v223
      %v1134 = vmul.f32 %v1131, %v224
      %v1135 = vmul.f32 %v1131, %v225
      %v1136 = vmul.f32 %v1131, %v226
      %v1137 = vmul.f32 %v1131, %v227
      %v1144 = vrot.slane %v1132, 6
      %v1145 = vrot.slane %v1133, 6
      %v1146 = vsel %vm588, %v1144, %v1145
      %v1147 = vrot.slane %v1134, 6
      %v1148 = vsel %vm588, %v1145, %v1147
      %v1149 = vrot.slane %v1135, 6
      %v1150 = vrot.slane %v1136, 6
      %v1151 = vsel %vm588, %v1149, %v1150
      %v1152 = vrot.slane %v1137, 6
      %v1153 = vsel %vm588, %v1150, %v1152
      %1154 = vrot.lane.b32.xlu0 %v1146, 127
      %v1155 = vpop.permute.xlu0 %1154
      %1156 = vrot.lane.b32.xlu0 %v1148, 127
      %v1157 = vpop.permute.xlu0 %1156
      %1158 = vrot.lane.b32.xlu0 %v1151, 127
      %v1159 = vpop.permute.xlu0 %1158
      %1160 = vrot.lane.b32.xlu0 %v1153, 127
      %v1161 = vpop.permute.xlu0 %1160
      %v1166 = vadd.f32 %v1127, %v1155
      %v1167 = vadd.f32 %v1128, %v1157
      %v1168 = vadd.f32 %v1129, %v1159
      %v1169 = vadd.f32 %v1130, %v1161
      %s1170 = sld [smem:[#allocation9 + $0x2]]
      %s1171 = sld [smem:[#allocation9 + $0x33]]
      %v1172 = vstv %s1170
      %v1173 = vmul.f32 %v1172, %v216
      %v1174 = vmul.f32 %v1172, %v217
      %v1175 = vmul.f32 %v1172, %v219
      %v1176 = vmul.f32 %v1172, %v220
      %1181 = vrot.lane.b32.xlu0 %v1173, 126
      %v1182 = vpop.permute.xlu0 %1181
      %1183 = vrot.lane.b32.xlu0 %v1174, 126
      %v1184 = vpop.permute.xlu0 %1183
      %1185 = vrot.lane.b32.xlu0 %v1175, 126
      %v1186 = vpop.permute.xlu0 %1185
      %1187 = vrot.lane.b32.xlu0 %v1176, 126
      %v1188 = vpop.permute.xlu0 %1187
      %v1193 = vadd.f32 %v1166, %v1182
      %v1194 = vadd.f32 %v1167, %v1184
      %v1195 = vadd.f32 %v1168, %v1186
      %v1196 = vadd.f32 %v1169, %v1188
      %v1197 = vstv %s1171
      %v1198 = vmul.f32 %v1197, %v222
      %v1199 = vmul.f32 %v1197, %v223
      %v1200 = vmul.f32 %v1197, %v225
      %v1201 = vmul.f32 %v1197, %v226
      %1206 = vrot.lane.b32.xlu0 %v1198, 126
      %v1207 = vpop.permute.xlu0 %1206
      %1208 = vrot.lane.b32.xlu0 %v1199, 126
      %v1209 = vpop.permute.xlu0 %1208
      %1210 = vrot.lane.b32.xlu0 %v1200, 126
      %v1211 = vpop.permute.xlu0 %1210
      %1212 = vrot.lane.b32.xlu0 %v1201, 126
      %v1213 = vpop.permute.xlu0 %1212
      %v1218 = vadd.f32 %v1193, %v1207
      %v1219 = vadd.f32 %v1194, %v1209
      %v1220 = vadd.f32 %v1195, %v1211
      %v1221 = vadd.f32 %v1196, %v1213
      %s1222 = sld [smem:[#allocation9 + $0x9]]
      %s1223 = sld [smem:[#allocation9 + $0x3a]]
      %v1224 = vstv %s1222
      %v1225 = vmul.f32 %v1224, %v216
      %v1226 = vmul.f32 %v1224, %v217
      %v1227 = vmul.f32 %v1224, %v218
      %v1228 = vmul.f32 %v1224, %v219
      %v1229 = vmul.f32 %v1224, %v220
      %v1230 = vmul.f32 %v1224, %v221
      %v1237 = vrot.slane %v1225, 1
      %v1238 = vrot.slane %v1226, 1
      %v1239 = vsel %vm263, %v1237, %v1238
      %v1240 = vrot.slane %v1227, 1
      %v1241 = vsel %vm263, %v1238, %v1240
      %v1242 = vrot.slane %v1228, 1
      %v1243 = vrot.slane %v1229, 1
      %v1244 = vsel %vm263, %v1242, %v1243
      %v1245 = vrot.slane %v1230, 1
      %v1246 = vsel %vm263, %v1243, %v1245
      %1247 = vrot.lane.b32.xlu0 %v1239, 126
      %v1248 = vpop.permute.xlu0 %1247
      %1249 = vrot.lane.b32.xlu0 %v1241, 126
      %v1250 = vpop.permute.xlu0 %1249
      %1251 = vrot.lane.b32.xlu0 %v1244, 126
      %v1252 = vpop.permute.xlu0 %1251
      %1253 = vrot.lane.b32.xlu0 %v1246, 126
      %v1254 = vpop.permute.xlu0 %1253
      %v1259 = vadd.f32 %v1218, %v1248
      %v1260 = vadd.f32 %v1219, %v1250
      %v1261 = vadd.f32 %v1220, %v1252
      %v1262 = vadd.f32 %v1221, %v1254
      %v1263 = vstv %s1223
      %v1264 = vmul.f32 %v1263, %v222
      %v1265 = vmul.f32 %v1263, %v223
      %v1266 = vmul.f32 %v1263, %v224
      %v1267 = vmul.f32 %v1263, %v225
      %v1268 = vmul.f32 %v1263, %v226
      %v1269 = vmul.f32 %v1263, %v227
      %v1276 = vrot.slane %v1264, 1
      %v1277 = vrot.slane %v1265, 1
      %v1278 = vsel %vm263, %v1276, %v1277
      %v1279 = vrot.slane %v1266, 1
      %v1280 = vsel %vm263, %v1277, %v1279
      %v1281 = vrot.slane %v1267, 1
      %v1282 = vrot.slane %v1268, 1
      %v1283 = vsel %vm263, %v1281, %v1282
      %v1284 = vrot.slane %v1269, 1
      %v1285 = vsel %vm263, %v1282, %v1284
      %1286 = vrot.lane.b32.xlu0 %v1278, 126
      %v1287 = vpop.permute.xlu0 %1286
      %1288 = vrot.lane.b32.xlu0 %v1280, 126
      %v1289 = vpop.permute.xlu0 %1288
      %1290 = vrot.lane.b32.xlu0 %v1283, 126
      %v1291 = vpop.permute.xlu0 %1290
      %1292 = vrot.lane.b32.xlu0 %v1285, 126
      %v1293 = vpop.permute.xlu0 %1292
      %v1298 = vadd.f32 %v1259, %v1287
      %v1299 = vadd.f32 %v1260, %v1289
      %v1300 = vadd.f32 %v1261, %v1291
      %v1301 = vadd.f32 %v1262, %v1293
      %s1302 = sld [smem:[#allocation9 + $0x10]]
      %s1303 = sld [smem:[#allocation9 + $0x41]]
      %v1304 = vstv %s1302
      %v1305 = vmul.f32 %v1304, %v216
      %v1306 = vmul.f32 %v1304, %v217
      %v1307 = vmul.f32 %v1304, %v218
      %v1308 = vmul.f32 %v1304, %v219
      %v1309 = vmul.f32 %v1304, %v220
      %v1310 = vmul.f32 %v1304, %v221
      %v1317 = vrot.slane %v1305, 2
      %v1318 = vrot.slane %v1306, 2
      %v1319 = vsel %vm328, %v1317, %v1318
      %v1320 = vrot.slane %v1307, 2
      %v1321 = vsel %vm328, %v1318, %v1320
      %v1322 = vrot.slane %v1308, 2
      %v1323 = vrot.slane %v1309, 2
      %v1324 = vsel %vm328, %v1322, %v1323
      %v1325 = vrot.slane %v1310, 2
      %v1326 = vsel %vm328, %v1323, %v1325
      %1327 = vrot.lane.b32.xlu0 %v1319, 126
      %v1328 = vpop.permute.xlu0 %1327
      %1329 = vrot.lane.b32.xlu0 %v1321, 126
      %v1330 = vpop.permute.xlu0 %1329
      %1331 = vrot.lane.b32.xlu0 %v1324, 126
      %v1332 = vpop.permute.xlu0 %1331
      %1333 = vrot.lane.b32.xlu0 %v1326, 126
      %v1334 = vpop.permute.xlu0 %1333
      %v1339 = vadd.f32 %v1298, %v1328
      %v1340 = vadd.f32 %v1299, %v1330
      %v1341 = vadd.f32 %v1300, %v1332
      %v1342 = vadd.f32 %v1301, %v1334
      %v1343 = vstv %s1303
      %v1344 = vmul.f32 %v1343, %v222
      %v1345 = vmul.f32 %v1343, %v223
      %v1346 = vmul.f32 %v1343, %v224
      %v1347 = vmul.f32 %v1343, %v225
      %v1348 = vmul.f32 %v1343, %v226
      %v1349 = vmul.f32 %v1343, %v227
      %v1356 = vrot.slane %v1344, 2
      %v1357 = vrot.slane %v1345, 2
      %v1358 = vsel %vm328, %v1356, %v1357
      %v1359 = vrot.slane %v1346, 2
      %v1360 = vsel %vm328, %v1357, %v1359
      %v1361 = vrot.slane %v1347, 2
      %v1362 = vrot.slane %v1348, 2
      %v1363 = vsel %vm328, %v1361, %v1362
      %v1364 = vrot.slane %v1349, 2
      %v1365 = vsel %vm328, %v1362, %v1364
      %1366 = vrot.lane.b32.xlu0 %v1358, 126
      %v1367 = vpop.permute.xlu0 %1366
      %1368 = vrot.lane.b32.xlu0 %v1360, 126
      %v1369 = vpop.permute.xlu0 %1368
      %1370 = vrot.lane.b32.xlu0 %v1363, 126
      %v1371 = vpop.permute.xlu0 %1370
      %1372 = vrot.lane.b32.xlu0 %v1365, 126
      %v1373 = vpop.permute.xlu0 %1372
      %v1378 = vadd.f32 %v1339, %v1367
      %v1379 = vadd.f32 %v1340, %v1369
      %v1380 = vadd.f32 %v1341, %v1371
      %v1381 = vadd.f32 %v1342, %v1373
      %s1382 = sld [smem:[#allocation9 + $0x17]]
      %s1383 = sld [smem:[#allocation9 + $0x48]]
      %v1384 = vstv %s1382
      %v1385 = vmul.f32 %v1384, %v216
      %v1386 = vmul.f32 %v1384, %v217
      %v1387 = vmul.f32 %v1384, %v218
      %v1388 = vmul.f32 %v1384, %v219
      %v1389 = vmul.f32 %v1384, %v220
      %v1390 = vmul.f32 %v1384, %v221
      %v1397 = vrot.slane %v1385, 3
      %v1398 = vrot.slane %v1386, 3
      %v1399 = vsel %vm393, %v1397, %v1398
      %v1400 = vrot.slane %v1387, 3
      %v1401 = vsel %vm393, %v1398, %v1400
      %v1402 = vrot.slane %v1388, 3
      %v1403 = vrot.slane %v1389, 3
      %v1404 = vsel %vm393, %v1402, %v1403
      %v1405 = vrot.slane %v1390, 3
      %v1406 = vsel %vm393, %v1403, %v1405
      %1407 = vrot.lane.b32.xlu0 %v1399, 126
      %v1408 = vpop.permute.xlu0 %1407
      %1409 = vrot.lane.b32.xlu0 %v1401, 126
      %v1410 = vpop.permute.xlu0 %1409
      %1411 = vrot.lane.b32.xlu0 %v1404, 126
      %v1412 = vpop.permute.xlu0 %1411
      %1413 = vrot.lane.b32.xlu0 %v1406, 126
      %v1414 = vpop.permute.xlu0 %1413
      %v1419 = vadd.f32 %v1378, %v1408
      %v1420 = vadd.f32 %v1379, %v1410
      %v1421 = vadd.f32 %v1380, %v1412
      %v1422 = vadd.f32 %v1381, %v1414
      %v1423 = vstv %s1383
      %v1424 = vmul.f32 %v1423, %v222
      %v1425 = vmul.f32 %v1423, %v223
      %v1426 = vmul.f32 %v1423, %v224
      %v1427 = vmul.f32 %v1423, %v225
      %v1428 = vmul.f32 %v1423, %v226
      %v1429 = vmul.f32 %v1423, %v227
      %v1436 = vrot.slane %v1424, 3
      %v1437 = vrot.slane %v1425, 3
      %v1438 = vsel %vm393, %v1436, %v1437
      %v1439 = vrot.slane %v1426, 3
      %v1440 = vsel %vm393, %v1437, %v1439
      %v1441 = vrot.slane %v1427, 3
      %v1442 = vrot.slane %v1428, 3
      %v1443 = vsel %vm393, %v1441, %v1442
      %v1444 = vrot.slane %v1429, 3
      %v1445 = vsel %vm393, %v1442, %v1444
      %1446 = vrot.lane.b32.xlu0 %v1438, 126
      %v1447 = vpop.permute.xlu0 %1446
      %1448 = vrot.lane.b32.xlu0 %v1440, 126
      %v1449 = vpop.permute.xlu0 %1448
      %1450 = vrot.lane.b32.xlu0 %v1443, 126
      %v1451 = vpop.permute.xlu0 %1450
      %1452 = vrot.lane.b32.xlu0 %v1445, 126
      %v1453 = vpop.permute.xlu0 %1452
      %v1458 = vadd.f32 %v1419, %v1447
      %v1459 = vadd.f32 %v1420, %v1449
      %v1460 = vadd.f32 %v1421, %v1451
      %v1461 = vadd.f32 %v1422, %v1453
      %s1462 = sld [smem:[#allocation9 + $0x1e]]
      %s1463 = sld [smem:[#allocation9 + $0x4f]]
      %v1464 = vstv %s1462
      %v1465 = vmul.f32 %v1464, %v216
      %v1466 = vmul.f32 %v1464, %v217
      %v1467 = vmul.f32 %v1464, %v218
      %v1468 = vmul.f32 %v1464, %v219
      %v1469 = vmul.f32 %v1464, %v220
      %v1470 = vmul.f32 %v1464, %v221
      %v1477 = vrot.slane %v1465, 4
      %v1478 = vrot.slane %v1466, 4
      %v1479 = vsel %vm458, %v1477, %v1478
      %v1480 = vrot.slane %v1467, 4
      %v1481 = vsel %vm458, %v1478, %v1480
      %v1482 = vrot.slane %v1468, 4
      %v1483 = vrot.slane %v1469, 4
      %v1484 = vsel %vm458, %v1482, %v1483
      %v1485 = vrot.slane %v1470, 4
      %v1486 = vsel %vm458, %v1483, %v1485
      %1487 = vrot.lane.b32.xlu0 %v1479, 126
      %v1488 = vpop.permute.xlu0 %1487
      %1489 = vrot.lane.b32.xlu0 %v1481, 126
      %v1490 = vpop.permute.xlu0 %1489
      %1491 = vrot.lane.b32.xlu0 %v1484, 126
      %v1492 = vpop.permute.xlu0 %1491
      %1493 = vrot.lane.b32.xlu0 %v1486, 126
      %v1494 = vpop.permute.xlu0 %1493
      %v1499 = vadd.f32 %v1458, %v1488
      %v1500 = vadd.f32 %v1459, %v1490
      %v1501 = vadd.f32 %v1460, %v1492
      %v1502 = vadd.f32 %v1461, %v1494
      %v1503 = vstv %s1463
      %v1504 = vmul.f32 %v1503, %v222
      %v1505 = vmul.f32 %v1503, %v223
      %v1506 = vmul.f32 %v1503, %v224
      %v1507 = vmul.f32 %v1503, %v225
      %v1508 = vmul.f32 %v1503, %v226
      %v1509 = vmul.f32 %v1503, %v227
      %v1516 = vrot.slane %v1504, 4
      %v1517 = vrot.slane %v1505, 4
      %v1518 = vsel %vm458, %v1516, %v1517
      %v1519 = vrot.slane %v1506, 4
      %v1520 = vsel %vm458, %v1517, %v1519
      %v1521 = vrot.slane %v1507, 4
      %v1522 = vrot.slane %v1508, 4
      %v1523 = vsel %vm458, %v1521, %v1522
      %v1524 = vrot.slane %v1509, 4
      %v1525 = vsel %vm458, %v1522, %v1524
      %1526 = vrot.lane.b32.xlu0 %v1518, 126
      %v1527 = vpop.permute.xlu0 %1526
      %1528 = vrot.lane.b32.xlu0 %v1520, 126
      %v1529 = vpop.permute.xlu0 %1528
      %1530 = vrot.lane.b32.xlu0 %v1523, 126
      %v1531 = vpop.permute.xlu0 %1530
      %1532 = vrot.lane.b32.xlu0 %v1525, 126
      %v1533 = vpop.permute.xlu0 %1532
      %v1538 = vadd.f32 %v1499, %v1527
      %v1539 = vadd.f32 %v1500, %v1529
      %v1540 = vadd.f32 %v1501, %v1531
      %v1541 = vadd.f32 %v1502, %v1533
      %s1542 = sld [smem:[#allocation9 + $0x25]]
      %s1543 = sld [smem:[#allocation9 + $0x56]]
      %v1544 = vstv %s1542
      %v1545 = vmul.f32 %v1544, %v216
      %v1546 = vmul.f32 %v1544, %v217
      %v1547 = vmul.f32 %v1544, %v218
      %v1548 = vmul.f32 %v1544, %v219
      %v1549 = vmul.f32 %v1544, %v220
      %v1550 = vmul.f32 %v1544, %v221
      %v1557 = vrot.slane %v1545, 5
      %v1558 = vrot.slane %v1546, 5
      %v1559 = vsel %vm523, %v1557, %v1558
      %v1560 = vrot.slane %v1547, 5
      %v1561 = vsel %vm523, %v1558, %v1560
      %v1562 = vrot.slane %v1548, 5
      %v1563 = vrot.slane %v1549, 5
      %v1564 = vsel %vm523, %v1562, %v1563
      %v1565 = vrot.slane %v1550, 5
      %v1566 = vsel %vm523, %v1563, %v1565
      %1567 = vrot.lane.b32.xlu0 %v1559, 126
      %v1568 = vpop.permute.xlu0 %1567
      %1569 = vrot.lane.b32.xlu0 %v1561, 126
      %v1570 = vpop.permute.xlu0 %1569
      %1571 = vrot.lane.b32.xlu0 %v1564, 126
      %v1572 = vpop.permute.xlu0 %1571
      %1573 = vrot.lane.b32.xlu0 %v1566, 126
      %v1574 = vpop.permute.xlu0 %1573
      %v1579 = vadd.f32 %v1538, %v1568
      %v1580 = vadd.f32 %v1539, %v1570
      %v1581 = vadd.f32 %v1540, %v1572
      %v1582 = vadd.f32 %v1541, %v1574
      %v1583 = vstv %s1543
      %v1584 = vmul.f32 %v1583, %v222
      %v1585 = vmul.f32 %v1583, %v223
      %v1586 = vmul.f32 %v1583, %v224
      %v1587 = vmul.f32 %v1583, %v225
      %v1588 = vmul.f32 %v1583, %v226
      %v1589 = vmul.f32 %v1583, %v227
      %v1596 = vrot.slane %v1584, 5
      %v1597 = vrot.slane %v1585, 5
      %v1598 = vsel %vm523, %v1596, %v1597
      %v1599 = vrot.slane %v1586, 5
      %v1600 = vsel %vm523, %v1597, %v1599
      %v1601 = vrot.slane %v1587, 5
      %v1602 = vrot.slane %v1588, 5
      %v1603 = vsel %vm523, %v1601, %v1602
      %v1604 = vrot.slane %v1589, 5
      %v1605 = vsel %vm523, %v1602, %v1604
      %1606 = vrot.lane.b32.xlu0 %v1598, 126
      %v1607 = vpop.permute.xlu0 %1606
      %1608 = vrot.lane.b32.xlu0 %v1600, 126
      %v1609 = vpop.permute.xlu0 %1608
      %1610 = vrot.lane.b32.xlu0 %v1603, 126
      %v1611 = vpop.permute.xlu0 %1610
      %1612 = vrot.lane.b32.xlu0 %v1605, 126
      %v1613 = vpop.permute.xlu0 %1612
      %v1618 = vadd.f32 %v1579, %v1607
      %v1619 = vadd.f32 %v1580, %v1609
      %v1620 = vadd.f32 %v1581, %v1611
      %v1621 = vadd.f32 %v1582, %v1613
      %s1622 = sld [smem:[#allocation9 + $0x2c]]
      %s1623 = sld [smem:[#allocation9 + $0x5d]]
      %v1624 = vstv %s1622
      %v1625 = vmul.f32 %v1624, %v216
      %v1626 = vmul.f32 %v1624, %v217
      %v1627 = vmul.f32 %v1624, %v218
      %v1628 = vmul.f32 %v1624, %v219
      %v1629 = vmul.f32 %v1624, %v220
      %v1630 = vmul.f32 %v1624, %v221
      %v1637 = vrot.slane %v1625, 6
      %v1638 = vrot.slane %v1626, 6
      %v1639 = vsel %vm588, %v1637, %v1638
      %v1640 = vrot.slane %v1627, 6
      %v1641 = vsel %vm588, %v1638, %v1640
      %v1642 = vrot.slane %v1628, 6
      %v1643 = vrot.slane %v1629, 6
      %v1644 = vsel %vm588, %v1642, %v1643
      %v1645 = vrot.slane %v1630, 6
      %v1646 = vsel %vm588, %v1643, %v1645
      %1647 = vrot.lane.b32.xlu0 %v1639, 126
      %v1648 = vpop.permute.xlu0 %1647
      %1649 = vrot.lane.b32.xlu0 %v1641, 126
      %v1650 = vpop.permute.xlu0 %1649
      %1651 = vrot.lane.b32.xlu0 %v1644, 126
      %v1652 = vpop.permute.xlu0 %1651
      %1653 = vrot.lane.b32.xlu0 %v1646, 126
      %v1654 = vpop.permute.xlu0 %1653
      %v1659 = vadd.f32 %v1618, %v1648
      %v1660 = vadd.f32 %v1619, %v1650
      %v1661 = vadd.f32 %v1620, %v1652
      %v1662 = vadd.f32 %v1621, %v1654
      %v1663 = vstv %s1623
      %v1664 = vmul.f32 %v1663, %v222
      %v1665 = vmul.f32 %v1663, %v223
      %v1666 = vmul.f32 %v1663, %v224
      %v1667 = vmul.f32 %v1663, %v225
      %v1668 = vmul.f32 %v1663, %v226
      %v1669 = vmul.f32 %v1663, %v227
      %v1676 = vrot.slane %v1664, 6
      %v1677 = vrot.slane %v1665, 6
      %v1678 = vsel %vm588, %v1676, %v1677
      %v1679 = vrot.slane %v1666, 6
      %v1680 = vsel %vm588, %v1677, %v1679
      %v1681 = vrot.slane %v1667, 6
      %v1682 = vrot.slane %v1668, 6
      %v1683 = vsel %vm588, %v1681, %v1682
      %v1684 = vrot.slane %v1669, 6
      %v1685 = vsel %vm588, %v1682, %v1684
      %1686 = vrot.lane.b32.xlu0 %v1678, 126
      %v1687 = vpop.permute.xlu0 %1686
      %1688 = vrot.lane.b32.xlu0 %v1680, 126
      %v1689 = vpop.permute.xlu0 %1688
      %1690 = vrot.lane.b32.xlu0 %v1683, 126
      %v1691 = vpop.permute.xlu0 %1690
      %1692 = vrot.lane.b32.xlu0 %v1685, 126
      %v1693 = vpop.permute.xlu0 %1692
      %v1698 = vadd.f32 %v1659, %v1687
      %v1699 = vadd.f32 %v1660, %v1689
      %v1700 = vadd.f32 %v1661, %v1691
      %v1701 = vadd.f32 %v1662, %v1693
      %s1702 = sld [smem:[#allocation9 + $0x3]]
      %s1703 = sld [smem:[#allocation9 + $0x34]]
      %v1704 = vstv %s1702
      %v1705 = vmul.f32 %v1704, %v216
      %v1706 = vmul.f32 %v1704, %v217
      %v1707 = vmul.f32 %v1704, %v219
      %v1708 = vmul.f32 %v1704, %v220
      %1713 = vrot.lane.b32.xlu0 %v1705, 125
      %v1714 = vpop.permute.xlu0 %1713
      %1715 = vrot.lane.b32.xlu0 %v1706, 125
      %v1716 = vpop.permute.xlu0 %1715
      %1717 = vrot.lane.b32.xlu0 %v1707, 125
      %v1718 = vpop.permute.xlu0 %1717
      %1719 = vrot.lane.b32.xlu0 %v1708, 125
      %v1720 = vpop.permute.xlu0 %1719
      %v1725 = vadd.f32 %v1698, %v1714
      %v1726 = vadd.f32 %v1699, %v1716
      %v1727 = vadd.f32 %v1700, %v1718
      %v1728 = vadd.f32 %v1701, %v1720
      %v1729 = vstv %s1703
      %v1730 = vmul.f32 %v1729, %v222
      %v1731 = vmul.f32 %v1729, %v223
      %v1732 = vmul.f32 %v1729, %v225
      %v1733 = vmul.f32 %v1729, %v226
      %1738 = vrot.lane.b32.xlu0 %v1730, 125
      %v1739 = vpop.permute.xlu0 %1738
      %1740 = vrot.lane.b32.xlu0 %v1731, 125
      %v1741 = vpop.permute.xlu0 %1740
      %1742 = vrot.lane.b32.xlu0 %v1732, 125
      %v1743 = vpop.permute.xlu0 %1742
      %1744 = vrot.lane.b32.xlu0 %v1733, 125
      %v1745 = vpop.permute.xlu0 %1744
      %v1750 = vadd.f32 %v1725, %v1739
      %v1751 = vadd.f32 %v1726, %v1741
      %v1752 = vadd.f32 %v1727, %v1743
      %v1753 = vadd.f32 %v1728, %v1745
      %s1754 = sld [smem:[#allocation9 + $0xa]]
      %s1755 = sld [smem:[#allocation9 + $0x3b]]
      %v1756 = vstv %s1754
      %v1757 = vmul.f32 %v1756, %v216
      %v1758 = vmul.f32 %v1756, %v217
      %v1759 = vmul.f32 %v1756, %v218
      %v1760 = vmul.f32 %v1756, %v219
      %v1761 = vmul.f32 %v1756, %v220
      %v1762 = vmul.f32 %v1756, %v221
      %v1769 = vrot.slane %v1757, 1
      %v1770 = vrot.slane %v1758, 1
      %v1771 = vsel %vm263, %v1769, %v1770
      %v1772 = vrot.slane %v1759, 1
      %v1773 = vsel %vm263, %v1770, %v1772
      %v1774 = vrot.slane %v1760, 1
      %v1775 = vrot.slane %v1761, 1
      %v1776 = vsel %vm263, %v1774, %v1775
      %v1777 = vrot.slane %v1762, 1
      %v1778 = vsel %vm263, %v1775, %v1777
      %1779 = vrot.lane.b32.xlu0 %v1771, 125
      %v1780 = vpop.permute.xlu0 %1779
      %1781 = vrot.lane.b32.xlu0 %v1773, 125
      %v1782 = vpop.permute.xlu0 %1781
      %1783 = vrot.lane.b32.xlu0 %v1776, 125
      %v1784 = vpop.permute.xlu0 %1783
      %1785 = vrot.lane.b32.xlu0 %v1778, 125
      %v1786 = vpop.permute.xlu0 %1785
      %v1791 = vadd.f32 %v1750, %v1780
      %v1792 = vadd.f32 %v1751, %v1782
      %v1793 = vadd.f32 %v1752, %v1784
      %v1794 = vadd.f32 %v1753, %v1786
      %v1795 = vstv %s1755
      %v1796 = vmul.f32 %v1795, %v222
      %v1797 = vmul.f32 %v1795, %v223
      %v1798 = vmul.f32 %v1795, %v224
      %v1799 = vmul.f32 %v1795, %v225
      %v1800 = vmul.f32 %v1795, %v226
      %v1801 = vmul.f32 %v1795, %v227
      %v1808 = vrot.slane %v1796, 1
      %v1809 = vrot.slane %v1797, 1
      %v1810 = vsel %vm263, %v1808, %v1809
      %v1811 = vrot.slane %v1798, 1
      %v1812 = vsel %vm263, %v1809, %v1811
      %v1813 = vrot.slane %v1799, 1
      %v1814 = vrot.slane %v1800, 1
      %v1815 = vsel %vm263, %v1813, %v1814
      %v1816 = vrot.slane %v1801, 1
      %v1817 = vsel %vm263, %v1814, %v1816
      %1818 = vrot.lane.b32.xlu0 %v1810, 125
      %v1819 = vpop.permute.xlu0 %1818
      %1820 = vrot.lane.b32.xlu0 %v1812, 125
      %v1821 = vpop.permute.xlu0 %1820
      %1822 = vrot.lane.b32.xlu0 %v1815, 125
      %v1823 = vpop.permute.xlu0 %1822
      %1824 = vrot.lane.b32.xlu0 %v1817, 125
      %v1825 = vpop.permute.xlu0 %1824
      %v1830 = vadd.f32 %v1791, %v1819
      %v1831 = vadd.f32 %v1792, %v1821
      %v1832 = vadd.f32 %v1793, %v1823
      %v1833 = vadd.f32 %v1794, %v1825
      %s1834 = sld [smem:[#allocation9 + $0x11]]
      %s1835 = sld [smem:[#allocation9 + $0x42]]
      %v1836 = vstv %s1834
      %v1837 = vmul.f32 %v1836, %v216
      %v1838 = vmul.f32 %v1836, %v217
      %v1839 = vmul.f32 %v1836, %v218
      %v1840 = vmul.f32 %v1836, %v219
      %v1841 = vmul.f32 %v1836, %v220
      %v1842 = vmul.f32 %v1836, %v221
      %v1849 = vrot.slane %v1837, 2
      %v1850 = vrot.slane %v1838, 2
      %v1851 = vsel %vm328, %v1849, %v1850
      %v1852 = vrot.slane %v1839, 2
      %v1853 = vsel %vm328, %v1850, %v1852
      %v1854 = vrot.slane %v1840, 2
      %v1855 = vrot.slane %v1841, 2
      %v1856 = vsel %vm328, %v1854, %v1855
      %v1857 = vrot.slane %v1842, 2
      %v1858 = vsel %vm328, %v1855, %v1857
      %1859 = vrot.lane.b32.xlu0 %v1851, 125
      %v1860 = vpop.permute.xlu0 %1859
      %1861 = vrot.lane.b32.xlu0 %v1853, 125
      %v1862 = vpop.permute.xlu0 %1861
      %1863 = vrot.lane.b32.xlu0 %v1856, 125
      %v1864 = vpop.permute.xlu0 %1863
      %1865 = vrot.lane.b32.xlu0 %v1858, 125
      %v1866 = vpop.permute.xlu0 %1865
      %v1871 = vadd.f32 %v1830, %v1860
      %v1872 = vadd.f32 %v1831, %v1862
      %v1873 = vadd.f32 %v1832, %v1864
      %v1874 = vadd.f32 %v1833, %v1866
      %v1875 = vstv %s1835
      %v1876 = vmul.f32 %v1875, %v222
      %v1877 = vmul.f32 %v1875, %v223
      %v1878 = vmul.f32 %v1875, %v224
      %v1879 = vmul.f32 %v1875, %v225
      %v1880 = vmul.f32 %v1875, %v226
      %v1881 = vmul.f32 %v1875, %v227
      %v1888 = vrot.slane %v1876, 2
      %v1889 = vrot.slane %v1877, 2
      %v1890 = vsel %vm328, %v1888, %v1889
      %v1891 = vrot.slane %v1878, 2
      %v1892 = vsel %vm328, %v1889, %v1891
      %v1893 = vrot.slane %v1879, 2
      %v1894 = vrot.slane %v1880, 2
      %v1895 = vsel %vm328, %v1893, %v1894
      %v1896 = vrot.slane %v1881, 2
      %v1897 = vsel %vm328, %v1894, %v1896
      %1898 = vrot.lane.b32.xlu0 %v1890, 125
      %v1899 = vpop.permute.xlu0 %1898
      %1900 = vrot.lane.b32.xlu0 %v1892, 125
      %v1901 = vpop.permute.xlu0 %1900
      %1902 = vrot.lane.b32.xlu0 %v1895, 125
      %v1903 = vpop.permute.xlu0 %1902
      %1904 = vrot.lane.b32.xlu0 %v1897, 125
      %v1905 = vpop.permute.xlu0 %1904
      %v1910 = vadd.f32 %v1871, %v1899
      %v1911 = vadd.f32 %v1872, %v1901
      %v1912 = vadd.f32 %v1873, %v1903
      %v1913 = vadd.f32 %v1874, %v1905
      %s1914 = sld [smem:[#allocation9 + $0x18]]
      %s1915 = sld [smem:[#allocation9 + $0x49]]
      %v1916 = vstv %s1914
      %v1917 = vmul.f32 %v1916, %v216
      %v1918 = vmul.f32 %v1916, %v217
      %v1919 = vmul.f32 %v1916, %v218
      %v1920 = vmul.f32 %v1916, %v219
      %v1921 = vmul.f32 %v1916, %v220
      %v1922 = vmul.f32 %v1916, %v221
      %v1929 = vrot.slane %v1917, 3
      %v1930 = vrot.slane %v1918, 3
      %v1931 = vsel %vm393, %v1929, %v1930
      %v1932 = vrot.slane %v1919, 3
      %v1933 = vsel %vm393, %v1930, %v1932
      %v1934 = vrot.slane %v1920, 3
      %v1935 = vrot.slane %v1921, 3
      %v1936 = vsel %vm393, %v1934, %v1935
      %v1937 = vrot.slane %v1922, 3
      %v1938 = vsel %vm393, %v1935, %v1937
      %1939 = vrot.lane.b32.xlu0 %v1931, 125
      %v1940 = vpop.permute.xlu0 %1939
      %1941 = vrot.lane.b32.xlu0 %v1933, 125
      %v1942 = vpop.permute.xlu0 %1941
      %1943 = vrot.lane.b32.xlu0 %v1936, 125
      %v1944 = vpop.permute.xlu0 %1943
      %1945 = vrot.lane.b32.xlu0 %v1938, 125
      %v1946 = vpop.permute.xlu0 %1945
      %v1951 = vadd.f32 %v1910, %v1940
      %v1952 = vadd.f32 %v1911, %v1942
      %v1953 = vadd.f32 %v1912, %v1944
      %v1954 = vadd.f32 %v1913, %v1946
      %v1955 = vstv %s1915
      %v1956 = vmul.f32 %v1955, %v222
      %v1957 = vmul.f32 %v1955, %v223
      %v1958 = vmul.f32 %v1955, %v224
      %v1959 = vmul.f32 %v1955, %v225
      %v1960 = vmul.f32 %v1955, %v226
      %v1961 = vmul.f32 %v1955, %v227
      %v1968 = vrot.slane %v1956, 3
      %v1969 = vrot.slane %v1957, 3
      %v1970 = vsel %vm393, %v1968, %v1969
      %v1971 = vrot.slane %v1958, 3
      %v1972 = vsel %vm393, %v1969, %v1971
      %v1973 = vrot.slane %v1959, 3
      %v1974 = vrot.slane %v1960, 3
      %v1975 = vsel %vm393, %v1973, %v1974
      %v1976 = vrot.slane %v1961, 3
      %v1977 = vsel %vm393, %v1974, %v1976
      %1978 = vrot.lane.b32.xlu0 %v1970, 125
      %v1979 = vpop.permute.xlu0 %1978
      %1980 = vrot.lane.b32.xlu0 %v1972, 125
      %v1981 = vpop.permute.xlu0 %1980
      %1982 = vrot.lane.b32.xlu0 %v1975, 125
      %v1983 = vpop.permute.xlu0 %1982
      %1984 = vrot.lane.b32.xlu0 %v1977, 125
      %v1985 = vpop.permute.xlu0 %1984
      %v1990 = vadd.f32 %v1951, %v1979
      %v1991 = vadd.f32 %v1952, %v1981
      %v1992 = vadd.f32 %v1953, %v1983
      %v1993 = vadd.f32 %v1954, %v1985
      %s1994 = sld [smem:[#allocation9 + $0x1f]]
      %s1995 = sld [smem:[#allocation9 + $0x50]]
      %v1996 = vstv %s1994
      %v1997 = vmul.f32 %v1996, %v216
      %v1998 = vmul.f32 %v1996, %v217
      %v1999 = vmul.f32 %v1996, %v218
      %v2000 = vmul.f32 %v1996, %v219
      %v2001 = vmul.f32 %v1996, %v220
      %v2002 = vmul.f32 %v1996, %v221
      %v2009 = vrot.slane %v1997, 4
      %v2010 = vrot.slane %v1998, 4
      %v2011 = vsel %vm458, %v2009, %v2010
      %v2012 = vrot.slane %v1999, 4
      %v2013 = vsel %vm458, %v2010, %v2012
      %v2014 = vrot.slane %v2000, 4
      %v2015 = vrot.slane %v2001, 4
      %v2016 = vsel %vm458, %v2014, %v2015
      %v2017 = vrot.slane %v2002, 4
      %v2018 = vsel %vm458, %v2015, %v2017
      %2019 = vrot.lane.b32.xlu0 %v2011, 125
      %v2020 = vpop.permute.xlu0 %2019
      %2021 = vrot.lane.b32.xlu0 %v2013, 125
      %v2022 = vpop.permute.xlu0 %2021
      %2023 = vrot.lane.b32.xlu0 %v2016, 125
      %v2024 = vpop.permute.xlu0 %2023
      %2025 = vrot.lane.b32.xlu0 %v2018, 125
      %v2026 = vpop.permute.xlu0 %2025
      %v2031 = vadd.f32 %v1990, %v2020
      %v2032 = vadd.f32 %v1991, %v2022
      %v2033 = vadd.f32 %v1992, %v2024
      %v2034 = vadd.f32 %v1993, %v2026
      %v2035 = vstv %s1995
      %v2036 = vmul.f32 %v2035, %v222
      %v2037 = vmul.f32 %v2035, %v223
      %v2038 = vmul.f32 %v2035, %v224
      %v2039 = vmul.f32 %v2035, %v225
      %v2040 = vmul.f32 %v2035, %v226
      %v2041 = vmul.f32 %v2035, %v227
      %v2048 = vrot.slane %v2036, 4
      %v2049 = vrot.slane %v2037, 4
      %v2050 = vsel %vm458, %v2048, %v2049
      %v2051 = vrot.slane %v2038, 4
      %v2052 = vsel %vm458, %v2049, %v2051
      %v2053 = vrot.slane %v2039, 4
      %v2054 = vrot.slane %v2040, 4
      %v2055 = vsel %vm458, %v2053, %v2054
      %v2056 = vrot.slane %v2041, 4
      %v2057 = vsel %vm458, %v2054, %v2056
      %2058 = vrot.lane.b32.xlu0 %v2050, 125
      %v2059 = vpop.permute.xlu0 %2058
      %2060 = vrot.lane.b32.xlu0 %v2052, 125
      %v2061 = vpop.permute.xlu0 %2060
      %2062 = vrot.lane.b32.xlu0 %v2055, 125
      %v2063 = vpop.permute.xlu0 %2062
      %2064 = vrot.lane.b32.xlu0 %v2057, 125
      %v2065 = vpop.permute.xlu0 %2064
      %v2070 = vadd.f32 %v2031, %v2059
      %v2071 = vadd.f32 %v2032, %v2061
      %v2072 = vadd.f32 %v2033, %v2063
      %v2073 = vadd.f32 %v2034, %v2065
      %s2074 = sld [smem:[#allocation9 + $0x26]]
      %s2075 = sld [smem:[#allocation9 + $0x57]]
      %v2076 = vstv %s2074
      %v2077 = vmul.f32 %v2076, %v216
      %v2078 = vmul.f32 %v2076, %v217
      %v2079 = vmul.f32 %v2076, %v218
      %v2080 = vmul.f32 %v2076, %v219
      %v2081 = vmul.f32 %v2076, %v220
      %v2082 = vmul.f32 %v2076, %v221
      %v2089 = vrot.slane %v2077, 5
      %v2090 = vrot.slane %v2078, 5
      %v2091 = vsel %vm523, %v2089, %v2090
      %v2092 = vrot.slane %v2079, 5
      %v2093 = vsel %vm523, %v2090, %v2092
      %v2094 = vrot.slane %v2080, 5
      %v2095 = vrot.slane %v2081, 5
      %v2096 = vsel %vm523, %v2094, %v2095
      %v2097 = vrot.slane %v2082, 5
      %v2098 = vsel %vm523, %v2095, %v2097
      %2099 = vrot.lane.b32.xlu0 %v2091, 125
      %v2100 = vpop.permute.xlu0 %2099
      %2101 = vrot.lane.b32.xlu0 %v2093, 125
      %v2102 = vpop.permute.xlu0 %2101
      %2103 = vrot.lane.b32.xlu0 %v2096, 125
      %v2104 = vpop.permute.xlu0 %2103
      %2105 = vrot.lane.b32.xlu0 %v2098, 125
      %v2106 = vpop.permute.xlu0 %2105
      %v2111 = vadd.f32 %v2070, %v2100
      %v2112 = vadd.f32 %v2071, %v2102
      %v2113 = vadd.f32 %v2072, %v2104
      %v2114 = vadd.f32 %v2073, %v2106
      %v2115 = vstv %s2075
      %v2116 = vmul.f32 %v2115, %v222
      %v2117 = vmul.f32 %v2115, %v223
      %v2118 = vmul.f32 %v2115, %v224
      %v2119 = vmul.f32 %v2115, %v225
      %v2120 = vmul.f32 %v2115, %v226
      %v2121 = vmul.f32 %v2115, %v227
      %v2128 = vrot.slane %v2116, 5
      %v2129 = vrot.slane %v2117, 5
      %v2130 = vsel %vm523, %v2128, %v2129
      %v2131 = vrot.slane %v2118, 5
      %v2132 = vsel %vm523, %v2129, %v2131
      %v2133 = vrot.slane %v2119, 5
      %v2134 = vrot.slane %v2120, 5
      %v2135 = vsel %vm523, %v2133, %v2134
      %v2136 = vrot.slane %v2121, 5
      %v2137 = vsel %vm523, %v2134, %v2136
      %2138 = vrot.lane.b32.xlu0 %v2130, 125
      %v2139 = vpop.permute.xlu0 %2138
      %2140 = vrot.lane.b32.xlu0 %v2132, 125
      %v2141 = vpop.permute.xlu0 %2140
      %2142 = vrot.lane.b32.xlu0 %v2135, 125
      %v2143 = vpop.permute.xlu0 %2142
      %2144 = vrot.lane.b32.xlu0 %v2137, 125
      %v2145 = vpop.permute.xlu0 %2144
      %v2150 = vadd.f32 %v2111, %v2139
      %v2151 = vadd.f32 %v2112, %v2141
      %v2152 = vadd.f32 %v2113, %v2143
      %v2153 = vadd.f32 %v2114, %v2145
      %s2154 = sld [smem:[#allocation9 + $0x2d]]
      %s2155 = sld [smem:[#allocation9 + $0x5e]]
      %v2156 = vstv %s2154
      %v2157 = vmul.f32 %v2156, %v216
      %v2158 = vmul.f32 %v2156, %v217
      %v2159 = vmul.f32 %v2156, %v218
      %v2160 = vmul.f32 %v2156, %v219
      %v2161 = vmul.f32 %v2156, %v220
      %v2162 = vmul.f32 %v2156, %v221
      %v2169 = vrot.slane %v2157, 6
      %v2170 = vrot.slane %v2158, 6
      %v2171 = vsel %vm588, %v2169, %v2170
      %v2172 = vrot.slane %v2159, 6
      %v2173 = vsel %vm588, %v2170, %v2172
      %v2174 = vrot.slane %v2160, 6
      %v2175 = vrot.slane %v2161, 6
      %v2176 = vsel %vm588, %v2174, %v2175
      %v2177 = vrot.slane %v2162, 6
      %v2178 = vsel %vm588, %v2175, %v2177
      %2179 = vrot.lane.b32.xlu0 %v2171, 125
      %v2180 = vpop.permute.xlu0 %2179
      %2181 = vrot.lane.b32.xlu0 %v2173, 125
      %v2182 = vpop.permute.xlu0 %2181
      %2183 = vrot.lane.b32.xlu0 %v2176, 125
      %v2184 = vpop.permute.xlu0 %2183
      %2185 = vrot.lane.b32.xlu0 %v2178, 125
      %v2186 = vpop.permute.xlu0 %2185
      %v2191 = vadd.f32 %v2150, %v2180
      %v2192 = vadd.f32 %v2151, %v2182
      %v2193 = vadd.f32 %v2152, %v2184
      %v2194 = vadd.f32 %v2153, %v2186
      %v2195 = vstv %s2155
      %v2196 = vmul.f32 %v2195, %v222
      %v2197 = vmul.f32 %v2195, %v223
      %v2198 = vmul.f32 %v2195, %v224
      %v2199 = vmul.f32 %v2195, %v225
      %v2200 = vmul.f32 %v2195, %v226
      %v2201 = vmul.f32 %v2195, %v227
      %v2208 = vrot.slane %v2196, 6
      %v2209 = vrot.slane %v2197, 6
      %v2210 = vsel %vm588, %v2208, %v2209
      %v2211 = vrot.slane %v2198, 6
      %v2212 = vsel %vm588, %v2209, %v2211
      %v2213 = vrot.slane %v2199, 6
      %v2214 = vrot.slane %v2200, 6
      %v2215 = vsel %vm588, %v2213, %v2214
      %v2216 = vrot.slane %v2201, 6
      %v2217 = vsel %vm588, %v2214, %v2216
      %2218 = vrot.lane.b32.xlu0 %v2210, 125
      %v2219 = vpop.permute.xlu0 %2218
      %2220 = vrot.lane.b32.xlu0 %v2212, 125
      %v2221 = vpop.permute.xlu0 %2220
      %2222 = vrot.lane.b32.xlu0 %v2215, 125
      %v2223 = vpop.permute.xlu0 %2222
      %2224 = vrot.lane.b32.xlu0 %v2217, 125
      %v2225 = vpop.permute.xlu0 %2224
      %v2230 = vadd.f32 %v2191, %v2219
      %v2231 = vadd.f32 %v2192, %v2221
      %v2232 = vadd.f32 %v2193, %v2223
      %v2233 = vadd.f32 %v2194, %v2225
      %s2234 = sld [smem:[#allocation9 + $0x4]]
      %s2235 = sld [smem:[#allocation9 + $0x35]]
      %v2236 = vstv %s2234
      %v2237 = vmul.f32 %v2236, %v216
      %v2238 = vmul.f32 %v2236, %v217
      %v2239 = vmul.f32 %v2236, %v219
      %v2240 = vmul.f32 %v2236, %v220
      %2245 = vrot.lane.b32.xlu0 %v2237, 124
      %v2246 = vpop.permute.xlu0 %2245
      %2247 = vrot.lane.b32.xlu0 %v2238, 124
      %v2248 = vpop.permute.xlu0 %2247
      %2249 = vrot.lane.b32.xlu0 %v2239, 124
      %v2250 = vpop.permute.xlu0 %2249
      %2251 = vrot.lane.b32.xlu0 %v2240, 124
      %v2252 = vpop.permute.xlu0 %2251
      %v2257 = vadd.f32 %v2230, %v2246
      %v2258 = vadd.f32 %v2231, %v2248
      %v2259 = vadd.f32 %v2232, %v2250
      %v2260 = vadd.f32 %v2233, %v2252
      %v2261 = vstv %s2235
      %v2262 = vmul.f32 %v2261, %v222
      %v2263 = vmul.f32 %v2261, %v223
      %v2264 = vmul.f32 %v2261, %v225
      %v2265 = vmul.f32 %v2261, %v226
      %2270 = vrot.lane.b32.xlu0 %v2262, 124
      %v2271 = vpop.permute.xlu0 %2270
      %2272 = vrot.lane.b32.xlu0 %v2263, 124
      %v2273 = vpop.permute.xlu0 %2272
      %2274 = vrot.lane.b32.xlu0 %v2264, 124
      %v2275 = vpop.permute.xlu0 %2274
      %2276 = vrot.lane.b32.xlu0 %v2265, 124
      %v2277 = vpop.permute.xlu0 %2276
      %v2282 = vadd.f32 %v2257, %v2271
      %v2283 = vadd.f32 %v2258, %v2273
      %v2284 = vadd.f32 %v2259, %v2275
      %v2285 = vadd.f32 %v2260, %v2277
      %s2286 = sld [smem:[#allocation9 + $0xb]]
      %s2287 = sld [smem:[#allocation9 + $0x3c]]
      %v2288 = vstv %s2286
      %v2289 = vmul.f32 %v2288, %v216
      %v2290 = vmul.f32 %v2288, %v217
      %v2291 = vmul.f32 %v2288, %v218
      %v2292 = vmul.f32 %v2288, %v219
      %v2293 = vmul.f32 %v2288, %v220
      %v2294 = vmul.f32 %v2288, %v221
      %v2301 = vrot.slane %v2289, 1
      %v2302 = vrot.slane %v2290, 1
      %v2303 = vsel %vm263, %v2301, %v2302
      %v2304 = vrot.slane %v2291, 1
      %v2305 = vsel %vm263, %v2302, %v2304
      %v2306 = vrot.slane %v2292, 1
      %v2307 = vrot.slane %v2293, 1
      %v2308 = vsel %vm263, %v2306, %v2307
      %v2309 = vrot.slane %v2294, 1
      %v2310 = vsel %vm263, %v2307, %v2309
      %2311 = vrot.lane.b32.xlu0 %v2303, 124
      %v2312 = vpop.permute.xlu0 %2311
      %2313 = vrot.lane.b32.xlu0 %v2305, 124
      %v2314 = vpop.permute.xlu0 %2313
      %2315 = vrot.lane.b32.xlu0 %v2308, 124
      %v2316 = vpop.permute.xlu0 %2315
      %2317 = vrot.lane.b32.xlu0 %v2310, 124
      %v2318 = vpop.permute.xlu0 %2317
      %v2323 = vadd.f32 %v2282, %v2312
      %v2324 = vadd.f32 %v2283, %v2314
      %v2325 = vadd.f32 %v2284, %v2316
      %v2326 = vadd.f32 %v2285, %v2318
      %v2327 = vstv %s2287
      %v2328 = vmul.f32 %v2327, %v222
      %v2329 = vmul.f32 %v2327, %v223
      %v2330 = vmul.f32 %v2327, %v224
      %v2331 = vmul.f32 %v2327, %v225
      %v2332 = vmul.f32 %v2327, %v226
      %v2333 = vmul.f32 %v2327, %v227
      %v2340 = vrot.slane %v2328, 1
      %v2341 = vrot.slane %v2329, 1
      %v2342 = vsel %vm263, %v2340, %v2341
      %v2343 = vrot.slane %v2330, 1
      %v2344 = vsel %vm263, %v2341, %v2343
      %v2345 = vrot.slane %v2331, 1
      %v2346 = vrot.slane %v2332, 1
      %v2347 = vsel %vm263, %v2345, %v2346
      %v2348 = vrot.slane %v2333, 1
      %v2349 = vsel %vm263, %v2346, %v2348
      %2350 = vrot.lane.b32.xlu0 %v2342, 124
      %v2351 = vpop.permute.xlu0 %2350
      %2352 = vrot.lane.b32.xlu0 %v2344, 124
      %v2353 = vpop.permute.xlu0 %2352
      %2354 = vrot.lane.b32.xlu0 %v2347, 124
      %v2355 = vpop.permute.xlu0 %2354
      %2356 = vrot.lane.b32.xlu0 %v2349, 124
      %v2357 = vpop.permute.xlu0 %2356
      %v2362 = vadd.f32 %v2323, %v2351
      %v2363 = vadd.f32 %v2324, %v2353
      %v2364 = vadd.f32 %v2325, %v2355
      %v2365 = vadd.f32 %v2326, %v2357
      %s2366 = sld [smem:[#allocation9 + $0x12]]
      %s2367 = sld [smem:[#allocation9 + $0x43]]
      %v2368 = vstv %s2366
      %v2369 = vmul.f32 %v2368, %v216
      %v2370 = vmul.f32 %v2368, %v217
      %v2371 = vmul.f32 %v2368, %v218
      %v2372 = vmul.f32 %v2368, %v219
      %v2373 = vmul.f32 %v2368, %v220
      %v2374 = vmul.f32 %v2368, %v221
      %v2381 = vrot.slane %v2369, 2
      %v2382 = vrot.slane %v2370, 2
      %v2383 = vsel %vm328, %v2381, %v2382
      %v2384 = vrot.slane %v2371, 2
      %v2385 = vsel %vm328, %v2382, %v2384
      %v2386 = vrot.slane %v2372, 2
      %v2387 = vrot.slane %v2373, 2
      %v2388 = vsel %vm328, %v2386, %v2387
      %v2389 = vrot.slane %v2374, 2
      %v2390 = vsel %vm328, %v2387, %v2389
      %2391 = vrot.lane.b32.xlu0 %v2383, 124
      %v2392 = vpop.permute.xlu0 %2391
      %2393 = vrot.lane.b32.xlu0 %v2385, 124
      %v2394 = vpop.permute.xlu0 %2393
      %2395 = vrot.lane.b32.xlu0 %v2388, 124
      %v2396 = vpop.permute.xlu0 %2395
      %2397 = vrot.lane.b32.xlu0 %v2390, 124
      %v2398 = vpop.permute.xlu0 %2397
      %v2403 = vadd.f32 %v2362, %v2392
      %v2404 = vadd.f32 %v2363, %v2394
      %v2405 = vadd.f32 %v2364, %v2396
      %v2406 = vadd.f32 %v2365, %v2398
      %v2407 = vstv %s2367
      %v2408 = vmul.f32 %v2407, %v222
      %v2409 = vmul.f32 %v2407, %v223
      %v2410 = vmul.f32 %v2407, %v224
      %v2411 = vmul.f32 %v2407, %v225
      %v2412 = vmul.f32 %v2407, %v226
      %v2413 = vmul.f32 %v2407, %v227
      %v2420 = vrot.slane %v2408, 2
      %v2421 = vrot.slane %v2409, 2
      %v2422 = vsel %vm328, %v2420, %v2421
      %v2423 = vrot.slane %v2410, 2
      %v2424 = vsel %vm328, %v2421, %v2423
      %v2425 = vrot.slane %v2411, 2
      %v2426 = vrot.slane %v2412, 2
      %v2427 = vsel %vm328, %v2425, %v2426
      %v2428 = vrot.slane %v2413, 2
      %v2429 = vsel %vm328, %v2426, %v2428
      %2430 = vrot.lane.b32.xlu0 %v2422, 124
      %v2431 = vpop.permute.xlu0 %2430
      %2432 = vrot.lane.b32.xlu0 %v2424, 124
      %v2433 = vpop.permute.xlu0 %2432
      %2434 = vrot.lane.b32.xlu0 %v2427, 124
      %v2435 = vpop.permute.xlu0 %2434
      %2436 = vrot.lane.b32.xlu0 %v2429, 124
      %v2437 = vpop.permute.xlu0 %2436
      %v2442 = vadd.f32 %v2403, %v2431
      %v2443 = vadd.f32 %v2404, %v2433
      %v2444 = vadd.f32 %v2405, %v2435
      %v2445 = vadd.f32 %v2406, %v2437
      %s2446 = sld [smem:[#allocation9 + $0x19]]
      %s2447 = sld [smem:[#allocation9 + $0x4a]]
      %v2448 = vstv %s2446
      %v2449 = vmul.f32 %v2448, %v216
      %v2450 = vmul.f32 %v2448, %v217
      %v2451 = vmul.f32 %v2448, %v218
      %v2452 = vmul.f32 %v2448, %v219
      %v2453 = vmul.f32 %v2448, %v220
      %v2454 = vmul.f32 %v2448, %v221
      %v2461 = vrot.slane %v2449, 3
      %v2462 = vrot.slane %v2450, 3
      %v2463 = vsel %vm393, %v2461, %v2462
      %v2464 = vrot.slane %v2451, 3
      %v2465 = vsel %vm393, %v2462, %v2464
      %v2466 = vrot.slane %v2452, 3
      %v2467 = vrot.slane %v2453, 3
      %v2468 = vsel %vm393, %v2466, %v2467
      %v2469 = vrot.slane %v2454, 3
      %v2470 = vsel %vm393, %v2467, %v2469
      %2471 = vrot.lane.b32.xlu0 %v2463, 124
      %v2472 = vpop.permute.xlu0 %2471
      %2473 = vrot.lane.b32.xlu0 %v2465, 124
      %v2474 = vpop.permute.xlu0 %2473
      %2475 = vrot.lane.b32.xlu0 %v2468, 124
      %v2476 = vpop.permute.xlu0 %2475
      %2477 = vrot.lane.b32.xlu0 %v2470, 124
      %v2478 = vpop.permute.xlu0 %2477
      %v2483 = vadd.f32 %v2442, %v2472
      %v2484 = vadd.f32 %v2443, %v2474
      %v2485 = vadd.f32 %v2444, %v2476
      %v2486 = vadd.f32 %v2445, %v2478
      %v2487 = vstv %s2447
      %v2488 = vmul.f32 %v2487, %v222
      %v2489 = vmul.f32 %v2487, %v223
      %v2490 = vmul.f32 %v2487, %v224
      %v2491 = vmul.f32 %v2487, %v225
      %v2492 = vmul.f32 %v2487, %v226
      %v2493 = vmul.f32 %v2487, %v227
      %v2500 = vrot.slane %v2488, 3
      %v2501 = vrot.slane %v2489, 3
      %v2502 = vsel %vm393, %v2500, %v2501
      %v2503 = vrot.slane %v2490, 3
      %v2504 = vsel %vm393, %v2501, %v2503
      %v2505 = vrot.slane %v2491, 3
      %v2506 = vrot.slane %v2492, 3
      %v2507 = vsel %vm393, %v2505, %v2506
      %v2508 = vrot.slane %v2493, 3
      %v2509 = vsel %vm393, %v2506, %v2508
      %2510 = vrot.lane.b32.xlu0 %v2502, 124
      %v2511 = vpop.permute.xlu0 %2510
      %2512 = vrot.lane.b32.xlu0 %v2504, 124
      %v2513 = vpop.permute.xlu0 %2512
      %2514 = vrot.lane.b32.xlu0 %v2507, 124
      %v2515 = vpop.permute.xlu0 %2514
      %2516 = vrot.lane.b32.xlu0 %v2509, 124
      %v2517 = vpop.permute.xlu0 %2516
      %v2522 = vadd.f32 %v2483, %v2511
      %v2523 = vadd.f32 %v2484, %v2513
      %v2524 = vadd.f32 %v2485, %v2515
      %v2525 = vadd.f32 %v2486, %v2517
      %s2526 = sld [smem:[#allocation9 + $0x20]]
      %s2527 = sld [smem:[#allocation9 + $0x51]]
      %v2528 = vstv %s2526
      %v2529 = vmul.f32 %v2528, %v216
      %v2530 = vmul.f32 %v2528, %v217
      %v2531 = vmul.f32 %v2528, %v218
      %v2532 = vmul.f32 %v2528, %v219
      %v2533 = vmul.f32 %v2528, %v220
      %v2534 = vmul.f32 %v2528, %v221
      %v2541 = vrot.slane %v2529, 4
      %v2542 = vrot.slane %v2530, 4
      %v2543 = vsel %vm458, %v2541, %v2542
      %v2544 = vrot.slane %v2531, 4
      %v2545 = vsel %vm458, %v2542, %v2544
      %v2546 = vrot.slane %v2532, 4
      %v2547 = vrot.slane %v2533, 4
      %v2548 = vsel %vm458, %v2546, %v2547
      %v2549 = vrot.slane %v2534, 4
      %v2550 = vsel %vm458, %v2547, %v2549
      %2551 = vrot.lane.b32.xlu0 %v2543, 124
      %v2552 = vpop.permute.xlu0 %2551
      %2553 = vrot.lane.b32.xlu0 %v2545, 124
      %v2554 = vpop.permute.xlu0 %2553
      %2555 = vrot.lane.b32.xlu0 %v2548, 124
      %v2556 = vpop.permute.xlu0 %2555
      %2557 = vrot.lane.b32.xlu0 %v2550, 124
      %v2558 = vpop.permute.xlu0 %2557
      %v2563 = vadd.f32 %v2522, %v2552
      %v2564 = vadd.f32 %v2523, %v2554
      %v2565 = vadd.f32 %v2524, %v2556
      %v2566 = vadd.f32 %v2525, %v2558
      %v2567 = vstv %s2527
      %v2568 = vmul.f32 %v2567, %v222
      %v2569 = vmul.f32 %v2567, %v223
      %v2570 = vmul.f32 %v2567, %v224
      %v2571 = vmul.f32 %v2567, %v225
      %v2572 = vmul.f32 %v2567, %v226
      %v2573 = vmul.f32 %v2567, %v227
      %v2580 = vrot.slane %v2568, 4
      %v2581 = vrot.slane %v2569, 4
      %v2582 = vsel %vm458, %v2580, %v2581
      %v2583 = vrot.slane %v2570, 4
      %v2584 = vsel %vm458, %v2581, %v2583
      %v2585 = vrot.slane %v2571, 4
      %v2586 = vrot.slane %v2572, 4
      %v2587 = vsel %vm458, %v2585, %v2586
      %v2588 = vrot.slane %v2573, 4
      %v2589 = vsel %vm458, %v2586, %v2588
      %2590 = vrot.lane.b32.xlu0 %v2582, 124
      %v2591 = vpop.permute.xlu0 %2590
      %2592 = vrot.lane.b32.xlu0 %v2584, 124
      %v2593 = vpop.permute.xlu0 %2592
      %2594 = vrot.lane.b32.xlu0 %v2587, 124
      %v2595 = vpop.permute.xlu0 %2594
      %2596 = vrot.lane.b32.xlu0 %v2589, 124
      %v2597 = vpop.permute.xlu0 %2596
      %v2602 = vadd.f32 %v2563, %v2591
      %v2603 = vadd.f32 %v2564, %v2593
      %v2604 = vadd.f32 %v2565, %v2595
      %v2605 = vadd.f32 %v2566, %v2597
      %s2606 = sld [smem:[#allocation9 + $0x27]]
      %s2607 = sld [smem:[#allocation9 + $0x58]]
      %v2608 = vstv %s2606
      %v2609 = vmul.f32 %v2608, %v216
      %v2610 = vmul.f32 %v2608, %v217
      %v2611 = vmul.f32 %v2608, %v218
      %v2612 = vmul.f32 %v2608, %v219
      %v2613 = vmul.f32 %v2608, %v220
      %v2614 = vmul.f32 %v2608, %v221
      %v2621 = vrot.slane %v2609, 5
      %v2622 = vrot.slane %v2610, 5
      %v2623 = vsel %vm523, %v2621, %v2622
      %v2624 = vrot.slane %v2611, 5
      %v2625 = vsel %vm523, %v2622, %v2624
      %v2626 = vrot.slane %v2612, 5
      %v2627 = vrot.slane %v2613, 5
      %v2628 = vsel %vm523, %v2626, %v2627
      %v2629 = vrot.slane %v2614, 5
      %v2630 = vsel %vm523, %v2627, %v2629
      %2631 = vrot.lane.b32.xlu0 %v2623, 124
      %v2632 = vpop.permute.xlu0 %2631
      %2633 = vrot.lane.b32.xlu0 %v2625, 124
      %v2634 = vpop.permute.xlu0 %2633
      %2635 = vrot.lane.b32.xlu0 %v2628, 124
      %v2636 = vpop.permute.xlu0 %2635
      %2637 = vrot.lane.b32.xlu0 %v2630, 124
      %v2638 = vpop.permute.xlu0 %2637
      %v2643 = vadd.f32 %v2602, %v2632
      %v2644 = vadd.f32 %v2603, %v2634
      %v2645 = vadd.f32 %v2604, %v2636
      %v2646 = vadd.f32 %v2605, %v2638
      %v2647 = vstv %s2607
      %v2648 = vmul.f32 %v2647, %v222
      %v2649 = vmul.f32 %v2647, %v223
      %v2650 = vmul.f32 %v2647, %v224
      %v2651 = vmul.f32 %v2647, %v225
      %v2652 = vmul.f32 %v2647, %v226
      %v2653 = vmul.f32 %v2647, %v227
      %v2660 = vrot.slane %v2648, 5
      %v2661 = vrot.slane %v2649, 5
      %v2662 = vsel %vm523, %v2660, %v2661
      %v2663 = vrot.slane %v2650, 5
      %v2664 = vsel %vm523, %v2661, %v2663
      %v2665 = vrot.slane %v2651, 5
      %v2666 = vrot.slane %v2652, 5
      %v2667 = vsel %vm523, %v2665, %v2666
      %v2668 = vrot.slane %v2653, 5
      %v2669 = vsel %vm523, %v2666, %v2668
      %2670 = vrot.lane.b32.xlu0 %v2662, 124
      %v2671 = vpop.permute.xlu0 %2670
      %2672 = vrot.lane.b32.xlu0 %v2664, 124
      %v2673 = vpop.permute.xlu0 %2672
      %2674 = vrot.lane.b32.xlu0 %v2667, 124
      %v2675 = vpop.permute.xlu0 %2674
      %2676 = vrot.lane.b32.xlu0 %v2669, 124
      %v2677 = vpop.permute.xlu0 %2676
      %v2682 = vadd.f32 %v2643, %v2671
      %v2683 = vadd.f32 %v2644, %v2673
      %v2684 = vadd.f32 %v2645, %v2675
      %v2685 = vadd.f32 %v2646, %v2677
      %s2686 = sld [smem:[#allocation9 + $0x2e]]
      %s2687 = sld [smem:[#allocation9 + $0x5f]]
      %v2688 = vstv %s2686
      %v2689 = vmul.f32 %v2688, %v216
      %v2690 = vmul.f32 %v2688, %v217
      %v2691 = vmul.f32 %v2688, %v218
      %v2692 = vmul.f32 %v2688, %v219
      %v2693 = vmul.f32 %v2688, %v220
      %v2694 = vmul.f32 %v2688, %v221
      %v2701 = vrot.slane %v2689, 6
      %v2702 = vrot.slane %v2690, 6
      %v2703 = vsel %vm588, %v2701, %v2702
      %v2704 = vrot.slane %v2691, 6
      %v2705 = vsel %vm588, %v2702, %v2704
      %v2706 = vrot.slane %v2692, 6
      %v2707 = vrot.slane %v2693, 6
      %v2708 = vsel %vm588, %v2706, %v2707
      %v2709 = vrot.slane %v2694, 6
      %v2710 = vsel %vm588, %v2707, %v2709
      %2711 = vrot.lane.b32.xlu0 %v2703, 124
      %v2712 = vpop.permute.xlu0 %2711
      %2713 = vrot.lane.b32.xlu0 %v2705, 124
      %v2714 = vpop.permute.xlu0 %2713
      %2715 = vrot.lane.b32.xlu0 %v2708, 124
      %v2716 = vpop.permute.xlu0 %2715
      %2717 = vrot.lane.b32.xlu0 %v2710, 124
      %v2718 = vpop.permute.xlu0 %2717
      %v2723 = vadd.f32 %v2682, %v2712
      %v2724 = vadd.f32 %v2683, %v2714
      %v2725 = vadd.f32 %v2684, %v2716
      %v2726 = vadd.f32 %v2685, %v2718
      %v2727 = vstv %s2687
      %v2728 = vmul.f32 %v2727, %v222
      %v2729 = vmul.f32 %v2727, %v223
      %v2730 = vmul.f32 %v2727, %v224
      %v2731 = vmul.f32 %v2727, %v225
      %v2732 = vmul.f32 %v2727, %v226
      %v2733 = vmul.f32 %v2727, %v227
      %v2740 = vrot.slane %v2728, 6
      %v2741 = vrot.slane %v2729, 6
      %v2742 = vsel %vm588, %v2740, %v2741
      %v2743 = vrot.slane %v2730, 6
      %v2744 = vsel %vm588, %v2741, %v2743
      %v2745 = vrot.slane %v2731, 6
      %v2746 = vrot.slane %v2732, 6
      %v2747 = vsel %vm588, %v2745, %v2746
      %v2748 = vrot.slane %v2733, 6
      %v2749 = vsel %vm588, %v2746, %v2748
      %2750 = vrot.lane.b32.xlu0 %v2742, 124
      %v2751 = vpop.permute.xlu0 %2750
      %2752 = vrot.lane.b32.xlu0 %v2744, 124
      %v2753 = vpop.permute.xlu0 %2752
      %2754 = vrot.lane.b32.xlu0 %v2747, 124
      %v2755 = vpop.permute.xlu0 %2754
      %2756 = vrot.lane.b32.xlu0 %v2749, 124
      %v2757 = vpop.permute.xlu0 %2756
      %v2762 = vadd.f32 %v2723, %v2751
      %v2763 = vadd.f32 %v2724, %v2753
      %v2764 = vadd.f32 %v2725, %v2755
      %v2765 = vadd.f32 %v2726, %v2757
      %s2766 = sld [smem:[#allocation9 + $0x5]]
      %s2767 = sld [smem:[#allocation9 + $0x36]]
      %v2768 = vstv %s2766
      %v2769 = vmul.f32 %v2768, %v216
      %v2770 = vmul.f32 %v2768, %v217
      %v2771 = vmul.f32 %v2768, %v219
      %v2772 = vmul.f32 %v2768, %v220
      %2777 = vrot.lane.b32.xlu0 %v2769, 123
      %v2778 = vpop.permute.xlu0 %2777
      %2779 = vrot.lane.b32.xlu0 %v2770, 123
      %v2780 = vpop.permute.xlu0 %2779
      %2781 = vrot.lane.b32.xlu0 %v2771, 123
      %v2782 = vpop.permute.xlu0 %2781
      %2783 = vrot.lane.b32.xlu0 %v2772, 123
      %v2784 = vpop.permute.xlu0 %2783
      %v2789 = vadd.f32 %v2762, %v2778
      %v2790 = vadd.f32 %v2763, %v2780
      %v2791 = vadd.f32 %v2764, %v2782
      %v2792 = vadd.f32 %v2765, %v2784
      %v2793 = vstv %s2767
      %v2794 = vmul.f32 %v2793, %v222
      %v2795 = vmul.f32 %v2793, %v223
      %v2796 = vmul.f32 %v2793, %v225
      %v2797 = vmul.f32 %v2793, %v226
      %2802 = vrot.lane.b32.xlu0 %v2794, 123
      %v2803 = vpop.permute.xlu0 %2802
      %2804 = vrot.lane.b32.xlu0 %v2795, 123
      %v2805 = vpop.permute.xlu0 %2804
      %2806 = vrot.lane.b32.xlu0 %v2796, 123
      %v2807 = vpop.permute.xlu0 %2806
      %2808 = vrot.lane.b32.xlu0 %v2797, 123
      %v2809 = vpop.permute.xlu0 %2808
      %v2814 = vadd.f32 %v2789, %v2803
      %v2815 = vadd.f32 %v2790, %v2805
      %v2816 = vadd.f32 %v2791, %v2807
      %v2817 = vadd.f32 %v2792, %v2809
      %s2818 = sld [smem:[#allocation9 + $0xc]]
      %s2819 = sld [smem:[#allocation9 + $0x3d]]
      %v2820 = vstv %s2818
      %v2821 = vmul.f32 %v2820, %v216
      %v2822 = vmul.f32 %v2820, %v217
      %v2823 = vmul.f32 %v2820, %v218
      %v2824 = vmul.f32 %v2820, %v219
      %v2825 = vmul.f32 %v2820, %v220
      %v2826 = vmul.f32 %v2820, %v221
      %v2833 = vrot.slane %v2821, 1
      %v2834 = vrot.slane %v2822, 1
      %v2835 = vsel %vm263, %v2833, %v2834
      %v2836 = vrot.slane %v2823, 1
      %v2837 = vsel %vm263, %v2834, %v2836
      %v2838 = vrot.slane %v2824, 1
      %v2839 = vrot.slane %v2825, 1
      %v2840 = vsel %vm263, %v2838, %v2839
      %v2841 = vrot.slane %v2826, 1
      %v2842 = vsel %vm263, %v2839, %v2841
      %2843 = vrot.lane.b32.xlu0 %v2835, 123
      %v2844 = vpop.permute.xlu0 %2843
      %2845 = vrot.lane.b32.xlu0 %v2837, 123
      %v2846 = vpop.permute.xlu0 %2845
      %2847 = vrot.lane.b32.xlu0 %v2840, 123
      %v2848 = vpop.permute.xlu0 %2847
      %2849 = vrot.lane.b32.xlu0 %v2842, 123
      %v2850 = vpop.permute.xlu0 %2849
      %v2855 = vadd.f32 %v2814, %v2844
      %v2856 = vadd.f32 %v2815, %v2846
      %v2857 = vadd.f32 %v2816, %v2848
      %v2858 = vadd.f32 %v2817, %v2850
      %v2859 = vstv %s2819
      %v2860 = vmul.f32 %v2859, %v222
      %v2861 = vmul.f32 %v2859, %v223
      %v2862 = vmul.f32 %v2859, %v224
      %v2863 = vmul.f32 %v2859, %v225
      %v2864 = vmul.f32 %v2859, %v226
      %v2865 = vmul.f32 %v2859, %v227
      %v2872 = vrot.slane %v2860, 1
      %v2873 = vrot.slane %v2861, 1
      %v2874 = vsel %vm263, %v2872, %v2873
      %v2875 = vrot.slane %v2862, 1
      %v2876 = vsel %vm263, %v2873, %v2875
      %v2877 = vrot.slane %v2863, 1
      %v2878 = vrot.slane %v2864, 1
      %v2879 = vsel %vm263, %v2877, %v2878
      %v2880 = vrot.slane %v2865, 1
      %v2881 = vsel %vm263, %v2878, %v2880
      %2882 = vrot.lane.b32.xlu0 %v2874, 123
      %v2883 = vpop.permute.xlu0 %2882
      %2884 = vrot.lane.b32.xlu0 %v2876, 123
      %v2885 = vpop.permute.xlu0 %2884
      %2886 = vrot.lane.b32.xlu0 %v2879, 123
      %v2887 = vpop.permute.xlu0 %2886
      %2888 = vrot.lane.b32.xlu0 %v2881, 123
      %v2889 = vpop.permute.xlu0 %2888
      %v2894 = vadd.f32 %v2855, %v2883
      %v2895 = vadd.f32 %v2856, %v2885
      %v2896 = vadd.f32 %v2857, %v2887
      %v2897 = vadd.f32 %v2858, %v2889
      %s2898 = sld [smem:[#allocation9 + $0x13]]
      %s2899 = sld [smem:[#allocation9 + $0x44]]
      %v2900 = vstv %s2898
      %v2901 = vmul.f32 %v2900, %v216
      %v2902 = vmul.f32 %v2900, %v217
      %v2903 = vmul.f32 %v2900, %v218
      %v2904 = vmul.f32 %v2900, %v219
      %v2905 = vmul.f32 %v2900, %v220
      %v2906 = vmul.f32 %v2900, %v221
      %v2913 = vrot.slane %v2901, 2
      %v2914 = vrot.slane %v2902, 2
      %v2915 = vsel %vm328, %v2913, %v2914
      %v2916 = vrot.slane %v2903, 2
      %v2917 = vsel %vm328, %v2914, %v2916
      %v2918 = vrot.slane %v2904, 2
      %v2919 = vrot.slane %v2905, 2
      %v2920 = vsel %vm328, %v2918, %v2919
      %v2921 = vrot.slane %v2906, 2
      %v2922 = vsel %vm328, %v2919, %v2921
      %2923 = vrot.lane.b32.xlu0 %v2915, 123
      %v2924 = vpop.permute.xlu0 %2923
      %2925 = vrot.lane.b32.xlu0 %v2917, 123
      %v2926 = vpop.permute.xlu0 %2925
      %2927 = vrot.lane.b32.xlu0 %v2920, 123
      %v2928 = vpop.permute.xlu0 %2927
      %2929 = vrot.lane.b32.xlu0 %v2922, 123
      %v2930 = vpop.permute.xlu0 %2929
      %v2935 = vadd.f32 %v2894, %v2924
      %v2936 = vadd.f32 %v2895, %v2926
      %v2937 = vadd.f32 %v2896, %v2928
      %v2938 = vadd.f32 %v2897, %v2930
      %v2939 = vstv %s2899
      %v2940 = vmul.f32 %v2939, %v222
      %v2941 = vmul.f32 %v2939, %v223
      %v2942 = vmul.f32 %v2939, %v224
      %v2943 = vmul.f32 %v2939, %v225
      %v2944 = vmul.f32 %v2939, %v226
      %v2945 = vmul.f32 %v2939, %v227
      %v2952 = vrot.slane %v2940, 2
      %v2953 = vrot.slane %v2941, 2
      %v2954 = vsel %vm328, %v2952, %v2953
      %v2955 = vrot.slane %v2942, 2
      %v2956 = vsel %vm328, %v2953, %v2955
      %v2957 = vrot.slane %v2943, 2
      %v2958 = vrot.slane %v2944, 2
      %v2959 = vsel %vm328, %v2957, %v2958
      %v2960 = vrot.slane %v2945, 2
      %v2961 = vsel %vm328, %v2958, %v2960
      %2962 = vrot.lane.b32.xlu0 %v2954, 123
      %v2963 = vpop.permute.xlu0 %2962
      %2964 = vrot.lane.b32.xlu0 %v2956, 123
      %v2965 = vpop.permute.xlu0 %2964
      %2966 = vrot.lane.b32.xlu0 %v2959, 123
      %v2967 = vpop.permute.xlu0 %2966
      %2968 = vrot.lane.b32.xlu0 %v2961, 123
      %v2969 = vpop.permute.xlu0 %2968
      %v2974 = vadd.f32 %v2935, %v2963
      %v2975 = vadd.f32 %v2936, %v2965
      %v2976 = vadd.f32 %v2937, %v2967
      %v2977 = vadd.f32 %v2938, %v2969
      %s2978 = sld [smem:[#allocation9 + $0x1a]]
      %s2979 = sld [smem:[#allocation9 + $0x4b]]
      %v2980 = vstv %s2978
      %v2981 = vmul.f32 %v2980, %v216
      %v2982 = vmul.f32 %v2980, %v217
      %v2983 = vmul.f32 %v2980, %v218
      %v2984 = vmul.f32 %v2980, %v219
      %v2985 = vmul.f32 %v2980, %v220
      %v2986 = vmul.f32 %v2980, %v221
      %v2993 = vrot.slane %v2981, 3
      %v2994 = vrot.slane %v2982, 3
      %v2995 = vsel %vm393, %v2993, %v2994
      %v2996 = vrot.slane %v2983, 3
      %v2997 = vsel %vm393, %v2994, %v2996
      %v2998 = vrot.slane %v2984, 3
      %v2999 = vrot.slane %v2985, 3
      %v3000 = vsel %vm393, %v2998, %v2999
      %v3001 = vrot.slane %v2986, 3
      %v3002 = vsel %vm393, %v2999, %v3001
      %3003 = vrot.lane.b32.xlu0 %v2995, 123
      %v3004 = vpop.permute.xlu0 %3003
      %3005 = vrot.lane.b32.xlu0 %v2997, 123
      %v3006 = vpop.permute.xlu0 %3005
      %3007 = vrot.lane.b32.xlu0 %v3000, 123
      %v3008 = vpop.permute.xlu0 %3007
      %3009 = vrot.lane.b32.xlu0 %v3002, 123
      %v3010 = vpop.permute.xlu0 %3009
      %v3015 = vadd.f32 %v2974, %v3004
      %v3016 = vadd.f32 %v2975, %v3006
      %v3017 = vadd.f32 %v2976, %v3008
      %v3018 = vadd.f32 %v2977, %v3010
      %v3019 = vstv %s2979
      %v3020 = vmul.f32 %v3019, %v222
      %v3021 = vmul.f32 %v3019, %v223
      %v3022 = vmul.f32 %v3019, %v224
      %v3023 = vmul.f32 %v3019, %v225
      %v3024 = vmul.f32 %v3019, %v226
      %v3025 = vmul.f32 %v3019, %v227
      %v3032 = vrot.slane %v3020, 3
      %v3033 = vrot.slane %v3021, 3
      %v3034 = vsel %vm393, %v3032, %v3033
      %v3035 = vrot.slane %v3022, 3
      %v3036 = vsel %vm393, %v3033, %v3035
      %v3037 = vrot.slane %v3023, 3
      %v3038 = vrot.slane %v3024, 3
      %v3039 = vsel %vm393, %v3037, %v3038
      %v3040 = vrot.slane %v3025, 3
      %v3041 = vsel %vm393, %v3038, %v3040
      %3042 = vrot.lane.b32.xlu0 %v3034, 123
      %v3043 = vpop.permute.xlu0 %3042
      %3044 = vrot.lane.b32.xlu0 %v3036, 123
      %v3045 = vpop.permute.xlu0 %3044
      %3046 = vrot.lane.b32.xlu0 %v3039, 123
      %v3047 = vpop.permute.xlu0 %3046
      %3048 = vrot.lane.b32.xlu0 %v3041, 123
      %v3049 = vpop.permute.xlu0 %3048
      %v3054 = vadd.f32 %v3015, %v3043
      %v3055 = vadd.f32 %v3016, %v3045
      %v3056 = vadd.f32 %v3017, %v3047
      %v3057 = vadd.f32 %v3018, %v3049
      %s3058 = sld [smem:[#allocation9 + $0x21]]
      %s3059 = sld [smem:[#allocation9 + $0x52]]
      %v3060 = vstv %s3058
      %v3061 = vmul.f32 %v3060, %v216
      %v3062 = vmul.f32 %v3060, %v217
      %v3063 = vmul.f32 %v3060, %v218
      %v3064 = vmul.f32 %v3060, %v219
      %v3065 = vmul.f32 %v3060, %v220
      %v3066 = vmul.f32 %v3060, %v221
      %v3073 = vrot.slane %v3061, 4
      %v3074 = vrot.slane %v3062, 4
      %v3075 = vsel %vm458, %v3073, %v3074
      %v3076 = vrot.slane %v3063, 4
      %v3077 = vsel %vm458, %v3074, %v3076
      %v3078 = vrot.slane %v3064, 4
      %v3079 = vrot.slane %v3065, 4
      %v3080 = vsel %vm458, %v3078, %v3079
      %v3081 = vrot.slane %v3066, 4
      %v3082 = vsel %vm458, %v3079, %v3081
      %3083 = vrot.lane.b32.xlu0 %v3075, 123
      %v3084 = vpop.permute.xlu0 %3083
      %3085 = vrot.lane.b32.xlu0 %v3077, 123
      %v3086 = vpop.permute.xlu0 %3085
      %3087 = vrot.lane.b32.xlu0 %v3080, 123
      %v3088 = vpop.permute.xlu0 %3087
      %3089 = vrot.lane.b32.xlu0 %v3082, 123
      %v3090 = vpop.permute.xlu0 %3089
      %v3095 = vadd.f32 %v3054, %v3084
      %v3096 = vadd.f32 %v3055, %v3086
      %v3097 = vadd.f32 %v3056, %v3088
      %v3098 = vadd.f32 %v3057, %v3090
      %v3099 = vstv %s3059
      %v3100 = vmul.f32 %v3099, %v222
      %v3101 = vmul.f32 %v3099, %v223
      %v3102 = vmul.f32 %v3099, %v224
      %v3103 = vmul.f32 %v3099, %v225
      %v3104 = vmul.f32 %v3099, %v226
      %v3105 = vmul.f32 %v3099, %v227
      %v3112 = vrot.slane %v3100, 4
      %v3113 = vrot.slane %v3101, 4
      %v3114 = vsel %vm458, %v3112, %v3113
      %v3115 = vrot.slane %v3102, 4
      %v3116 = vsel %vm458, %v3113, %v3115
      %v3117 = vrot.slane %v3103, 4
      %v3118 = vrot.slane %v3104, 4
      %v3119 = vsel %vm458, %v3117, %v3118
      %v3120 = vrot.slane %v3105, 4
      %v3121 = vsel %vm458, %v3118, %v3120
      %3122 = vrot.lane.b32.xlu0 %v3114, 123
      %v3123 = vpop.permute.xlu0 %3122
      %3124 = vrot.lane.b32.xlu0 %v3116, 123
      %v3125 = vpop.permute.xlu0 %3124
      %3126 = vrot.lane.b32.xlu0 %v3119, 123
      %v3127 = vpop.permute.xlu0 %3126
      %3128 = vrot.lane.b32.xlu0 %v3121, 123
      %v3129 = vpop.permute.xlu0 %3128
      %v3134 = vadd.f32 %v3095, %v3123
      %v3135 = vadd.f32 %v3096, %v3125
      %v3136 = vadd.f32 %v3097, %v3127
      %v3137 = vadd.f32 %v3098, %v3129
      %s3138 = sld [smem:[#allocation9 + $0x28]]
      %s3139 = sld [smem:[#allocation9 + $0x59]]
      %v3140 = vstv %s3138
      %v3141 = vmul.f32 %v3140, %v216
      %v3142 = vmul.f32 %v3140, %v217
      %v3143 = vmul.f32 %v3140, %v218
      %v3144 = vmul.f32 %v3140, %v219
      %v3145 = vmul.f32 %v3140, %v220
      %v3146 = vmul.f32 %v3140, %v221
      %v3153 = vrot.slane %v3141, 5
      %v3154 = vrot.slane %v3142, 5
      %v3155 = vsel %vm523, %v3153, %v3154
      %v3156 = vrot.slane %v3143, 5
      %v3157 = vsel %vm523, %v3154, %v3156
      %v3158 = vrot.slane %v3144, 5
      %v3159 = vrot.slane %v3145, 5
      %v3160 = vsel %vm523, %v3158, %v3159
      %v3161 = vrot.slane %v3146, 5
      %v3162 = vsel %vm523, %v3159, %v3161
      %3163 = vrot.lane.b32.xlu0 %v3155, 123
      %v3164 = vpop.permute.xlu0 %3163
      %3165 = vrot.lane.b32.xlu0 %v3157, 123
      %v3166 = vpop.permute.xlu0 %3165
      %3167 = vrot.lane.b32.xlu0 %v3160, 123
      %v3168 = vpop.permute.xlu0 %3167
      %3169 = vrot.lane.b32.xlu0 %v3162, 123
      %v3170 = vpop.permute.xlu0 %3169
      %v3175 = vadd.f32 %v3134, %v3164
      %v3176 = vadd.f32 %v3135, %v3166
      %v3177 = vadd.f32 %v3136, %v3168
      %v3178 = vadd.f32 %v3137, %v3170
      %v3179 = vstv %s3139
      %v3180 = vmul.f32 %v3179, %v222
      %v3181 = vmul.f32 %v3179, %v223
      %v3182 = vmul.f32 %v3179, %v224
      %v3183 = vmul.f32 %v3179, %v225
      %v3184 = vmul.f32 %v3179, %v226
      %v3185 = vmul.f32 %v3179, %v227
      %v3192 = vrot.slane %v3180, 5
      %v3193 = vrot.slane %v3181, 5
      %v3194 = vsel %vm523, %v3192, %v3193
      %v3195 = vrot.slane %v3182, 5
      %v3196 = vsel %vm523, %v3193, %v3195
      %v3197 = vrot.slane %v3183, 5
      %v3198 = vrot.slane %v3184, 5
      %v3199 = vsel %vm523, %v3197, %v3198
      %v3200 = vrot.slane %v3185, 5
      %v3201 = vsel %vm523, %v3198, %v3200
      %3202 = vrot.lane.b32.xlu0 %v3194, 123
      %v3203 = vpop.permute.xlu0 %3202
      %3204 = vrot.lane.b32.xlu0 %v3196, 123
      %v3205 = vpop.permute.xlu0 %3204
      %3206 = vrot.lane.b32.xlu0 %v3199, 123
      %v3207 = vpop.permute.xlu0 %3206
      %3208 = vrot.lane.b32.xlu0 %v3201, 123
      %v3209 = vpop.permute.xlu0 %3208
      %v3214 = vadd.f32 %v3175, %v3203
      %v3215 = vadd.f32 %v3176, %v3205
      %v3216 = vadd.f32 %v3177, %v3207
      %v3217 = vadd.f32 %v3178, %v3209
      %s3218 = sld [smem:[#allocation9 + $0x2f]]
      %s3219 = sld [smem:[#allocation9 + $0x60]]
      %v3220 = vstv %s3218
      %v3221 = vmul.f32 %v3220, %v216
      %v3222 = vmul.f32 %v3220, %v217
      %v3223 = vmul.f32 %v3220, %v218
      %v3224 = vmul.f32 %v3220, %v219
      %v3225 = vmul.f32 %v3220, %v220
      %v3226 = vmul.f32 %v3220, %v221
      %v3233 = vrot.slane %v3221, 6
      %v3234 = vrot.slane %v3222, 6
      %v3235 = vsel %vm588, %v3233, %v3234
      %v3236 = vrot.slane %v3223, 6
      %v3237 = vsel %vm588, %v3234, %v3236
      %v3238 = vrot.slane %v3224, 6
      %v3239 = vrot.slane %v3225, 6
      %v3240 = vsel %vm588, %v3238, %v3239
      %v3241 = vrot.slane %v3226, 6
      %v3242 = vsel %vm588, %v3239, %v3241
      %3243 = vrot.lane.b32.xlu0 %v3235, 123
      %v3244 = vpop.permute.xlu0 %3243
      %3245 = vrot.lane.b32.xlu0 %v3237, 123
      %v3246 = vpop.permute.xlu0 %3245
      %3247 = vrot.lane.b32.xlu0 %v3240, 123
      %v3248 = vpop.permute.xlu0 %3247
      %3249 = vrot.lane.b32.xlu0 %v3242, 123
      %v3250 = vpop.permute.xlu0 %3249
      %v3255 = vadd.f32 %v3214, %v3244
      %v3256 = vadd.f32 %v3215, %v3246
      %v3257 = vadd.f32 %v3216, %v3248
      %v3258 = vadd.f32 %v3217, %v3250
      %v3259 = vstv %s3219
      %v3260 = vmul.f32 %v3259, %v222
      %v3261 = vmul.f32 %v3259, %v223
      %v3262 = vmul.f32 %v3259, %v224
      %v3263 = vmul.f32 %v3259, %v225
      %v3264 = vmul.f32 %v3259, %v226
      %v3265 = vmul.f32 %v3259, %v227
      %v3272 = vrot.slane %v3260, 6
      %v3273 = vrot.slane %v3261, 6
      %v3274 = vsel %vm588, %v3272, %v3273
      %v3275 = vrot.slane %v3262, 6
      %v3276 = vsel %vm588, %v3273, %v3275
      %v3277 = vrot.slane %v3263, 6
      %v3278 = vrot.slane %v3264, 6
      %v3279 = vsel %vm588, %v3277, %v3278
      %v3280 = vrot.slane %v3265, 6
      %v3281 = vsel %vm588, %v3278, %v3280
      %3282 = vrot.lane.b32.xlu0 %v3274, 123
      %v3283 = vpop.permute.xlu0 %3282
      %3284 = vrot.lane.b32.xlu0 %v3276, 123
      %v3285 = vpop.permute.xlu0 %3284
      %3286 = vrot.lane.b32.xlu0 %v3279, 123
      %v3287 = vpop.permute.xlu0 %3286
      %3288 = vrot.lane.b32.xlu0 %v3281, 123
      %v3289 = vpop.permute.xlu0 %3288
      %v3294 = vadd.f32 %v3255, %v3283
      %v3295 = vadd.f32 %v3256, %v3285
      %v3296 = vadd.f32 %v3257, %v3287
      %v3297 = vadd.f32 %v3258, %v3289
      %s3298 = sld [smem:[#allocation9 + $0x6]]
      %s3299 = sld [smem:[#allocation9 + $0x37]]
      %v3300 = vstv %s3298
      %v3301 = vmul.f32 %v3300, %v216
      %v3302 = vmul.f32 %v3300, %v217
      %v3303 = vmul.f32 %v3300, %v219
      %v3304 = vmul.f32 %v3300, %v220
      %3309 = vrot.lane.b32.xlu0 %v3301, 122
      %v3310 = vpop.permute.xlu0 %3309
      %3311 = vrot.lane.b32.xlu0 %v3302, 122
      %v3312 = vpop.permute.xlu0 %3311
      %3313 = vrot.lane.b32.xlu0 %v3303, 122
      %v3314 = vpop.permute.xlu0 %3313
      %3315 = vrot.lane.b32.xlu0 %v3304, 122
      %v3316 = vpop.permute.xlu0 %3315
      %v3321 = vadd.f32 %v3294, %v3310
      %v3322 = vadd.f32 %v3295, %v3312
      %v3323 = vadd.f32 %v3296, %v3314
      %v3324 = vadd.f32 %v3297, %v3316
      %v3325 = vstv %s3299
      %v3326 = vmul.f32 %v3325, %v222
      %v3327 = vmul.f32 %v3325, %v223
      %v3328 = vmul.f32 %v3325, %v225
      %v3329 = vmul.f32 %v3325, %v226
      %3334 = vrot.lane.b32.xlu0 %v3326, 122
      %v3335 = vpop.permute.xlu0 %3334
      %3336 = vrot.lane.b32.xlu0 %v3327, 122
      %v3337 = vpop.permute.xlu0 %3336
      %3338 = vrot.lane.b32.xlu0 %v3328, 122
      %v3339 = vpop.permute.xlu0 %3338
      %3340 = vrot.lane.b32.xlu0 %v3329, 122
      %v3341 = vpop.permute.xlu0 %3340
      %v3346 = vadd.f32 %v3321, %v3335
      %v3347 = vadd.f32 %v3322, %v3337
      %v3348 = vadd.f32 %v3323, %v3339
      %v3349 = vadd.f32 %v3324, %v3341
      %s3350 = sld [smem:[#allocation9 + $0xd]]
      %s3351 = sld [smem:[#allocation9 + $0x3e]]
      %v3352 = vstv %s3350
      %v3353 = vmul.f32 %v3352, %v216
      %v3354 = vmul.f32 %v3352, %v217
      %v3355 = vmul.f32 %v3352, %v218
      %v3356 = vmul.f32 %v3352, %v219
      %v3357 = vmul.f32 %v3352, %v220
      %v3358 = vmul.f32 %v3352, %v221
      %v3365 = vrot.slane %v3353, 1
      %v3366 = vrot.slane %v3354, 1
      %v3367 = vsel %vm263, %v3365, %v3366
      %v3368 = vrot.slane %v3355, 1
      %v3369 = vsel %vm263, %v3366, %v3368
      %v3370 = vrot.slane %v3356, 1
      %v3371 = vrot.slane %v3357, 1
      %v3372 = vsel %vm263, %v3370, %v3371
      %v3373 = vrot.slane %v3358, 1
      %v3374 = vsel %vm263, %v3371, %v3373
      %3375 = vrot.lane.b32.xlu0 %v3367, 122
      %v3376 = vpop.permute.xlu0 %3375
      %3377 = vrot.lane.b32.xlu0 %v3369, 122
      %v3378 = vpop.permute.xlu0 %3377
      %3379 = vrot.lane.b32.xlu0 %v3372, 122
      %v3380 = vpop.permute.xlu0 %3379
      %3381 = vrot.lane.b32.xlu0 %v3374, 122
      %v3382 = vpop.permute.xlu0 %3381
      %v3387 = vadd.f32 %v3346, %v3376
      %v3388 = vadd.f32 %v3347, %v3378
      %v3389 = vadd.f32 %v3348, %v3380
      %v3390 = vadd.f32 %v3349, %v3382
      %v3391 = vstv %s3351
      %v3392 = vmul.f32 %v3391, %v222
      %v3393 = vmul.f32 %v3391, %v223
      %v3394 = vmul.f32 %v3391, %v224
      %v3395 = vmul.f32 %v3391, %v225
      %v3396 = vmul.f32 %v3391, %v226
      %v3397 = vmul.f32 %v3391, %v227
      %v3404 = vrot.slane %v3392, 1
      %v3405 = vrot.slane %v3393, 1
      %v3406 = vsel %vm263, %v3404, %v3405
      %v3407 = vrot.slane %v3394, 1
      %v3408 = vsel %vm263, %v3405, %v3407
      %v3409 = vrot.slane %v3395, 1
      %v3410 = vrot.slane %v3396, 1
      %v3411 = vsel %vm263, %v3409, %v3410
      %v3412 = vrot.slane %v3397, 1
      %v3413 = vsel %vm263, %v3410, %v3412
      %3414 = vrot.lane.b32.xlu0 %v3406, 122
      %v3415 = vpop.permute.xlu0 %3414
      %3416 = vrot.lane.b32.xlu0 %v3408, 122
      %v3417 = vpop.permute.xlu0 %3416
      %3418 = vrot.lane.b32.xlu0 %v3411, 122
      %v3419 = vpop.permute.xlu0 %3418
      %3420 = vrot.lane.b32.xlu0 %v3413, 122
      %v3421 = vpop.permute.xlu0 %3420
      %v3426 = vadd.f32 %v3387, %v3415
      %v3427 = vadd.f32 %v3388, %v3417
      %v3428 = vadd.f32 %v3389, %v3419
      %v3429 = vadd.f32 %v3390, %v3421
      %s3430 = sld [smem:[#allocation9 + $0x14]]
      %s3431 = sld [smem:[#allocation9 + $0x45]]
      %v3432 = vstv %s3430
      %v3433 = vmul.f32 %v3432, %v216
      %v3434 = vmul.f32 %v3432, %v217
      %v3435 = vmul.f32 %v3432, %v218
      %v3436 = vmul.f32 %v3432, %v219
      %v3437 = vmul.f32 %v3432, %v220
      %v3438 = vmul.f32 %v3432, %v221
      %v3445 = vrot.slane %v3433, 2
      %v3446 = vrot.slane %v3434, 2
      %v3447 = vsel %vm328, %v3445, %v3446
      %v3448 = vrot.slane %v3435, 2
      %v3449 = vsel %vm328, %v3446, %v3448
      %v3450 = vrot.slane %v3436, 2
      %v3451 = vrot.slane %v3437, 2
      %v3452 = vsel %vm328, %v3450, %v3451
      %v3453 = vrot.slane %v3438, 2
      %v3454 = vsel %vm328, %v3451, %v3453
      %3455 = vrot.lane.b32.xlu0 %v3447, 122
      %v3456 = vpop.permute.xlu0 %3455
      %3457 = vrot.lane.b32.xlu0 %v3449, 122
      %v3458 = vpop.permute.xlu0 %3457
      %3459 = vrot.lane.b32.xlu0 %v3452, 122
      %v3460 = vpop.permute.xlu0 %3459
      %3461 = vrot.lane.b32.xlu0 %v3454, 122
      %v3462 = vpop.permute.xlu0 %3461
      %v3467 = vadd.f32 %v3426, %v3456
      %v3468 = vadd.f32 %v3427, %v3458
      %v3469 = vadd.f32 %v3428, %v3460
      %v3470 = vadd.f32 %v3429, %v3462
      %v3471 = vstv %s3431
      %v3472 = vmul.f32 %v3471, %v222
      %v3473 = vmul.f32 %v3471, %v223
      %v3474 = vmul.f32 %v3471, %v224
      %v3475 = vmul.f32 %v3471, %v225
      %v3476 = vmul.f32 %v3471, %v226
      %v3477 = vmul.f32 %v3471, %v227
      %v3484 = vrot.slane %v3472, 2
      %v3485 = vrot.slane %v3473, 2
      %v3486 = vsel %vm328, %v3484, %v3485
      %v3487 = vrot.slane %v3474, 2
      %v3488 = vsel %vm328, %v3485, %v3487
      %v3489 = vrot.slane %v3475, 2
      %v3490 = vrot.slane %v3476, 2
      %v3491 = vsel %vm328, %v3489, %v3490
      %v3492 = vrot.slane %v3477, 2
      %v3493 = vsel %vm328, %v3490, %v3492
      %3494 = vrot.lane.b32.xlu0 %v3486, 122
      %v3495 = vpop.permute.xlu0 %3494
      %3496 = vrot.lane.b32.xlu0 %v3488, 122
      %v3497 = vpop.permute.xlu0 %3496
      %3498 = vrot.lane.b32.xlu0 %v3491, 122
      %v3499 = vpop.permute.xlu0 %3498
      %3500 = vrot.lane.b32.xlu0 %v3493, 122
      %v3501 = vpop.permute.xlu0 %3500
      %v3506 = vadd.f32 %v3467, %v3495
      %v3507 = vadd.f32 %v3468, %v3497
      %v3508 = vadd.f32 %v3469, %v3499
      %v3509 = vadd.f32 %v3470, %v3501
      %s3510 = sld [smem:[#allocation9 + $0x1b]]
      %s3511 = sld [smem:[#allocation9 + $0x4c]]
      %v3512 = vstv %s3510
      %v3513 = vmul.f32 %v3512, %v216
      %v3514 = vmul.f32 %v3512, %v217
      %v3515 = vmul.f32 %v3512, %v218
      %v3516 = vmul.f32 %v3512, %v219
      %v3517 = vmul.f32 %v3512, %v220
      %v3518 = vmul.f32 %v3512, %v221
      %v3525 = vrot.slane %v3513, 3
      %v3526 = vrot.slane %v3514, 3
      %v3527 = vsel %vm393, %v3525, %v3526
      %v3528 = vrot.slane %v3515, 3
      %v3529 = vsel %vm393, %v3526, %v3528
      %v3530 = vrot.slane %v3516, 3
      %v3531 = vrot.slane %v3517, 3
      %v3532 = vsel %vm393, %v3530, %v3531
      %v3533 = vrot.slane %v3518, 3
      %v3534 = vsel %vm393, %v3531, %v3533
      %3535 = vrot.lane.b32.xlu0 %v3527, 122
      %v3536 = vpop.permute.xlu0 %3535
      %3537 = vrot.lane.b32.xlu0 %v3529, 122
      %v3538 = vpop.permute.xlu0 %3537
      %3539 = vrot.lane.b32.xlu0 %v3532, 122
      %v3540 = vpop.permute.xlu0 %3539
      %3541 = vrot.lane.b32.xlu0 %v3534, 122
      %v3542 = vpop.permute.xlu0 %3541
      %v3547 = vadd.f32 %v3506, %v3536
      %v3548 = vadd.f32 %v3507, %v3538
      %v3549 = vadd.f32 %v3508, %v3540
      %v3550 = vadd.f32 %v3509, %v3542
      %v3551 = vstv %s3511
      %v3552 = vmul.f32 %v3551, %v222
      %v3553 = vmul.f32 %v3551, %v223
      %v3554 = vmul.f32 %v3551, %v224
      %v3555 = vmul.f32 %v3551, %v225
      %v3556 = vmul.f32 %v3551, %v226
      %v3557 = vmul.f32 %v3551, %v227
      %v3564 = vrot.slane %v3552, 3
      %v3565 = vrot.slane %v3553, 3
      %v3566 = vsel %vm393, %v3564, %v3565
      %v3567 = vrot.slane %v3554, 3
      %v3568 = vsel %vm393, %v3565, %v3567
      %v3569 = vrot.slane %v3555, 3
      %v3570 = vrot.slane %v3556, 3
      %v3571 = vsel %vm393, %v3569, %v3570
      %v3572 = vrot.slane %v3557, 3
      %v3573 = vsel %vm393, %v3570, %v3572
      %3574 = vrot.lane.b32.xlu0 %v3566, 122
      %v3575 = vpop.permute.xlu0 %3574
      %3576 = vrot.lane.b32.xlu0 %v3568, 122
      %v3577 = vpop.permute.xlu0 %3576
      %3578 = vrot.lane.b32.xlu0 %v3571, 122
      %v3579 = vpop.permute.xlu0 %3578
      %3580 = vrot.lane.b32.xlu0 %v3573, 122
      %v3581 = vpop.permute.xlu0 %3580
      %v3586 = vadd.f32 %v3547, %v3575
      %v3587 = vadd.f32 %v3548, %v3577
      %v3588 = vadd.f32 %v3549, %v3579
      %v3589 = vadd.f32 %v3550, %v3581
      %s3590 = sld [smem:[#allocation9 + $0x22]]
      %s3591 = sld [smem:[#allocation9 + $0x53]]
      %v3592 = vstv %s3590
      %v3593 = vmul.f32 %v3592, %v216
      %v3594 = vmul.f32 %v3592, %v217
      %v3595 = vmul.f32 %v3592, %v218
      %v3596 = vmul.f32 %v3592, %v219
      %v3597 = vmul.f32 %v3592, %v220
      %v3598 = vmul.f32 %v3592, %v221
      %v3605 = vrot.slane %v3593, 4
      %v3606 = vrot.slane %v3594, 4
      %v3607 = vsel %vm458, %v3605, %v3606
      %v3608 = vrot.slane %v3595, 4
      %v3609 = vsel %vm458, %v3606, %v3608
      %v3610 = vrot.slane %v3596, 4
      %v3611 = vrot.slane %v3597, 4
      %v3612 = vsel %vm458, %v3610, %v3611
      %v3613 = vrot.slane %v3598, 4
      %v3614 = vsel %vm458, %v3611, %v3613
      %3615 = vrot.lane.b32.xlu0 %v3607, 122
      %v3616 = vpop.permute.xlu0 %3615
      %3617 = vrot.lane.b32.xlu0 %v3609, 122
      %v3618 = vpop.permute.xlu0 %3617
      %3619 = vrot.lane.b32.xlu0 %v3612, 122
      %v3620 = vpop.permute.xlu0 %3619
      %3621 = vrot.lane.b32.xlu0 %v3614, 122
      %v3622 = vpop.permute.xlu0 %3621
      %v3627 = vadd.f32 %v3586, %v3616
      %v3628 = vadd.f32 %v3587, %v3618
      %v3629 = vadd.f32 %v3588, %v3620
      %v3630 = vadd.f32 %v3589, %v3622
      %v3631 = vstv %s3591
      %v3632 = vmul.f32 %v3631, %v222
      %v3633 = vmul.f32 %v3631, %v223
      %v3634 = vmul.f32 %v3631, %v224
      %v3635 = vmul.f32 %v3631, %v225
      %v3636 = vmul.f32 %v3631, %v226
      %v3637 = vmul.f32 %v3631, %v227
      %v3644 = vrot.slane %v3632, 4
      %v3645 = vrot.slane %v3633, 4
      %v3646 = vsel %vm458, %v3644, %v3645
      %v3647 = vrot.slane %v3634, 4
      %v3648 = vsel %vm458, %v3645, %v3647
      %v3649 = vrot.slane %v3635, 4
      %v3650 = vrot.slane %v3636, 4
      %v3651 = vsel %vm458, %v3649, %v3650
      %v3652 = vrot.slane %v3637, 4
      %v3653 = vsel %vm458, %v3650, %v3652
      %3654 = vrot.lane.b32.xlu0 %v3646, 122
      %v3655 = vpop.permute.xlu0 %3654
      %3656 = vrot.lane.b32.xlu0 %v3648, 122
      %v3657 = vpop.permute.xlu0 %3656
      %3658 = vrot.lane.b32.xlu0 %v3651, 122
      %v3659 = vpop.permute.xlu0 %3658
      %3660 = vrot.lane.b32.xlu0 %v3653, 122
      %v3661 = vpop.permute.xlu0 %3660
      %v3666 = vadd.f32 %v3627, %v3655
      %v3667 = vadd.f32 %v3628, %v3657
      %v3668 = vadd.f32 %v3629, %v3659
      %v3669 = vadd.f32 %v3630, %v3661
      %s3670 = sld [smem:[#allocation9 + $0x29]]
      %s3671 = sld [smem:[#allocation9 + $0x5a]]
      %v3672 = vstv %s3670
      %v3673 = vmul.f32 %v3672, %v216
      %v3674 = vmul.f32 %v3672, %v217
      %v3675 = vmul.f32 %v3672, %v218
      %v3676 = vmul.f32 %v3672, %v219
      %v3677 = vmul.f32 %v3672, %v220
      %v3678 = vmul.f32 %v3672, %v221
      %v3685 = vrot.slane %v3673, 5
      %v3686 = vrot.slane %v3674, 5
      %v3687 = vsel %vm523, %v3685, %v3686
      %v3688 = vrot.slane %v3675, 5
      %v3689 = vsel %vm523, %v3686, %v3688
      %v3690 = vrot.slane %v3676, 5
      %v3691 = vrot.slane %v3677, 5
      %v3692 = vsel %vm523, %v3690, %v3691
      %v3693 = vrot.slane %v3678, 5
      %v3694 = vsel %vm523, %v3691, %v3693
      %3695 = vrot.lane.b32.xlu0 %v3687, 122
      %v3696 = vpop.permute.xlu0 %3695
      %3697 = vrot.lane.b32.xlu0 %v3689, 122
      %v3698 = vpop.permute.xlu0 %3697
      %3699 = vrot.lane.b32.xlu0 %v3692, 122
      %v3700 = vpop.permute.xlu0 %3699
      %3701 = vrot.lane.b32.xlu0 %v3694, 122
      %v3702 = vpop.permute.xlu0 %3701
      %v3707 = vadd.f32 %v3666, %v3696
      %v3708 = vadd.f32 %v3667, %v3698
      %v3709 = vadd.f32 %v3668, %v3700
      %v3710 = vadd.f32 %v3669, %v3702
      %v3711 = vstv %s3671
      %v3712 = vmul.f32 %v3711, %v222
      %v3713 = vmul.f32 %v3711, %v223
      %v3714 = vmul.f32 %v3711, %v224
      %v3715 = vmul.f32 %v3711, %v225
      %v3716 = vmul.f32 %v3711, %v226
      %v3717 = vmul.f32 %v3711, %v227
      %v3724 = vrot.slane %v3712, 5
      %v3725 = vrot.slane %v3713, 5
      %v3726 = vsel %vm523, %v3724, %v3725
      %v3727 = vrot.slane %v3714, 5
      %v3728 = vsel %vm523, %v3725, %v3727
      %v3729 = vrot.slane %v3715, 5
      %v3730 = vrot.slane %v3716, 5
      %v3731 = vsel %vm523, %v3729, %v3730
      %v3732 = vrot.slane %v3717, 5
      %v3733 = vsel %vm523, %v3730, %v3732
      %3734 = vrot.lane.b32.xlu0 %v3726, 122
      %v3735 = vpop.permute.xlu0 %3734
      %3736 = vrot.lane.b32.xlu0 %v3728, 122
      %v3737 = vpop.permute.xlu0 %3736
      %3738 = vrot.lane.b32.xlu0 %v3731, 122
      %v3739 = vpop.permute.xlu0 %3738
      %3740 = vrot.lane.b32.xlu0 %v3733, 122
      %v3741 = vpop.permute.xlu0 %3740
      %v3746 = vadd.f32 %v3707, %v3735
      %v3747 = vadd.f32 %v3708, %v3737
      %v3748 = vadd.f32 %v3709, %v3739
      %v3749 = vadd.f32 %v3710, %v3741
      %s3750 = sld [smem:[#allocation9 + $0x30]]
      %s3751 = sld [smem:[#allocation9 + $0x61]]
      %v3752 = vstv %s3750
      %v3753 = vmul.f32 %v3752, %v216
      %v3754 = vmul.f32 %v3752, %v217
      %v3755 = vmul.f32 %v3752, %v218
      %v3756 = vmul.f32 %v3752, %v219
      %v3757 = vmul.f32 %v3752, %v220
      %v3758 = vmul.f32 %v3752, %v221
      %v3765 = vrot.slane %v3753, 6
      %v3766 = vrot.slane %v3754, 6
      %v3767 = vsel %vm588, %v3765, %v3766
      %v3768 = vrot.slane %v3755, 6
      %v3769 = vsel %vm588, %v3766, %v3768
      %v3770 = vrot.slane %v3756, 6
      %v3771 = vrot.slane %v3757, 6
      %v3772 = vsel %vm588, %v3770, %v3771
      %v3773 = vrot.slane %v3758, 6
      %v3774 = vsel %vm588, %v3771, %v3773
      %3775 = vrot.lane.b32.xlu0 %v3767, 122
      %v3776 = vpop.permute.xlu0 %3775
      %3777 = vrot.lane.b32.xlu0 %v3769, 122
      %v3778 = vpop.permute.xlu0 %3777
      %3779 = vrot.lane.b32.xlu0 %v3772, 122
      %v3780 = vpop.permute.xlu0 %3779
      %3781 = vrot.lane.b32.xlu0 %v3774, 122
      %v3782 = vpop.permute.xlu0 %3781
      %v3787 = vadd.f32 %v3746, %v3776
      %v3788 = vadd.f32 %v3747, %v3778
      %v3789 = vadd.f32 %v3748, %v3780
      %v3790 = vadd.f32 %v3749, %v3782
      %v3791 = vstv %s3751
      %v3792 = vmul.f32 %v3791, %v222
      %v3793 = vmul.f32 %v3791, %v223
      %v3794 = vmul.f32 %v3791, %v224
      %v3795 = vmul.f32 %v3791, %v225
      %v3796 = vmul.f32 %v3791, %v226
      %v3797 = vmul.f32 %v3791, %v227
      %v3804 = vrot.slane %v3792, 6
      %v3805 = vrot.slane %v3793, 6
      %v3806 = vsel %vm588, %v3804, %v3805
      %v3807 = vrot.slane %v3794, 6
      %v3808 = vsel %vm588, %v3805, %v3807
      %v3809 = vrot.slane %v3795, 6
      %v3810 = vrot.slane %v3796, 6
      %v3811 = vsel %vm588, %v3809, %v3810
      %v3812 = vrot.slane %v3797, 6
      %v3813 = vsel %vm588, %v3810, %v3812
      %3814 = vrot.lane.b32.xlu0 %v3806, 122
      %v3815 = vpop.permute.xlu0 %3814
      %3816 = vrot.lane.b32.xlu0 %v3808, 122
      %v3817 = vpop.permute.xlu0 %3816
      %3818 = vrot.lane.b32.xlu0 %v3811, 122
      %v3819 = vpop.permute.xlu0 %3818
      %3820 = vrot.lane.b32.xlu0 %v3813, 122
      %v3821 = vpop.permute.xlu0 %3820
      %v3826 = vadd.f32 %v3787, %v3815
      %v3827 = vadd.f32 %v3788, %v3817
      %v3828 = vadd.f32 %v3789, %v3819
      %v3829 = vadd.f32 %v3790, %v3821
      %v3830 = vxor.u32 %v3826, 2147483648
      %v3831 = vxor.u32 %v3827, 2147483648
      %v3832 = vxor.u32 %v3828, 2147483648
      %v3833 = vxor.u32 %v3829, 2147483648
      %v3834 = vmul.f32 %v3830, 1.442695
      %v3835 = vpow.pop %v3834
      %v3836 = vmul.f32 %v3831, 1.442695
      %v3837 = vpow.pop %v3836
      %v3838 = vmul.f32 %v3832, 1.442695
      %v3839 = vpow.pop %v3838
      %v3840 = vmul.f32 %v3833, 1.442695
      %v3841 = vpow.pop %v3840
      %v3842 = vadd.f32 %v3835, 1.0
      %v3843 = vadd.f32 %v3837, 1.0
      %v3844 = vadd.f32 %v3839, 1.0
      %v3845 = vadd.f32 %v3841, 1.0
      %v3846 = vrcp.pop %v3842
      %v3847 = vmul.f32 1.0, %v3846
      %v3848 = vrcp.pop %v3843
      %v3849 = vmul.f32 1.0, %v3848
      %v3850 = vrcp.pop %v3844
      %v3851 = vmul.f32 1.0, %v3850
      %v3852 = vrcp.pop %v3845
      %v3853 = vmul.f32 1.0, %v3852
      %3854 = vst.msk [vmem:[#allocation10] sm:$0xff] %vm76, %v3847
      %3855 = vst.msk [vmem:[#allocation10 + $0x8] sm:$0xff] %vm76, %v3849
      %3856 = vst.msk [vmem:[#allocation10 + $0x10] sm:$0xff] %vm76, %v3851
      %3857 = vst.msk [vmem:[#allocation10 + $0x18] sm:$0xff] %vm76, %v3853
    $region25: #{tpu_custom_call.1} parent=1 // pred_fallthru
      _
    // Predicated region
    $region26: #{tpu_custom_call.1} parent=1 // pred_check
      _
    $region27: #{tpu_custom_call.1} parent=1 // pred_check_branch
      %3859 = sbr.rel (0) target = $region29
    $region28: #{tpu_custom_call.1} parent=1 // pred_region
      %s3861 = ssub.s32 512, 512
      %3862 = vsyncadd [#allocation7], %s3861
      %s3863 = sshll.u32 [#allocation10], 4
      %s3864 = int_to_ptr.vmem [resolvable:$true] %s3863
      %3869 = dma.vmem_to_hbm [thread:$0]  %s3864, 512, %s2, [#allocation7], 128, 128, 8
    $region29: #{tpu_custom_call.1} parent=1 // pred_fallthru
      _
    // Predicated region
    $region30: #{tpu_custom_call.1} parent=1 // pred_check
      _
    $region31: #{tpu_custom_call.1} parent=1 // pred_check_branch
      %3871 = sbr.rel (0) target = $region33
    $region32: #{tpu_custom_call.1} parent=1 // pred_region
      %3872 = dma.done [#allocation7], 512
    $region33: #{tpu_custom_call.1} parent=1 // pred_fallthru
      _
    %3873 = vsyncpa [#allocation6], 1
    %3874 = vsyncpa [#allocation7], 1
    %3875 = vsyncpa [#allocation8], 1

</llo_original>
